<compile_context>
chip_gen: v6e
topology: v6e:2x2x1
jax: 0.10.0
libtpu: 0.0.40
codegen_flags: <defaults>
</compile_context>

<pallas_src>
import functools

import numpy as np
import jax
import jax.numpy as jnp
from jax.experimental import pallas as pl
from jax.experimental.pallas import tpu as pltpu

EPS = 1e-5
F32 = jnp.float32
BF16 = jnp.bfloat16


# ---------------------------------------------------------------------------
# The fused kernel
# ---------------------------------------------------------------------------
def lenet_kernel(xw_ref, t1_ref, c1b_ref, g1_ref, be1_ref,
                 t2_ref, c2b_ref, g2_ref, be2_ref,
                 s1_ref, s1t_ref, s2_ref, s2t_ref,
                 w1fc_ref, b1fc_ref, g3_ref, be3_ref,
                 w2fc_ref, b2fc_ref, g4_ref, be4_ref,
                 w3fc_ref, b3fc_ref, out_ref, h1w_ref, *, batch):
    B = batch

    # ---------------- Stage 1: Conv2d(1,6,5) + BN(4d) + ReLU + MaxPool(2,2) ----
    # xw_ref rows are (ohh, b) "super-rows"; lanes are an 8-row x 28-col window of
    # the image (input rows 4*ohh .. 4*ohh+7).  Conv-output row ho = 4*ohh + q,
    # q = 2*p + ph is the pool quadrant.  One K=224 dot per quadrant (5 taps merged
    # into the band matrix); output columns are (pw, wo, c).
    xw = xw_ref[...].astype(BF16)                              # (6B, 224)
    c1b = c1b_ref[...]
    ys1 = [jnp.dot(xw, t1_ref[q], preferred_element_type=F32) + c1b
           for q in range(4)]                                  # 4 x (6B, 144)

    # Fused one-pass batch statistics: one elementwise accumulate, one axis-0
    # reduce and one channel-selector matmul each for sum and sum-of-squares.
    ysum = ys1[0] + ys1[1] + ys1[2] + ys1[3]
    ysq = ys1[0] * ys1[0] + ys1[1] * ys1[1] + ys1[2] * ys1[2] + ys1[3] * ys1[3]
    n1 = 4.0 * (6 * B) * 24.0                                  # = B * 24 * 24
    csum = jnp.dot(jnp.sum(ysum, axis=0, keepdims=True), s1_ref[...],
                   preferred_element_type=F32)                 # (1, 6)
    csq = jnp.dot(jnp.sum(ysq, axis=0, keepdims=True), s1_ref[...],
                  preferred_element_type=F32)
    mean1 = csum / n1
    var1 = csq / n1 - mean1 * mean1
    scale1 = g1_ref[...] * jax.lax.rsqrt(var1 + EPS)
    shift1 = be1_ref[...] - mean1 * scale1
    scale1w = jnp.dot(scale1, s1t_ref[...], preferred_element_type=F32)   # (1,144)
    shift1w = jnp.dot(shift1, s1t_ref[...], preferred_element_type=F32)

    # BN + ReLU per quadrant, max over the 2x2 pool window (ph then pw).
    h1 = []                       # h1[p]: (6B, 72), rows (ohh, b), cols (wo, c)
    for p in range(2):
        z0 = jnp.maximum(ys1[2 * p + 0] * scale1w + shift1w, 0.0)
        z1 = jnp.maximum(ys1[2 * p + 1] * scale1w + shift1w, 0.0)
        zm = jnp.maximum(z0, z1)                               # max over ph
        h1.append(jnp.maximum(zm[:, 0:72], zm[:, 72:144]))     # max over pw

    # ---------------- Stage 2: Conv2d(6,16,5) + BN(4d) + ReLU + MaxPool(2,2) ---
    # Build the 6-row window slab (4B, 432) in a VMEM scratch: lane block s holds
    # stage-1 row 2*oh2' + s for the (oh2', b) row.  Then ONE K=432 dot produces
    # both pool-row quadrants side by side (N=256, 128-aligned for the pool max).
    for s in range(6):
        h1w_ref[:, s * 72:(s + 1) * 72] = h1[s % 2][(s // 2) * B:(s // 2 + 4) * B, :]
    h1w = h1w_ref[...].astype(BF16)                            # (4B, 432)
    y2 = jnp.dot(h1w, t2_ref[...], preferred_element_type=F32) + c2b_ref[...]  # (4B,256)

    n2 = (4 * B) * 16.0                                        # = B * 8 * 8
    csum2 = jnp.dot(jnp.sum(y2, axis=0, keepdims=True), s2_ref[...],
                    preferred_element_type=F32)                # (1, 16)
    csq2 = jnp.dot(jnp.sum(y2 * y2, axis=0, keepdims=True), s2_ref[...],
                   preferred_element_type=F32)
    mean2 = csum2 / n2
    var2 = csq2 / n2 - mean2 * mean2
    scale2 = g2_ref[...] * jax.lax.rsqrt(var2 + EPS)
    shift2 = be2_ref[...] - mean2 * scale2
    scale2w = jnp.dot(scale2, s2t_ref[...], preferred_element_type=F32)   # (1,256)
    shift2w = jnp.dot(shift2, s2t_ref[...], preferred_element_type=F32)

    z2 = jnp.maximum(y2 * scale2w + shift2w, 0.0)
    zm2 = jnp.maximum(z2[:, 0:128], z2[:, 128:256])    # max over ph (aligned slice)
    h2 = jnp.maximum(zm2[:, 0:64], zm2[:, 64:128])     # max over pw -> (4B, 64)

    # ---------------- FC head: 256->120 +BN+ReLU, 120->84 +BN+ReLU, 84->10 -----
    def bn_relu(x, g, be):
        mu = jnp.mean(x, axis=0, keepdims=True)
        var = jnp.mean(x * x, axis=0, keepdims=True) - mu * mu
        return jnp.maximum(g * (x - mu) * jax.lax.rsqrt(var + EPS) + be, 0.0)

    a1 = None
    for h in range(4):            # fc1 with the NCHW flatten folded into w1fc
        d = jnp.dot(h2[h * B:(h + 1) * B, :].astype(BF16), w1fc_ref[h],
                    preferred_element_type=F32)
        a1 = d if a1 is None else a1 + d
    a1 = bn_relu(a1 + b1fc_ref[...], g3_ref[...], be3_ref[...])
    a2 = jnp.dot(a1.astype(BF16), w2fc_ref[...],
                 preferred_element_type=F32) + b2fc_ref[...]
    a2 = bn_relu(a2, g4_ref[...], be4_ref[...])
    out_ref[...] = (jnp.dot(a2.astype(BF16), w3fc_ref[...],
                            preferred_element_type=F32) + b3fc_ref[...])


# ---------------------------------------------------------------------------
# One-time weight preparation (merged-tap band matrices, selectors, transposes)
# ---------------------------------------------------------------------------
def _conv1_band(w1):
    # w1: (6,1,5,5) [cout,cin,kh,kw] -> T1: (4, 224, 144), quadrant q = 2*p + ph.
    # T1[q, s*28 + wi, pw*72 + wo*6 + c] = w1[c,0, s-q, wi-(2*wo+pw)] (masked).
    w1 = np.asarray(w1, np.float32)
    q = np.arange(4)
    s = np.arange(8)
    i = s[None, :] - q[:, None]                                   # (4, 8)
    vi = (i >= 0) & (i < 5)
    ic = np.clip(i, 0, 4)
    wi = np.arange(28)
    pw = np.arange(2)
    wo = np.arange(12)
    j = wi[:, None, None] - (2 * wo[None, None, :] + pw[None, :, None])   # (28,2,12)
    vj = (j >= 0) & (j < 5)
    jc = np.clip(j, 0, 4)
    w = w1[:, 0]                                                  # (6, 5, 5)
    t = w[:, ic]                                                  # (6,4,8,5)
    t = t[:, :, :, jc]                                            # (6,4,8,28,2,12)
    t = np.transpose(t, (1, 2, 3, 4, 5, 0))                       # (4,8,28,2,12,6)
    mask = vi[:, :, None, None, None, None] & vj[None, None, :, :, :, None]
    t = t * mask[..., None] if mask.ndim == 5 else t * mask
    return jnp.asarray(t.reshape(4, 224, 144))


def _conv2_band(w2):
    # w2: (16,6,5,5) -> T2: (432, 256).
    # T2[s*72 + ow*6 + ci, ph*128 + pw*64 + wo*16 + co]
    #     = w2[co,ci, s-ph, ow-(2*wo+pw)] (masked).
    w2 = np.asarray(w2, np.float32)
    s = np.arange(6)
    ph = np.arange(2)
    i = s[:, None] - ph[None, :]                                  # (6, 2)
    vi = (i >= 0) & (i < 5)
    ic = np.clip(i, 0, 4)
    ow = np.arange(12)
    pw = np.arange(2)
    wo = np.arange(4)
    j = ow[:, None, None] - (2 * wo[None, None, :] + pw[None, :, None])   # (12,2,4)
    vj = (j >= 0) & (j < 5)
    jc = np.clip(j, 0, 4)
    t = w2[:, :, ic]                                              # (16,6,6,2,5)
    t = t[..., jc]                                                # (16,6,6,2,12,2,4)
    t = np.transpose(t, (2, 4, 1, 3, 5, 6, 0))                    # (s,ow,ci,ph,pw,wo,co)
    mask = (vi[:, None, None, :, None, None, None]
            & vj[None, :, None, None, :, :, None])
    t = t * mask
    return jnp.asarray(t.reshape(432, 256))


def prepare_params(p):
    """Weight-only preparation, done once and kept out of the per-call path."""
    # TODO(synk): on v5e the 144-lane conv1 output spans 1.125 MXU column tiles;
    # a 128/16 split (or folding pw into rows) would shave one pass there.
    t1 = _conv1_band(p["conv1_w"]).astype(BF16)                    # (4, 224, 144)
    t2 = _conv2_band(p["conv2_w"]).astype(BF16)                    # (432, 256)
    s1 = jnp.asarray(np.tile(np.eye(6, dtype=np.float32), (24, 1)))    # (144, 6)
    s2 = jnp.asarray(np.tile(np.eye(16, dtype=np.float32), (16, 1)))   # (256, 16)
    # fc1: fold PyTorch's NCHW flatten (c, h, w) into the weight layout so the
    # kernel consumes the NHWC-ordered pooled features directly.
    w1fc = jnp.transpose(p["fc1_w"].reshape(120, 16, 4, 4), (2, 3, 1, 0))
    w1fc = w1fc.reshape(4, 64, 120).astype(BF16)
    # fc3: pad the 10 output columns to a lane-dense 128-wide slab.
    w3fc = jnp.zeros((84, 128), F32).at[:, :10].set(p["fc3_w"].T).astype(BF16)
    b3fc = jnp.zeros((1, 128), F32).at[0, :10].set(p["fc3_b"])
    return {
        "t1": t1,
        "c1b": jnp.tile(p["conv1_b"], 24).reshape(1, 144).astype(F32),
        "g1": p["bn1_g"].reshape(1, 6).astype(F32),
        "be1": p["bn1_b"].reshape(1, 6).astype(F32),
        "t2": t2,
        "c2b": jnp.tile(p["conv2_b"], 16).reshape(1, 256).astype(F32),
        "g2": p["bn2_g"].reshape(1, 16).astype(F32),
        "be2": p["bn2_b"].reshape(1, 16).astype(F32),
        "s1": s1, "s1t": s1.T, "s2": s2, "s2t": s2.T,
        "w1fc": w1fc,
        "b1fc": p["fc1_b"].reshape(1, 120).astype(F32),
        "g3": p["bn3_g"].reshape(1, 120).astype(F32),
        "be3": p["bn3_b"].reshape(1, 120).astype(F32),
        "w2fc": p["fc2_w"].T.astype(BF16),
        "b2fc": p["fc2_b"].reshape(1, 84).astype(F32),
        "g4": p["bn4_g"].reshape(1, 84).astype(F32),
        "be4": p["bn4_b"].reshape(1, 84).astype(F32),
        "w3fc": w3fc, "b3fc": b3fc,
    }


# ---------------------------------------------------------------------------
# Forward
# ---------------------------------------------------------------------------
def lenet_forward(x_nchw, pp):
    """x_nchw: (B, 1, 28, 28) float32 NCHW, as in the PyTorch module."""
    b = x_nchw.shape[0]
    x = x_nchw[:, 0].astype(F32)                           # (B, 28, 28)
    # Windowed input layout: for each conv "super-row" ohh (0..5), stack the 8
    # consecutive image rows [4*ohh .. 4*ohh+7] along lanes -> (6B, 8*28).  This
    # lets the kernel do the whole 5-tap conv1 as one K=224 matmul per quadrant
    # with no in-kernel strided access.  (Simple slice/stack/reshape; fuses into
    # a single copy on the XLA side.)
    xw = jnp.stack([x[:, 4 * o:4 * o + 8, :] for o in range(6)], axis=0)  # (6,B,8,28)
    xw = xw.reshape(6 * b, 8 * 28)                                         # (6B, 224)

    vmem = pl.BlockSpec(memory_space=pltpu.MemorySpace.VMEM)
    args = (xw, pp["t1"], pp["c1b"], pp["g1"], pp["be1"],
            pp["t2"], pp["c2b"], pp["g2"], pp["be2"],
            pp["s1"], pp["s1t"], pp["s2"], pp["s2t"],
            pp["w1fc"], pp["b1fc"], pp["g3"], pp["be3"],
            pp["w2fc"], pp["b2fc"], pp["g4"], pp["be4"],
            pp["w3fc"], pp["b3fc"])

    flops = (4 * 2 * (6 * b) * 224 * 144        # conv1 (4 quadrant dots)
             + 2 * (4 * b) * 432 * 256          # conv2 (merged dot)
             + 4 * 2 * b * 64 * 120             # fc1
             + 2 * b * 120 * 84 + 2 * b * 84 * 128)
    bytes_accessed = int(sum(int(a.size) * a.dtype.itemsize for a in args)
                         + b * 128 * 4)
    cost = pl.CostEstimate(flops=int(flops), transcendentals=256,
                           bytes_accessed=bytes_accessed)

    out = pl.pallas_call(
        functools.partial(lenet_kernel, batch=b),
        out_shape=jax.ShapeDtypeStruct((b, 128), F32),
        in_specs=[vmem] * len(args),
        out_specs=vmem,
        scratch_shapes=[pltpu.VMEM((4 * b, 432), F32)],   # stage-1 -> stage-2 slab
        compiler_params=pltpu.CompilerParams(
            vmem_limit_bytes=32 * 1024 * 1024),           # safe on v5e/v6e/v7x
        cost_estimate=cost,
    )(*args)
    return out[:, :10]


# ---------------------------------------------------------------------------
# Pure-JAX reference (training-mode BatchNorm, f32) for self-validation
# ---------------------------------------------------------------------------
def lenet_reference(x_nchw, p):
    def bn(x, g, be):
        axes = (0, 2, 3) if x.ndim == 4 else (0,)
        shape = (1, -1, 1, 1) if x.ndim == 4 else (1, -1)
        mu = jnp.mean(x, axis=axes, keepdims=True)
        var = jnp.mean((x - mu) ** 2, axis=axes, keepdims=True)
        return g.reshape(shape) * (x - mu) / jnp.sqrt(var + EPS) + be.reshape(shape)

    def conv(x, w, b):
        y = jax.lax.conv_general_dilated(x, w, (1, 1), "VALID",
                                         dimension_numbers=("NCHW", "OIHW", "NCHW"))
        return y + b.reshape(1, -1, 1, 1)

    def pool(x):
        return jax.lax.reduce_window(x, -jnp.inf, jax.lax.max,
                                     (1, 1, 2, 2), (1, 1, 2, 2), "VALID")

    h = pool(jax.nn.relu(bn(conv(x_nchw, p["conv1_w"], p["conv1_b"]),
                            p["bn1_g"], p["bn1_b"])))
    h = pool(jax.nn.relu(bn(conv(h, p["conv2_w"], p["conv2_b"]),
                            p["bn2_g"], p["bn2_b"])))
    h = h.reshape(x_nchw.shape[0], -1)
    h = jax.nn.relu(bn(h @ p["fc1_w"].T + p["fc1_b"], p["bn3_g"], p["bn3_b"]))
    h = jax.nn.relu(bn(h @ p["fc2_w"].T + p["fc2_b"], p["bn4_g"], p["bn4_b"]))
    return h @ p["fc3_w"].T + p["fc3_b"]


def init_params(key):
    ks = jax.random.split(key, 10)
    s = 0.1
    return {
        "conv1_w": jax.random.normal(ks[0], (6, 1, 5, 5), F32) * s,
        "conv1_b": jax.random.normal(ks[1], (6,), F32) * s,
        "bn1_g": jnp.ones((6,), F32), "bn1_b": jnp.zeros((6,), F32),
        "conv2_w": jax.random.normal(ks[2], (16, 6, 5, 5), F32) * s,
        "conv2_b": jax.random.normal(ks[3], (16,), F32) * s,
        "bn2_g": jnp.ones((16,), F32), "bn2_b": jnp.zeros((16,), F32),
        "fc1_w": jax.random.normal(ks[4], (120, 256), F32) * s,
        "fc1_b": jax.random.normal(ks[5], (120,), F32) * s,
        "bn3_g": jnp.ones((120,), F32), "bn3_b": jnp.zeros((120,), F32),
        "fc2_w": jax.random.normal(ks[6], (84, 120), F32) * s,
        "fc2_b": jax.random.normal(ks[7], (84,), F32) * s,
        "bn4_g": jnp.ones((84,), F32), "bn4_b": jnp.zeros((84,), F32),
        "fc3_w": jax.random.normal(ks[8], (10, 84), F32) * s,
        "fc3_b": jax.random.normal(ks[9], (10,), F32) * s,
    }


if __name__ == "__main__":
    key = jax.random.PRNGKey(0)
    pkey, xkey = jax.random.split(key)
    params = init_params(pkey)
    prepped = prepare_params(params)      # one-time weight prep (outside the hot path)
    # LeNet's fc head requires 28x28 single-channel input (16*4*4 = 256 features).
    x = jax.random.normal(xkey, (2, 1, 28, 28), F32)

    out = jax.jit(lenet_forward)(x, prepped)
    out = jax.block_until_ready(out)
    assert out.shape == (2, 10) and out.dtype == jnp.float32

    # Self-validation against a pure-JAX f32 reference (bf16 matmuls in the kernel
    # give ~1e-2 absolute drift on O(1) logits; tolerance sized accordingly).
    ref = lenet_reference(x, params)
    err = float(jnp.max(jnp.abs(out - ref)))
    scale = float(jnp.max(jnp.abs(ref)))
    assert err <= 0.05 * scale + 0.1, f"kernel/reference mismatch: err={err}, scale={scale}"

    print("KERNEL_OK")
</pallas_src>

<mosaic_0001>
module attributes {stable_mosaic.version = 11 : i64} {
  func.func @lenet_kernel(%arg0: memref<12x224xf32, #tpu.memory_space<vmem>>, %arg1: memref<4x224x144xbf16, #tpu.memory_space<vmem>>, %arg2: memref<1x144xf32, #tpu.memory_space<vmem>>, %arg3: memref<1x6xf32, #tpu.memory_space<vmem>>, %arg4: memref<1x6xf32, #tpu.memory_space<vmem>>, %arg5: memref<432x256xbf16, #tpu.memory_space<vmem>>, %arg6: memref<1x256xf32, #tpu.memory_space<vmem>>, %arg7: memref<1x16xf32, #tpu.memory_space<vmem>>, %arg8: memref<1x16xf32, #tpu.memory_space<vmem>>, %arg9: memref<144x6xf32, #tpu.memory_space<vmem>>, %arg10: memref<6x144xf32, #tpu.memory_space<vmem>>, %arg11: memref<256x16xf32, #tpu.memory_space<vmem>>, %arg12: memref<16x256xf32, #tpu.memory_space<vmem>>, %arg13: memref<4x64x120xbf16, #tpu.memory_space<vmem>>, %arg14: memref<1x120xf32, #tpu.memory_space<vmem>>, %arg15: memref<1x120xf32, #tpu.memory_space<vmem>>, %arg16: memref<1x120xf32, #tpu.memory_space<vmem>>, %arg17: memref<120x84xbf16, #tpu.memory_space<vmem>>, %arg18: memref<1x84xf32, #tpu.memory_space<vmem>>, %arg19: memref<1x84xf32, #tpu.memory_space<vmem>>, %arg20: memref<1x84xf32, #tpu.memory_space<vmem>>, %arg21: memref<84x128xbf16, #tpu.memory_space<vmem>>, %arg22: memref<1x128xf32, #tpu.memory_space<vmem>>, %arg23: memref<2x128xf32, #tpu.memory_space<vmem>>, %arg24: memref<8x432xf32, #tpu.memory_space<vmem>>) attributes {dimension_semantics = [], scalar_prefetch = 0 : i64, scratch_operands = 1 : i64, tpu.core_type = #tpu.core_type<tc>} {
    %c0 = arith.constant 0 : index
    %c0_0 = arith.constant 0 : index
    %0 = vector.load %arg0[%c0, %c0_0] : memref<12x224xf32, #tpu.memory_space<vmem>>, vector<12x224xf32>
    %1 = arith.truncf %0 : vector<12x224xf32> to vector<12x224xbf16>
    %c0_1 = arith.constant 0 : index
    %c0_2 = arith.constant 0 : index
    %2 = vector.load %arg2[%c0_1, %c0_2] : memref<1x144xf32, #tpu.memory_space<vmem>>, vector<1x144xf32>
    %c0_3 = arith.constant 0 : index
    %c0_4 = arith.constant 0 : index
    %c0_5 = arith.constant 0 : index
    %3 = vector.load %arg1[%c0_3, %c0_4, %c0_5] : memref<4x224x144xbf16, #tpu.memory_space<vmem>>, vector<1x224x144xbf16>
    %4 = vector.shape_cast %3 : vector<1x224x144xbf16> to vector<224x144xbf16>
    %cst = arith.constant dense<0.000000e+00> : vector<12x144xf32>
    %5 = tpu.matmul %1, %4, %cst {dimension_numbers = #tpu.dot_dimension_numbers<[1], [0], [0], [1], [0, 0, 1, 1], [], []>} : vector<12x224xbf16>, vector<224x144xbf16>, vector<12x144xf32> -> vector<12x144xf32>
    %6 = vector.broadcast %2 : vector<1x144xf32> to vector<12x144xf32>
    %7 = arith.addf %5, %6 : vector<12x144xf32>
    %c1 = arith.constant 1 : index
    %c0_6 = arith.constant 0 : index
    %c0_7 = arith.constant 0 : index
    %8 = vector.load %arg1[%c1, %c0_6, %c0_7] : memref<4x224x144xbf16, #tpu.memory_space<vmem>>, vector<1x224x144xbf16>
    %9 = vector.shape_cast %8 : vector<1x224x144xbf16> to vector<224x144xbf16>
    %cst_8 = arith.constant dense<0.000000e+00> : vector<12x144xf32>
    %10 = tpu.matmul %1, %9, %cst_8 {dimension_numbers = #tpu.dot_dimension_numbers<[1], [0], [0], [1], [0, 0, 1, 1], [], []>} : vector<12x224xbf16>, vector<224x144xbf16>, vector<12x144xf32> -> vector<12x144xf32>
    %11 = vector.broadcast %2 : vector<1x144xf32> to vector<12x144xf32>
    %12 = arith.addf %10, %11 : vector<12x144xf32>
    %c2 = arith.constant 2 : index
    %c0_9 = arith.constant 0 : index
    %c0_10 = arith.constant 0 : index
    %13 = vector.load %arg1[%c2, %c0_9, %c0_10] : memref<4x224x144xbf16, #tpu.memory_space<vmem>>, vector<1x224x144xbf16>
    %14 = vector.shape_cast %13 : vector<1x224x144xbf16> to vector<224x144xbf16>
    %cst_11 = arith.constant dense<0.000000e+00> : vector<12x144xf32>
    %15 = tpu.matmul %1, %14, %cst_11 {dimension_numbers = #tpu.dot_dimension_numbers<[1], [0], [0], [1], [0, 0, 1, 1], [], []>} : vector<12x224xbf16>, vector<224x144xbf16>, vector<12x144xf32> -> vector<12x144xf32>
    %16 = vector.broadcast %2 : vector<1x144xf32> to vector<12x144xf32>
    %17 = arith.addf %15, %16 : vector<12x144xf32>
    %c3 = arith.constant 3 : index
    %c0_12 = arith.constant 0 : index
    %c0_13 = arith.constant 0 : index
    %18 = vector.load %arg1[%c3, %c0_12, %c0_13] : memref<4x224x144xbf16, #tpu.memory_space<vmem>>, vector<1x224x144xbf16>
    %19 = vector.shape_cast %18 : vector<1x224x144xbf16> to vector<224x144xbf16>
    %cst_14 = arith.constant dense<0.000000e+00> : vector<12x144xf32>
    %20 = tpu.matmul %1, %19, %cst_14 {dimension_numbers = #tpu.dot_dimension_numbers<[1], [0], [0], [1], [0, 0, 1, 1], [], []>} : vector<12x224xbf16>, vector<224x144xbf16>, vector<12x144xf32> -> vector<12x144xf32>
    %21 = vector.broadcast %2 : vector<1x144xf32> to vector<12x144xf32>
    %22 = arith.addf %20, %21 : vector<12x144xf32>
    %23 = arith.addf %7, %12 : vector<12x144xf32>
    %24 = arith.addf %23, %17 : vector<12x144xf32>
    %25 = arith.addf %24, %22 : vector<12x144xf32>
    %26 = arith.mulf %7, %7 : vector<12x144xf32>
    %27 = arith.mulf %12, %12 : vector<12x144xf32>
    %28 = arith.addf %26, %27 : vector<12x144xf32>
    %29 = arith.mulf %17, %17 : vector<12x144xf32>
    %30 = arith.addf %28, %29 : vector<12x144xf32>
    %31 = arith.mulf %22, %22 : vector<12x144xf32>
    %32 = arith.addf %30, %31 : vector<12x144xf32>
    %cst_15 = arith.constant dense<0.000000e+00> : vector<144xf32>
    %33 = vector.multi_reduction <add>, %25, %cst_15 [0] : vector<12x144xf32> to vector<144xf32>
    %34 = vector.shape_cast %33 : vector<144xf32> to vector<1x144xf32>
    %c0_16 = arith.constant 0 : index
    %c0_17 = arith.constant 0 : index
    %35 = vector.load %arg9[%c0_16, %c0_17] : memref<144x6xf32, #tpu.memory_space<vmem>>, vector<144x6xf32>
    %cst_18 = arith.constant dense<0.000000e+00> : vector<1x6xf32>
    %36 = tpu.matmul %34, %35, %cst_18 {dimension_numbers = #tpu.dot_dimension_numbers<[1], [0], [0], [1], [0, 0, 1, 1], [], []>} : vector<1x144xf32>, vector<144x6xf32>, vector<1x6xf32> -> vector<1x6xf32>
    %cst_19 = arith.constant dense<0.000000e+00> : vector<144xf32>
    %37 = vector.multi_reduction <add>, %32, %cst_19 [0] : vector<12x144xf32> to vector<144xf32>
    %38 = vector.shape_cast %37 : vector<144xf32> to vector<1x144xf32>
    %c0_20 = arith.constant 0 : index
    %c0_21 = arith.constant 0 : index
    %39 = vector.load %arg9[%c0_20, %c0_21] : memref<144x6xf32, #tpu.memory_space<vmem>>, vector<144x6xf32>
    %cst_22 = arith.constant dense<0.000000e+00> : vector<1x6xf32>
    %40 = tpu.matmul %38, %39, %cst_22 {dimension_numbers = #tpu.dot_dimension_numbers<[1], [0], [0], [1], [0, 0, 1, 1], [], []>} : vector<1x144xf32>, vector<144x6xf32>, vector<1x6xf32> -> vector<1x6xf32>
    %cst_23 = arith.constant 1.152000e+03 : f32
    %41 = vector.broadcast %cst_23 : f32 to vector<1x6xf32>
    %42 = arith.divf %36, %41 : vector<1x6xf32>
    %cst_24 = arith.constant 1.152000e+03 : f32
    %43 = vector.broadcast %cst_24 : f32 to vector<1x6xf32>
    %44 = arith.divf %40, %43 : vector<1x6xf32>
    %45 = arith.mulf %42, %42 : vector<1x6xf32>
    %46 = arith.subf %44, %45 : vector<1x6xf32>
    %c0_25 = arith.constant 0 : index
    %c0_26 = arith.constant 0 : index
    %47 = vector.load %arg3[%c0_25, %c0_26] : memref<1x6xf32, #tpu.memory_space<vmem>>, vector<1x6xf32>
    %cst_27 = arith.constant 9.99999974E-6 : f32
    %48 = vector.broadcast %cst_27 : f32 to vector<1x6xf32>
    %49 = arith.addf %46, %48 : vector<1x6xf32>
    %50 = math.rsqrt %49 : vector<1x6xf32>
    %51 = arith.mulf %47, %50 : vector<1x6xf32>
    %c0_28 = arith.constant 0 : index
    %c0_29 = arith.constant 0 : index
    %52 = vector.load %arg4[%c0_28, %c0_29] : memref<1x6xf32, #tpu.memory_space<vmem>>, vector<1x6xf32>
    %53 = arith.mulf %42, %51 : vector<1x6xf32>
    %54 = arith.subf %52, %53 : vector<1x6xf32>
    %c0_30 = arith.constant 0 : index
    %c0_31 = arith.constant 0 : index
    %55 = vector.load %arg10[%c0_30, %c0_31] : memref<6x144xf32, #tpu.memory_space<vmem>>, vector<6x144xf32>
    %cst_32 = arith.constant dense<0.000000e+00> : vector<1x144xf32>
    %56 = tpu.matmul %51, %55, %cst_32 {dimension_numbers = #tpu.dot_dimension_numbers<[1], [0], [0], [1], [0, 0, 1, 1], [], []>} : vector<1x6xf32>, vector<6x144xf32>, vector<1x144xf32> -> vector<1x144xf32>
    %c0_33 = arith.constant 0 : index
    %c0_34 = arith.constant 0 : index
    %57 = vector.load %arg10[%c0_33, %c0_34] : memref<6x144xf32, #tpu.memory_space<vmem>>, vector<6x144xf32>
    %cst_35 = arith.constant dense<0.000000e+00> : vector<1x144xf32>
    %58 = tpu.matmul %54, %57, %cst_35 {dimension_numbers = #tpu.dot_dimension_numbers<[1], [0], [0], [1], [0, 0, 1, 1], [], []>} : vector<1x6xf32>, vector<6x144xf32>, vector<1x144xf32> -> vector<1x144xf32>
    %59 = vector.broadcast %56 : vector<1x144xf32> to vector<12x144xf32>
    %60 = arith.mulf %7, %59 : vector<12x144xf32>
    %61 = vector.broadcast %58 : vector<1x144xf32> to vector<12x144xf32>
    %62 = arith.addf %60, %61 : vector<12x144xf32>
    %cst_36 = arith.constant 0.000000e+00 : f32
    %63 = vector.broadcast %cst_36 : f32 to vector<12x144xf32>
    %64 = arith.maximumf %62, %63 : vector<12x144xf32>
    %65 = vector.broadcast %56 : vector<1x144xf32> to vector<12x144xf32>
    %66 = arith.mulf %12, %65 : vector<12x144xf32>
    %67 = vector.broadcast %58 : vector<1x144xf32> to vector<12x144xf32>
    %68 = arith.addf %66, %67 : vector<12x144xf32>
    %cst_37 = arith.constant 0.000000e+00 : f32
    %69 = vector.broadcast %cst_37 : f32 to vector<12x144xf32>
    %70 = arith.maximumf %68, %69 : vector<12x144xf32>
    %71 = arith.maximumf %64, %70 : vector<12x144xf32>
    %72 = vector.extract_strided_slice %71 {offsets = [0, 0], sizes = [12, 72], strides = [1, 1]} : vector<12x144xf32> to vector<12x72xf32>
    %73 = vector.extract_strided_slice %71 {offsets = [0, 72], sizes = [12, 72], strides = [1, 1]} : vector<12x144xf32> to vector<12x72xf32>
    %74 = arith.maximumf %72, %73 : vector<12x72xf32>
    %75 = vector.broadcast %56 : vector<1x144xf32> to vector<12x144xf32>
    %76 = arith.mulf %17, %75 : vector<12x144xf32>
    %77 = vector.broadcast %58 : vector<1x144xf32> to vector<12x144xf32>
    %78 = arith.addf %76, %77 : vector<12x144xf32>
    %cst_38 = arith.constant 0.000000e+00 : f32
    %79 = vector.broadcast %cst_38 : f32 to vector<12x144xf32>
    %80 = arith.maximumf %78, %79 : vector<12x144xf32>
    %81 = vector.broadcast %56 : vector<1x144xf32> to vector<12x144xf32>
    %82 = arith.mulf %22, %81 : vector<12x144xf32>
    %83 = vector.broadcast %58 : vector<1x144xf32> to vector<12x144xf32>
    %84 = arith.addf %82, %83 : vector<12x144xf32>
    %cst_39 = arith.constant 0.000000e+00 : f32
    %85 = vector.broadcast %cst_39 : f32 to vector<12x144xf32>
    %86 = arith.maximumf %84, %85 : vector<12x144xf32>
    %87 = arith.maximumf %80, %86 : vector<12x144xf32>
    %88 = vector.extract_strided_slice %87 {offsets = [0, 0], sizes = [12, 72], strides = [1, 1]} : vector<12x144xf32> to vector<12x72xf32>
    %89 = vector.extract_strided_slice %87 {offsets = [0, 72], sizes = [12, 72], strides = [1, 1]} : vector<12x144xf32> to vector<12x72xf32>
    %90 = arith.maximumf %88, %89 : vector<12x72xf32>
    %91 = vector.extract_strided_slice %74 {offsets = [0, 0], sizes = [8, 72], strides = [1, 1]} : vector<12x72xf32> to vector<8x72xf32>
    %c0_40 = arith.constant 0 : index
    %c0_41 = arith.constant 0 : index
    %92 = vector.load %arg24[%c0_40, %c0_41] : memref<8x432xf32, #tpu.memory_space<vmem>>, vector<8x72xf32>
    tpu.vector_store %arg24[%c0_40, %c0_41], %91 {strides = array<i32>} : memref<8x432xf32, #tpu.memory_space<vmem>>, vector<8x72xf32>,
    %93 = vector.extract_strided_slice %90 {offsets = [0, 0], sizes = [8, 72], strides = [1, 1]} : vector<12x72xf32> to vector<8x72xf32>
    %c0_42 = arith.constant 0 : index
    %c72 = arith.constant 72 : index
    %94 = vector.load %arg24[%c0_42, %c72] : memref<8x432xf32, #tpu.memory_space<vmem>>, vector<8x72xf32>
    tpu.vector_store %arg24[%c0_42, %c72], %93 {strides = array<i32>} : memref<8x432xf32, #tpu.memory_space<vmem>>, vector<8x72xf32>,
    %95 = vector.extract_strided_slice %74 {offsets = [2, 0], sizes = [8, 72], strides = [1, 1]} : vector<12x72xf32> to vector<8x72xf32>
    %c0_43 = arith.constant 0 : index
    %c144 = arith.constant 144 : index
    %96 = vector.load %arg24[%c0_43, %c144] : memref<8x432xf32, #tpu.memory_space<vmem>>, vector<8x72xf32>
    tpu.vector_store %arg24[%c0_43, %c144], %95 {strides = array<i32>} : memref<8x432xf32, #tpu.memory_space<vmem>>, vector<8x72xf32>,
    %97 = vector.extract_strided_slice %90 {offsets = [2, 0], sizes = [8, 72], strides = [1, 1]} : vector<12x72xf32> to vector<8x72xf32>
    %c0_44 = arith.constant 0 : index
    %c216 = arith.constant 216 : index
    %98 = vector.load %arg24[%c0_44, %c216] : memref<8x432xf32, #tpu.memory_space<vmem>>, vector<8x72xf32>
    tpu.vector_store %arg24[%c0_44, %c216], %97 {strides = array<i32>} : memref<8x432xf32, #tpu.memory_space<vmem>>, vector<8x72xf32>,
    %99 = vector.extract_strided_slice %74 {offsets = [4, 0], sizes = [8, 72], strides = [1, 1]} : vector<12x72xf32> to vector<8x72xf32>
    %c0_45 = arith.constant 0 : index
    %c288 = arith.constant 288 : index
    %100 = vector.load %arg24[%c0_45, %c288] : memref<8x432xf32, #tpu.memory_space<vmem>>, vector<8x72xf32>
    tpu.vector_store %arg24[%c0_45, %c288], %99 {strides = array<i32>} : memref<8x432xf32, #tpu.memory_space<vmem>>, vector<8x72xf32>,
    %101 = vector.extract_strided_slice %90 {offsets = [4, 0], sizes = [8, 72], strides = [1, 1]} : vector<12x72xf32> to vector<8x72xf32>
    %c0_46 = arith.constant 0 : index
    %c360 = arith.constant 360 : index
    %102 = vector.load %arg24[%c0_46, %c360] : memref<8x432xf32, #tpu.memory_space<vmem>>, vector<8x72xf32>
    tpu.vector_store %arg24[%c0_46, %c360], %101 {strides = array<i32>} : memref<8x432xf32, #tpu.memory_space<vmem>>, vector<8x72xf32>,
    %c0_47 = arith.constant 0 : index
    %c0_48 = arith.constant 0 : index
    %103 = vector.load %arg24[%c0_47, %c0_48] : memref<8x432xf32, #tpu.memory_space<vmem>>, vector<8x432xf32>
    %104 = arith.truncf %103 : vector<8x432xf32> to vector<8x432xbf16>
    %c0_49 = arith.constant 0 : index
    %c0_50 = arith.constant 0 : index
    %105 = vector.load %arg5[%c0_49, %c0_50] : memref<432x256xbf16, #tpu.memory_space<vmem>>, vector<432x256xbf16>
    %cst_51 = arith.constant dense<0.000000e+00> : vector<8x256xf32>
    %106 = tpu.matmul %104, %105, %cst_51 {dimension_numbers = #tpu.dot_dimension_numbers<[1], [0], [0], [1], [0, 0, 1, 1], [], []>} : vector<8x432xbf16>, vector<432x256xbf16>, vector<8x256xf32> -> vector<8x256xf32>
    %c0_52 = arith.constant 0 : index
    %c0_53 = arith.constant 0 : index
    %107 = vector.load %arg6[%c0_52, %c0_53] : memref<1x256xf32, #tpu.memory_space<vmem>>, vector<1x256xf32>
    %108 = vector.broadcast %107 : vector<1x256xf32> to vector<8x256xf32>
    %109 = arith.addf %106, %108 : vector<8x256xf32>
    %cst_54 = arith.constant dense<0.000000e+00> : vector<256xf32>
    %110 = vector.multi_reduction <add>, %109, %cst_54 [0] : vector<8x256xf32> to vector<256xf32>
    %111 = vector.shape_cast %110 : vector<256xf32> to vector<1x256xf32>
    %c0_55 = arith.constant 0 : index
    %c0_56 = arith.constant 0 : index
    %112 = vector.load %arg11[%c0_55, %c0_56] : memref<256x16xf32, #tpu.memory_space<vmem>>, vector<256x16xf32>
    %cst_57 = arith.constant dense<0.000000e+00> : vector<1x16xf32>
    %113 = tpu.matmul %111, %112, %cst_57 {dimension_numbers = #tpu.dot_dimension_numbers<[1], [0], [0], [1], [0, 0, 1, 1], [], []>} : vector<1x256xf32>, vector<256x16xf32>, vector<1x16xf32> -> vector<1x16xf32>
    %114 = arith.mulf %109, %109 : vector<8x256xf32>
    %cst_58 = arith.constant dense<0.000000e+00> : vector<256xf32>
    %115 = vector.multi_reduction <add>, %114, %cst_58 [0] : vector<8x256xf32> to vector<256xf32>
    %116 = vector.shape_cast %115 : vector<256xf32> to vector<1x256xf32>
    %c0_59 = arith.constant 0 : index
    %c0_60 = arith.constant 0 : index
    %117 = vector.load %arg11[%c0_59, %c0_60] : memref<256x16xf32, #tpu.memory_space<vmem>>, vector<256x16xf32>
    %cst_61 = arith.constant dense<0.000000e+00> : vector<1x16xf32>
    %118 = tpu.matmul %116, %117, %cst_61 {dimension_numbers = #tpu.dot_dimension_numbers<[1], [0], [0], [1], [0, 0, 1, 1], [], []>} : vector<1x256xf32>, vector<256x16xf32>, vector<1x16xf32> -> vector<1x16xf32>
    %cst_62 = arith.constant 1.280000e+02 : f32
    %119 = vector.broadcast %cst_62 : f32 to vector<1x16xf32>
    %120 = arith.divf %113, %119 : vector<1x16xf32>
    %cst_63 = arith.constant 1.280000e+02 : f32
    %121 = vector.broadcast %cst_63 : f32 to vector<1x16xf32>
    %122 = arith.divf %118, %121 : vector<1x16xf32>
    %123 = arith.mulf %120, %120 : vector<1x16xf32>
    %124 = arith.subf %122, %123 : vector<1x16xf32>
    %c0_64 = arith.constant 0 : index
    %c0_65 = arith.constant 0 : index
    %125 = vector.load %arg7[%c0_64, %c0_65] : memref<1x16xf32, #tpu.memory_space<vmem>>, vector<1x16xf32>
    %cst_66 = arith.constant 9.99999974E-6 : f32
    %126 = vector.broadcast %cst_66 : f32 to vector<1x16xf32>
    %127 = arith.addf %124, %126 : vector<1x16xf32>
    %128 = math.rsqrt %127 : vector<1x16xf32>
    %129 = arith.mulf %125, %128 : vector<1x16xf32>
    %c0_67 = arith.constant 0 : index
    %c0_68 = arith.constant 0 : index
    %130 = vector.load %arg8[%c0_67, %c0_68] : memref<1x16xf32, #tpu.memory_space<vmem>>, vector<1x16xf32>
    %131 = arith.mulf %120, %129 : vector<1x16xf32>
    %132 = arith.subf %130, %131 : vector<1x16xf32>
    %c0_69 = arith.constant 0 : index
    %c0_70 = arith.constant 0 : index
    %133 = vector.load %arg12[%c0_69, %c0_70] : memref<16x256xf32, #tpu.memory_space<vmem>>, vector<16x256xf32>
    %cst_71 = arith.constant dense<0.000000e+00> : vector<1x256xf32>
    %134 = tpu.matmul %129, %133, %cst_71 {dimension_numbers = #tpu.dot_dimension_numbers<[1], [0], [0], [1], [0, 0, 1, 1], [], []>} : vector<1x16xf32>, vector<16x256xf32>, vector<1x256xf32> -> vector<1x256xf32>
    %c0_72 = arith.constant 0 : index
    %c0_73 = arith.constant 0 : index
    %135 = vector.load %arg12[%c0_72, %c0_73] : memref<16x256xf32, #tpu.memory_space<vmem>>, vector<16x256xf32>
    %cst_74 = arith.constant dense<0.000000e+00> : vector<1x256xf32>
    %136 = tpu.matmul %132, %135, %cst_74 {dimension_numbers = #tpu.dot_dimension_numbers<[1], [0], [0], [1], [0, 0, 1, 1], [], []>} : vector<1x16xf32>, vector<16x256xf32>, vector<1x256xf32> -> vector<1x256xf32>
    %137 = vector.broadcast %134 : vector<1x256xf32> to vector<8x256xf32>
    %138 = arith.mulf %109, %137 : vector<8x256xf32>
    %139 = vector.broadcast %136 : vector<1x256xf32> to vector<8x256xf32>
    %140 = arith.addf %138, %139 : vector<8x256xf32>
    %cst_75 = arith.constant 0.000000e+00 : f32
    %141 = vector.broadcast %cst_75 : f32 to vector<8x256xf32>
    %142 = arith.maximumf %140, %141 : vector<8x256xf32>
    %143 = vector.extract_strided_slice %142 {offsets = [0, 0], sizes = [8, 128], strides = [1, 1]} : vector<8x256xf32> to vector<8x128xf32>
    %144 = vector.extract_strided_slice %142 {offsets = [0, 128], sizes = [8, 128], strides = [1, 1]} : vector<8x256xf32> to vector<8x128xf32>
    %145 = arith.maximumf %143, %144 : vector<8x128xf32>
    %146 = vector.extract_strided_slice %145 {offsets = [0, 0], sizes = [8, 64], strides = [1, 1]} : vector<8x128xf32> to vector<8x64xf32>
    %147 = vector.extract_strided_slice %145 {offsets = [0, 64], sizes = [8, 64], strides = [1, 1]} : vector<8x128xf32> to vector<8x64xf32>
    %148 = arith.maximumf %146, %147 : vector<8x64xf32>
    %149 = vector.extract_strided_slice %148 {offsets = [0, 0], sizes = [2, 64], strides = [1, 1]} : vector<8x64xf32> to vector<2x64xf32>
    %150 = arith.truncf %149 : vector<2x64xf32> to vector<2x64xbf16>
    %c0_76 = arith.constant 0 : index
    %c0_77 = arith.constant 0 : index
    %c0_78 = arith.constant 0 : index
    %151 = vector.load %arg13[%c0_76, %c0_77, %c0_78] : memref<4x64x120xbf16, #tpu.memory_space<vmem>>, vector<1x64x120xbf16>
    %152 = vector.shape_cast %151 : vector<1x64x120xbf16> to vector<64x120xbf16>
    %cst_79 = arith.constant dense<0.000000e+00> : vector<2x120xf32>
    %153 = tpu.matmul %150, %152, %cst_79 {dimension_numbers = #tpu.dot_dimension_numbers<[1], [0], [0], [1], [0, 0, 1, 1], [], []>} : vector<2x64xbf16>, vector<64x120xbf16>, vector<2x120xf32> -> vector<2x120xf32>
    %154 = vector.extract_strided_slice %148 {offsets = [2, 0], sizes = [2, 64], strides = [1, 1]} : vector<8x64xf32> to vector<2x64xf32>
    %155 = arith.truncf %154 : vector<2x64xf32> to vector<2x64xbf16>
    %c1_80 = arith.constant 1 : index
    %c0_81 = arith.constant 0 : index
    %c0_82 = arith.constant 0 : index
    %156 = vector.load %arg13[%c1_80, %c0_81, %c0_82] : memref<4x64x120xbf16, #tpu.memory_space<vmem>>, vector<1x64x120xbf16>
    %157 = vector.shape_cast %156 : vector<1x64x120xbf16> to vector<64x120xbf16>
    %cst_83 = arith.constant dense<0.000000e+00> : vector<2x120xf32>
    %158 = tpu.matmul %155, %157, %cst_83 {dimension_numbers = #tpu.dot_dimension_numbers<[1], [0], [0], [1], [0, 0, 1, 1], [], []>} : vector<2x64xbf16>, vector<64x120xbf16>, vector<2x120xf32> -> vector<2x120xf32>
    %159 = arith.addf %153, %158 : vector<2x120xf32>
    %160 = vector.extract_strided_slice %148 {offsets = [4, 0], sizes = [2, 64], strides = [1, 1]} : vector<8x64xf32> to vector<2x64xf32>
    %161 = arith.truncf %160 : vector<2x64xf32> to vector<2x64xbf16>
    %c2_84 = arith.constant 2 : index
    %c0_85 = arith.constant 0 : index
    %c0_86 = arith.constant 0 : index
    %162 = vector.load %arg13[%c2_84, %c0_85, %c0_86] : memref<4x64x120xbf16, #tpu.memory_space<vmem>>, vector<1x64x120xbf16>
    %163 = vector.shape_cast %162 : vector<1x64x120xbf16> to vector<64x120xbf16>
    %cst_87 = arith.constant dense<0.000000e+00> : vector<2x120xf32>
    %164 = tpu.matmul %161, %163, %cst_87 {dimension_numbers = #tpu.dot_dimension_numbers<[1], [0], [0], [1], [0, 0, 1, 1], [], []>} : vector<2x64xbf16>, vector<64x120xbf16>, vector<2x120xf32> -> vector<2x120xf32>
    %165 = arith.addf %159, %164 : vector<2x120xf32>
    %166 = vector.extract_strided_slice %148 {offsets = [6, 0], sizes = [2, 64], strides = [1, 1]} : vector<8x64xf32> to vector<2x64xf32>
    %167 = arith.truncf %166 : vector<2x64xf32> to vector<2x64xbf16>
    %c3_88 = arith.constant 3 : index
    %c0_89 = arith.constant 0 : index
    %c0_90 = arith.constant 0 : index
    %168 = vector.load %arg13[%c3_88, %c0_89, %c0_90] : memref<4x64x120xbf16, #tpu.memory_space<vmem>>, vector<1x64x120xbf16>
    %169 = vector.shape_cast %168 : vector<1x64x120xbf16> to vector<64x120xbf16>
    %cst_91 = arith.constant dense<0.000000e+00> : vector<2x120xf32>
    %170 = tpu.matmul %167, %169, %cst_91 {dimension_numbers = #tpu.dot_dimension_numbers<[1], [0], [0], [1], [0, 0, 1, 1], [], []>} : vector<2x64xbf16>, vector<64x120xbf16>, vector<2x120xf32> -> vector<2x120xf32>
    %171 = arith.addf %165, %170 : vector<2x120xf32>
    %c0_92 = arith.constant 0 : index
    %c0_93 = arith.constant 0 : index
    %172 = vector.load %arg14[%c0_92, %c0_93] : memref<1x120xf32, #tpu.memory_space<vmem>>, vector<1x120xf32>
    %173 = vector.broadcast %172 : vector<1x120xf32> to vector<2x120xf32>
    %174 = arith.addf %171, %173 : vector<2x120xf32>
    %c0_94 = arith.constant 0 : index
    %c0_95 = arith.constant 0 : index
    %175 = vector.load %arg15[%c0_94, %c0_95] : memref<1x120xf32, #tpu.memory_space<vmem>>, vector<1x120xf32>
    %c0_96 = arith.constant 0 : index
    %c0_97 = arith.constant 0 : index
    %176 = vector.load %arg16[%c0_96, %c0_97] : memref<1x120xf32, #tpu.memory_space<vmem>>, vector<1x120xf32>
    %cst_98 = arith.constant dense<0.000000e+00> : vector<120xf32>
    %177 = vector.multi_reduction <add>, %174, %cst_98 [0] : vector<2x120xf32> to vector<120xf32>
    %178 = vector.shape_cast %177 : vector<120xf32> to vector<1x120xf32>
    %cst_99 = arith.constant 2.000000e+00 : f32
    %179 = vector.broadcast %cst_99 : f32 to vector<1x120xf32>
    %180 = arith.divf %178, %179 : vector<1x120xf32>
    %181 = arith.mulf %174, %174 : vector<2x120xf32>
    %cst_100 = arith.constant dense<0.000000e+00> : vector<120xf32>
    %182 = vector.multi_reduction <add>, %181, %cst_100 [0] : vector<2x120xf32> to vector<120xf32>
    %183 = vector.shape_cast %182 : vector<120xf32> to vector<1x120xf32>
    %cst_101 = arith.constant 2.000000e+00 : f32
    %184 = vector.broadcast %cst_101 : f32 to vector<1x120xf32>
    %185 = arith.divf %183, %184 : vector<1x120xf32>
    %186 = arith.mulf %180, %180 : vector<1x120xf32>
    %187 = arith.subf %185, %186 : vector<1x120xf32>
    %188 = vector.broadcast %180 : vector<1x120xf32> to vector<2x120xf32>
    %189 = arith.subf %174, %188 : vector<2x120xf32>
    %190 = vector.broadcast %175 : vector<1x120xf32> to vector<2x120xf32>
    %191 = arith.mulf %190, %189 : vector<2x120xf32>
    %cst_102 = arith.constant 9.99999974E-6 : f32
    %192 = vector.broadcast %cst_102 : f32 to vector<1x120xf32>
    %193 = arith.addf %187, %192 : vector<1x120xf32>
    %194 = math.rsqrt %193 : vector<1x120xf32>
    %195 = vector.broadcast %194 : vector<1x120xf32> to vector<2x120xf32>
    %196 = arith.mulf %191, %195 : vector<2x120xf32>
    %197 = vector.broadcast %176 : vector<1x120xf32> to vector<2x120xf32>
    %198 = arith.addf %196, %197 : vector<2x120xf32>
    %cst_103 = arith.constant 0.000000e+00 : f32
    %199 = vector.broadcast %cst_103 : f32 to vector<2x120xf32>
    %200 = arith.maximumf %198, %199 : vector<2x120xf32>
    %201 = arith.truncf %200 : vector<2x120xf32> to vector<2x120xbf16>
    %c0_104 = arith.constant 0 : index
    %c0_105 = arith.constant 0 : index
    %202 = vector.load %arg17[%c0_104, %c0_105] : memref<120x84xbf16, #tpu.memory_space<vmem>>, vector<120x84xbf16>
    %cst_106 = arith.constant dense<0.000000e+00> : vector<2x84xf32>
    %203 = tpu.matmul %201, %202, %cst_106 {dimension_numbers = #tpu.dot_dimension_numbers<[1], [0], [0], [1], [0, 0, 1, 1], [], []>} : vector<2x120xbf16>, vector<120x84xbf16>, vector<2x84xf32> -> vector<2x84xf32>
    %c0_107 = arith.constant 0 : index
    %c0_108 = arith.constant 0 : index
    %204 = vector.load %arg18[%c0_107, %c0_108] : memref<1x84xf32, #tpu.memory_space<vmem>>, vector<1x84xf32>
    %205 = vector.broadcast %204 : vector<1x84xf32> to vector<2x84xf32>
    %206 = arith.addf %203, %205 : vector<2x84xf32>
    %c0_109 = arith.constant 0 : index
    %c0_110 = arith.constant 0 : index
    %207 = vector.load %arg19[%c0_109, %c0_110] : memref<1x84xf32, #tpu.memory_space<vmem>>, vector<1x84xf32>
    %c0_111 = arith.constant 0 : index
    %c0_112 = arith.constant 0 : index
    %208 = vector.load %arg20[%c0_111, %c0_112] : memref<1x84xf32, #tpu.memory_space<vmem>>, vector<1x84xf32>
    %cst_113 = arith.constant dense<0.000000e+00> : vector<84xf32>
    %209 = vector.multi_reduction <add>, %206, %cst_113 [0] : vector<2x84xf32> to vector<84xf32>
    %210 = vector.shape_cast %209 : vector<84xf32> to vector<1x84xf32>
    %cst_114 = arith.constant 2.000000e+00 : f32
    %211 = vector.broadcast %cst_114 : f32 to vector<1x84xf32>
    %212 = arith.divf %210, %211 : vector<1x84xf32>
    %213 = arith.mulf %206, %206 : vector<2x84xf32>
    %cst_115 = arith.constant dense<0.000000e+00> : vector<84xf32>
    %214 = vector.multi_reduction <add>, %213, %cst_115 [0] : vector<2x84xf32> to vector<84xf32>
    %215 = vector.shape_cast %214 : vector<84xf32> to vector<1x84xf32>
    %cst_116 = arith.constant 2.000000e+00 : f32
    %216 = vector.broadcast %cst_116 : f32 to vector<1x84xf32>
    %217 = arith.divf %215, %216 : vector<1x84xf32>
    %218 = arith.mulf %212, %212 : vector<1x84xf32>
    %219 = arith.subf %217, %218 : vector<1x84xf32>
    %220 = vector.broadcast %212 : vector<1x84xf32> to vector<2x84xf32>
    %221 = arith.subf %206, %220 : vector<2x84xf32>
    %222 = vector.broadcast %207 : vector<1x84xf32> to vector<2x84xf32>
    %223 = arith.mulf %222, %221 : vector<2x84xf32>
    %cst_117 = arith.constant 9.99999974E-6 : f32
    %224 = vector.broadcast %cst_117 : f32 to vector<1x84xf32>
    %225 = arith.addf %219, %224 : vector<1x84xf32>
    %226 = math.rsqrt %225 : vector<1x84xf32>
    %227 = vector.broadcast %226 : vector<1x84xf32> to vector<2x84xf32>
    %228 = arith.mulf %223, %227 : vector<2x84xf32>
    %229 = vector.broadcast %208 : vector<1x84xf32> to vector<2x84xf32>
    %230 = arith.addf %228, %229 : vector<2x84xf32>
    %cst_118 = arith.constant 0.000000e+00 : f32
    %231 = vector.broadcast %cst_118 : f32 to vector<2x84xf32>
    %232 = arith.maximumf %230, %231 : vector<2x84xf32>
    %233 = arith.truncf %232 : vector<2x84xf32> to vector<2x84xbf16>
    %c0_119 = arith.constant 0 : index
    %c0_120 = arith.constant 0 : index
    %234 = vector.load %arg21[%c0_119, %c0_120] : memref<84x128xbf16, #tpu.memory_space<vmem>>, vector<84x128xbf16>
    %cst_121 = arith.constant dense<0.000000e+00> : vector<2x128xf32>
    %235 = tpu.matmul %233, %234, %cst_121 {dimension_numbers = #tpu.dot_dimension_numbers<[1], [0], [0], [1], [0, 0, 1, 1], [], []>} : vector<2x84xbf16>, vector<84x128xbf16>, vector<2x128xf32> -> vector<2x128xf32>
    %c0_122 = arith.constant 0 : index
    %c0_123 = arith.constant 0 : index
    %236 = vector.load %arg22[%c0_122, %c0_123] : memref<1x128xf32, #tpu.memory_space<vmem>>, vector<1x128xf32>
    %237 = vector.broadcast %236 : vector<1x128xf32> to vector<2x128xf32>
    %238 = arith.addf %235, %237 : vector<2x128xf32>
    %c0_124 = arith.constant 0 : index
    %c0_125 = arith.constant 0 : index
    %239 = vector.load %arg23[%c0_124, %c0_125] : memref<2x128xf32, #tpu.memory_space<vmem>>, vector<2x128xf32>
    tpu.vector_store %arg23[%c0_124, %c0_125], %238 {strides = array<i32>} : memref<2x128xf32, #tpu.memory_space<vmem>>, vector<2x128xf32>,
    return
  }
}

</mosaic_0001>

<llo_original>
// kernel: lenet_forward.1
$region0: #{lenet_forward.1}
  #allocation0 [shape = 'u32[]', space=smem, size = 0x4, offset = 0x4, fixed_abs, tag = 'smem constant byte address 0x4 - core index']
  #allocation1 [shape = 'u32[144,128]{1,0:T(1,128)}', space=vmem, size = 0x12000, scoped, tag = 'internal scratch']
  #allocation2 [shape = 'f32[8,432]{1,0:T(8,128)}', space=vmem, size = 0x4000, scoped, tag = 'scratch operand']
  %s0 = inlined_call_operand.vmem [shape: f32[12,224], index: 0, kind: input, shape index: {}]
  %s1 = inlined_call_operand.vmem [shape: bf16[4,224,144], index: 1, kind: input, shape index: {}]
  %s2 = inlined_call_operand.vmem [shape: f32[1,144], index: 2, kind: input, shape index: {}]
  %s3 = inlined_call_operand.vmem [shape: f32[1,6], index: 3, kind: input, shape index: {}]
  %s4 = inlined_call_operand.vmem [shape: f32[1,6], index: 4, kind: input, shape index: {}]
  %s5 = inlined_call_operand.vmem [shape: bf16[432,256], index: 5, kind: input, shape index: {}]
  %s6 = inlined_call_operand.vmem [shape: f32[1,256], index: 6, kind: input, shape index: {}]
  %s7 = inlined_call_operand.vmem [shape: f32[1,16], index: 7, kind: input, shape index: {}]
  %s8 = inlined_call_operand.vmem [shape: f32[1,16], index: 8, kind: input, shape index: {}]
  %s9 = inlined_call_operand.vmem [shape: f32[144,6], index: 9, kind: input, shape index: {}]
  %s10 = inlined_call_operand.vmem [shape: f32[6,144], index: 10, kind: input, shape index: {}]
  %s11 = inlined_call_operand.vmem [shape: f32[256,16], index: 11, kind: input, shape index: {}]
  %s12 = inlined_call_operand.vmem [shape: f32[16,256], index: 12, kind: input, shape index: {}]
  %s13 = inlined_call_operand.vmem [shape: bf16[4,64,120], index: 13, kind: input, shape index: {}]
  %s14 = inlined_call_operand.vmem [shape: f32[1,120], index: 14, kind: input, shape index: {}]
  %s15 = inlined_call_operand.vmem [shape: f32[1,120], index: 15, kind: input, shape index: {}]
  %s16 = inlined_call_operand.vmem [shape: f32[1,120], index: 16, kind: input, shape index: {}]
  %s17 = inlined_call_operand.vmem [shape: bf16[120,84], index: 17, kind: input, shape index: {}]
  %s18 = inlined_call_operand.vmem [shape: f32[1,84], index: 18, kind: input, shape index: {}]
  %s19 = inlined_call_operand.vmem [shape: f32[1,84], index: 19, kind: input, shape index: {}]
  %s20 = inlined_call_operand.vmem [shape: f32[1,84], index: 20, kind: input, shape index: {}]
  %s21 = inlined_call_operand.vmem [shape: bf16[84,128], index: 21, kind: input, shape index: {}]
  %s22 = inlined_call_operand.vmem [shape: f32[1,128], index: 22, kind: input, shape index: {}]
  %s23 = inlined_call_operand.hbm [shape: f32[2,128], index: 23, kind: output, shape index: {}]
  %s24 = sld [smem:[#allocation0]]
  $region102: #{lenet_forward.1} parent=0
    _
  %s26 = ssub.s32 1, %s24
  %s27 = scalar_select 0, %s26, %s24
  $region1: #{lenet_forward.1} parent=0
    #allocation3 [shape = 'u8[1024]{0}', space=vmem, size = 0x400, scoped, tag = 'output window, operand 0, single buffered']
    #allocation4 [shape = 's32[1]{0}', space=sflag, size = 0x4, scoped, tag = 'scoped memory for lenet_forward.1']
    %28 = vsyncpa [#allocation4], 0
    // Predicated region
    $region2: #{lenet_forward.1} parent=1 // pred_check
      _
    $region3: #{lenet_forward.1} parent=1 // pred_check_branch
      %30 = sbr.rel (0) target = $region5
    $region4: #{lenet_forward.1} parent=1 // pred_region
      _
    $region5: #{lenet_forward.1} parent=1 // pred_fallthru
      _
    // Predicated region
    $region6: #{lenet_forward.1} parent=1 // pred_check
      _
    $region7: #{lenet_forward.1} parent=1 // pred_check_branch
      %32 = sbr.rel (0) target = $region9
    $region8: #{lenet_forward.1} parent=1 // pred_region
      _
    $region9: #{lenet_forward.1} parent=1 // pred_fallthru
      _
    // Predicated region
    $region10: #{lenet_forward.1} parent=1 // pred_check
      _
    $region11: #{lenet_forward.1} parent=1 // pred_check_branch
      %34 = sbr.rel (0) target = $region13
    $region12: #{lenet_forward.1} parent=1 // pred_region
      _
    $region13: #{lenet_forward.1} parent=1 // pred_fallthru
      _
    // Predicated region
    $region14: #{lenet_forward.1} parent=1 // pred_check
      _
    $region15: #{lenet_forward.1} parent=1 // pred_check_branch
      %36 = sbr.rel (0) target = $region17
    $region16: #{lenet_forward.1} parent=1 // pred_region
      _
    $region17: #{lenet_forward.1} parent=1 // pred_fallthru
      _
    // Predicated region
    $region18: #{lenet_forward.1} parent=1 // pred_check
      _
    $region19: #{lenet_forward.1} parent=1 // pred_check_branch
      %38 = sbr.rel (0) target = $region21
    $region20: #{lenet_forward.1} parent=1 // pred_region
      _
    $region21: #{lenet_forward.1} parent=1 // pred_fallthru
      _
    // Predicated region
    $region22: #{lenet_forward.1} parent=1 // pred_check
      _
    $region23: #{lenet_forward.1} parent=1 // pred_check_branch
      %40 = sbr.rel (0) target = $region25
    $region24: #{lenet_forward.1} parent=1 // pred_region
      _
    $region25: #{lenet_forward.1} parent=1 // pred_fallthru
      _
    // Predicated region
    $region26: #{lenet_forward.1} parent=1 // pred_check
      _
    $region27: #{lenet_forward.1} parent=1 // pred_check_branch
      %42 = sbr.rel (0) target = $region29
    $region28: #{lenet_forward.1} parent=1 // pred_region
      _
    $region29: #{lenet_forward.1} parent=1 // pred_fallthru
      _
    // Predicated region
    $region30: #{lenet_forward.1} parent=1 // pred_check
      _
    $region31: #{lenet_forward.1} parent=1 // pred_check_branch
      %44 = sbr.rel (0) target = $region33
    $region32: #{lenet_forward.1} parent=1 // pred_region
      _
    $region33: #{lenet_forward.1} parent=1 // pred_fallthru
      _
    // Predicated region
    $region34: #{lenet_forward.1} parent=1 // pred_check
      _
    $region35: #{lenet_forward.1} parent=1 // pred_check_branch
      %46 = sbr.rel (0) target = $region37
    $region36: #{lenet_forward.1} parent=1 // pred_region
      _
    $region37: #{lenet_forward.1} parent=1 // pred_fallthru
      _
    // Predicated region
    $region38: #{lenet_forward.1} parent=1 // pred_check
      _
    $region39: #{lenet_forward.1} parent=1 // pred_check_branch
      %48 = sbr.rel (0) target = $region41
    $region40: #{lenet_forward.1} parent=1 // pred_region
      _
    $region41: #{lenet_forward.1} parent=1 // pred_fallthru
      _
    // Predicated region
    $region42: #{lenet_forward.1} parent=1 // pred_check
      _
    $region43: #{lenet_forward.1} parent=1 // pred_check_branch
      %50 = sbr.rel (0) target = $region45
    $region44: #{lenet_forward.1} parent=1 // pred_region
      _
    $region45: #{lenet_forward.1} parent=1 // pred_fallthru
      _
    // Predicated region
    $region46: #{lenet_forward.1} parent=1 // pred_check
      _
    $region47: #{lenet_forward.1} parent=1 // pred_check_branch
      %52 = sbr.rel (0) target = $region49
    $region48: #{lenet_forward.1} parent=1 // pred_region
      _
    $region49: #{lenet_forward.1} parent=1 // pred_fallthru
      _
    // Predicated region
    $region50: #{lenet_forward.1} parent=1 // pred_check
      _
    $region51: #{lenet_forward.1} parent=1 // pred_check_branch
      %54 = sbr.rel (0) target = $region53
    $region52: #{lenet_forward.1} parent=1 // pred_region
      _
    $region53: #{lenet_forward.1} parent=1 // pred_fallthru
      _
    // Predicated region
    $region54: #{lenet_forward.1} parent=1 // pred_check
      _
    $region55: #{lenet_forward.1} parent=1 // pred_check_branch
      %56 = sbr.rel (0) target = $region57
    $region56: #{lenet_forward.1} parent=1 // pred_region
      _
    $region57: #{lenet_forward.1} parent=1 // pred_fallthru
      _
    // Predicated region
    $region58: #{lenet_forward.1} parent=1 // pred_check
      _
    $region59: #{lenet_forward.1} parent=1 // pred_check_branch
      %58 = sbr.rel (0) target = $region61
    $region60: #{lenet_forward.1} parent=1 // pred_region
      _
    $region61: #{lenet_forward.1} parent=1 // pred_fallthru
      _
    // Predicated region
    $region62: #{lenet_forward.1} parent=1 // pred_check
      _
    $region63: #{lenet_forward.1} parent=1 // pred_check_branch
      %60 = sbr.rel (0) target = $region65
    $region64: #{lenet_forward.1} parent=1 // pred_region
      _
    $region65: #{lenet_forward.1} parent=1 // pred_fallthru
      _
    // Predicated region
    $region66: #{lenet_forward.1} parent=1 // pred_check
      _
    $region67: #{lenet_forward.1} parent=1 // pred_check_branch
      %62 = sbr.rel (0) target = $region69
    $region68: #{lenet_forward.1} parent=1 // pred_region
      _
    $region69: #{lenet_forward.1} parent=1 // pred_fallthru
      _
    // Predicated region
    $region70: #{lenet_forward.1} parent=1 // pred_check
      _
    $region71: #{lenet_forward.1} parent=1 // pred_check_branch
      %64 = sbr.rel (0) target = $region73
    $region72: #{lenet_forward.1} parent=1 // pred_region
      _
    $region73: #{lenet_forward.1} parent=1 // pred_fallthru
      _
    // Predicated region
    $region74: #{lenet_forward.1} parent=1 // pred_check
      _
    $region75: #{lenet_forward.1} parent=1 // pred_check_branch
      %66 = sbr.rel (0) target = $region77
    $region76: #{lenet_forward.1} parent=1 // pred_region
      _
    $region77: #{lenet_forward.1} parent=1 // pred_fallthru
      _
    // Predicated region
    $region78: #{lenet_forward.1} parent=1 // pred_check
      _
    $region79: #{lenet_forward.1} parent=1 // pred_check_branch
      %68 = sbr.rel (0) target = $region81
    $region80: #{lenet_forward.1} parent=1 // pred_region
      _
    $region81: #{lenet_forward.1} parent=1 // pred_fallthru
      _
    // Predicated region
    $region82: #{lenet_forward.1} parent=1 // pred_check
      _
    $region83: #{lenet_forward.1} parent=1 // pred_check_branch
      %70 = sbr.rel (0) target = $region85
    $region84: #{lenet_forward.1} parent=1 // pred_region
      _
    $region85: #{lenet_forward.1} parent=1 // pred_fallthru
      _
    // Predicated region
    $region86: #{lenet_forward.1} parent=1 // pred_check
      _
    $region87: #{lenet_forward.1} parent=1 // pred_check_branch
      %72 = sbr.rel (0) target = $region89
    $region88: #{lenet_forward.1} parent=1 // pred_region
      _
    $region89: #{lenet_forward.1} parent=1 // pred_fallthru
      _
    // Predicated region
    $region90: #{lenet_forward.1} parent=1 // pred_check
      _
    $region91: #{lenet_forward.1} parent=1 // pred_check_branch
      %74 = sbr.rel (0) target = $region93
    $region92: #{lenet_forward.1} parent=1 // pred_region
      _
    $region93: #{lenet_forward.1} parent=1 // pred_fallthru
      _
    %v76 = vld [vmem:[%s0] sm:$0xff]
    %v77 = vld [vmem:[%s0 + $0x8] sm:$0xff]
    %v78 = vld [vmem:[%s0 + $0x10] sm:$0xf]
    %v79 = vld [vmem:[%s0 + $0x18] sm:$0xf]
    %v80 = vpack.c.bf16 %v78, %v76
    %v81 = vpack.c.bf16 %v79, %v77
    %v82 = vld [vmem:[%s2] sm:$0x3]
    %v83 = vld [vmem:[%s1] sm:$0xff]
    %v84 = vld [vmem:[%s1 + $0x8] sm:$0xff]
    %v85 = vld [vmem:[%s1 + $0x10] sm:$0xff]
    %v86 = vld [vmem:[%s1 + $0x18] sm:$0xff]
    %v87 = vld [vmem:[%s1 + $0x20] sm:$0xff]
    %v88 = vld [vmem:[%s1 + $0x28] sm:$0xff]
    %v89 = vld [vmem:[%s1 + $0x30] sm:$0xff]
    %v90 = vld [vmem:[%s1 + $0x38] sm:$0xff]
    %v91 = vld [vmem:[%s1 + $0x40] sm:$0xff]
    %v92 = vld [vmem:[%s1 + $0x48] sm:$0xff]
    %v93 = vld [vmem:[%s1 + $0x50] sm:$0xff]
    %v94 = vld [vmem:[%s1 + $0x58] sm:$0xff]
    %v95 = vld [vmem:[%s1 + $0x60] sm:$0xff]
    %v96 = vld [vmem:[%s1 + $0x68] sm:$0xff]
    %v97 = vld [vmem:[%s1 + $0x70] sm:$0xff]
    %v98 = vld [vmem:[%s1 + $0x78] sm:$0xff]
    %v99 = vld [vmem:[%s1 + $0x80] sm:$0xff]
    %v100 = vld [vmem:[%s1 + $0x88] sm:$0xff]
    %v101 = vld [vmem:[%s1 + $0x90] sm:$0xff]
    %v102 = vld [vmem:[%s1 + $0x98] sm:$0xff]
    %v103 = vld [vmem:[%s1 + $0xa0] sm:$0xff]
    %v104 = vld [vmem:[%s1 + $0xa8] sm:$0xff]
    %v105 = vld [vmem:[%s1 + $0xb0] sm:$0xff]
    %v106 = vld [vmem:[%s1 + $0xb8] sm:$0xff]
    %v107 = vld [vmem:[%s1 + $0xc0] sm:$0xff]
    %v108 = vld [vmem:[%s1 + $0xc8] sm:$0xff]
    %v109 = vld [vmem:[%s1 + $0xd0] sm:$0xff]
    %v110 = vld [vmem:[%s1 + $0xd8] sm:$0xff]
    %v112 = vlaneseq
    %v113 = vshrl.u32 %v112, 7
    %v114 = vsub.s32 0, %v113
    %v115 = vrot.slane %v82, %v114
    %v116 = vlaneseq
    %v117 = vshrl.u32 %v116, 7
    %v118 = vsub.s32 1, %v117
    %v119 = vrot.slane %v82, %v118
    %v150 = vunpack.c.l.b16 %v83
    %v151 = vunpack.c.h.b16 %v83
    %v152 = vunpack.c.l.b16 %v84
    %v153 = vunpack.c.h.b16 %v84
    %v154 = vunpack.c.l.b16 %v85
    %v155 = vunpack.c.h.b16 %v85
    %v156 = vunpack.c.l.b16 %v86
    %v157 = vunpack.c.h.b16 %v86
    %v158 = vunpack.c.l.b16 %v87
    %v159 = vunpack.c.h.b16 %v87
    %v160 = vunpack.c.l.b16 %v88
    %v161 = vunpack.c.h.b16 %v88
    %v162 = vunpack.c.l.b16 %v89
    %v163 = vunpack.c.h.b16 %v89
    %v164 = vunpack.c.l.b16 %v90
    %v165 = vunpack.c.h.b16 %v90
    %v166 = vunpack.c.l.b16 %v91
    %v167 = vunpack.c.h.b16 %v91
    %v168 = vunpack.c.l.b16 %v92
    %v169 = vunpack.c.h.b16 %v92
    %v170 = vunpack.c.l.b16 %v93
    %v171 = vunpack.c.h.b16 %v93
    %v172 = vunpack.c.l.b16 %v94
    %v173 = vunpack.c.h.b16 %v94
    %v174 = vunpack.c.l.b16 %v95
    %v175 = vunpack.c.h.b16 %v95
    %v176 = vunpack.c.l.b16 %v96
    %v177 = vunpack.c.h.b16 %v96
    %v178 = vunpack.c.l.b16 %v97
    %v179 = vunpack.c.h.b16 %v97
    %v180 = vunpack.c.l.b16 %v98
    %v181 = vunpack.c.h.b16 %v98
    %v182 = vunpack.c.l.b16 %v99
    %v183 = vunpack.c.h.b16 %v99
    %v184 = vunpack.c.l.b16 %v100
    %v185 = vunpack.c.h.b16 %v100
    %v186 = vunpack.c.l.b16 %v101
    %v187 = vunpack.c.h.b16 %v101
    %v188 = vunpack.c.l.b16 %v102
    %v189 = vunpack.c.h.b16 %v102
    %v190 = vunpack.c.l.b16 %v103
    %v191 = vunpack.c.h.b16 %v103
    %v192 = vunpack.c.l.b16 %v104
    %v193 = vunpack.c.h.b16 %v104
    %v194 = vunpack.c.l.b16 %v105
    %v195 = vunpack.c.h.b16 %v105
    %v196 = vunpack.c.l.b16 %v106
    %v197 = vunpack.c.h.b16 %v106
    %v198 = vunpack.c.l.b16 %v107
    %v199 = vunpack.c.h.b16 %v107
    %v200 = vunpack.c.l.b16 %v108
    %v201 = vunpack.c.h.b16 %v108
    %v202 = vunpack.c.l.b16 %v109
    %v203 = vunpack.c.h.b16 %v109
    %v204 = vunpack.c.l.b16 %v110
    %v205 = vunpack.c.h.b16 %v110
    %v206 = vpack.c.b16 %v152, %v150
    %v207 = vpack.c.b16 %v153, %v151
    %v208 = vpack.c.b16 %v156, %v154
    %v209 = vpack.c.b16 %v157, %v155
    %v210 = vpack.c.b16 %v160, %v158
    %v211 = vpack.c.b16 %v161, %v159
    %v212 = vpack.c.b16 %v164, %v162
    %v213 = vpack.c.b16 %v165, %v163
    %v214 = vpack.c.b16 %v168, %v166
    %v215 = vpack.c.b16 %v169, %v167
    %v216 = vpack.c.b16 %v172, %v170
    %v217 = vpack.c.b16 %v173, %v171
    %v218 = vpack.c.b16 %v176, %v174
    %v219 = vpack.c.b16 %v177, %v175
    %v220 = vpack.c.b16 %v180, %v178
    %v221 = vpack.c.b16 %v181, %v179
    %v222 = vpack.c.b16 %v184, %v182
    %v223 = vpack.c.b16 %v185, %v183
    %v224 = vpack.c.b16 %v188, %v186
    %v225 = vpack.c.b16 %v189, %v187
    %v226 = vpack.c.b16 %v192, %v190
    %v227 = vpack.c.b16 %v193, %v191
    %v228 = vpack.c.b16 %v196, %v194
    %v229 = vpack.c.b16 %v197, %v195
    %v230 = vpack.c.b16 %v200, %v198
    %v231 = vpack.c.b16 %v201, %v199
    %v232 = vpack.c.b16 %v204, %v202
    %v233 = vpack.c.b16 %v205, %v203
    %vm262 = vcmask 785408
    %v264 = vsel %vm262, %v81, 0
    %266 = vmatprep.subr.bf16.mxu0 %v221
    %267 = vmatpush1.bf16.msra.mxu0 %v220
    %268 = vmatprep.subr.bf16.mxu0 %v219
    %269 = vmatpush1.bf16.msra.mxu0 %v218
    %270 = vmatprep.subr.bf16.mxu0 %v217
    %271 = vmatpush1.bf16.msra.mxu0 %v216
    %272 = vmatprep.subr.bf16.mxu0 %v215
    %273 = vmatpush1.bf16.msra.mxu0 %v214
    %274 = vmatprep.subr.bf16.mxu0 %v213
    %275 = vmatpush1.bf16.msra.mxu0 %v212
    %276 = vmatprep.subr.bf16.mxu0 %v211
    %277 = vmatpush1.bf16.msra.mxu0 %v210
    %278 = vmatprep.subr.bf16.mxu0 %v209
    %279 = vmatpush1.bf16.msra.mxu0 %v208
    %280 = vmatprep.subr.bf16.mxu0 %v207
    %281 = vmatpush1.bf16.msra.mxu0 %v206
    %282 = vmatprep.subr.bf16.mxu0 0
    %283 = vmatpush2.bf16.msra.mxu0 0
    %284 = vmatprep.subr.bf16.mxu0 0
    %285 = vmatpush2.bf16.msra.mxu0 0
    %286 = vmatprep.subr.bf16.mxu0 %v233
    %287 = vmatpush2.bf16.msra.mxu0 %v232
    %288 = vmatprep.subr.bf16.mxu0 %v231
    %289 = vmatpush2.bf16.msra.mxu0 %v230
    %290 = vmatprep.subr.bf16.mxu0 %v229
    %291 = vmatpush2.bf16.msra.mxu0 %v228
    %292 = vmatprep.subr.bf16.mxu0 %v227
    %293 = vmatpush2.bf16.msra.mxu0 %v226
    %294 = vmatprep.subr.bf16.mxu0 %v225
    %295 = vmatpush2.bf16.msra.mxu0 %v224
    %296 = vmatprep.subr.bf16.mxu0 %v223
    %297 = vmatpush2.bf16.msra.mxu0 %v222
    %298 = vmatprep.mubr.bf16.mxu0 %v264
    %299 = vmatmul.mubr.bf16.gmra.mxu0 %v80
    %v300 = vpop.f32.mrf.mxu0
    %v301 = vadd.f32 %v115, %v300
    %v302 = vpop.f32.mrf.mxu0
    %v303 = vadd.f32 %v119, %v302
    %v304 = vpop.f32.mrf.mxu0
    %v305 = vadd.f32 %v115, %v304
    %v306 = vpop.f32.mrf.mxu0
    %v307 = vadd.f32 %v119, %v306
    %308 = vdwg.mxu0
    %s309 = scalar_lea.vmem %s1, 224
    %v310 = vld [vmem:[%s309] sm:$0xff]
    %v311 = vld [vmem:[%s309 + $0x8] sm:$0xff]
    %v312 = vld [vmem:[%s309 + $0x10] sm:$0xff]
    %v313 = vld [vmem:[%s309 + $0x18] sm:$0xff]
    %v314 = vld [vmem:[%s309 + $0x20] sm:$0xff]
    %v315 = vld [vmem:[%s309 + $0x28] sm:$0xff]
    %v316 = vld [vmem:[%s309 + $0x30] sm:$0xff]
    %v317 = vld [vmem:[%s309 + $0x38] sm:$0xff]
    %v318 = vld [vmem:[%s309 + $0x40] sm:$0xff]
    %v319 = vld [vmem:[%s309 + $0x48] sm:$0xff]
    %v320 = vld [vmem:[%s309 + $0x50] sm:$0xff]
    %v321 = vld [vmem:[%s309 + $0x58] sm:$0xff]
    %v322 = vld [vmem:[%s309 + $0x60] sm:$0xff]
    %v323 = vld [vmem:[%s309 + $0x68] sm:$0xff]
    %v324 = vld [vmem:[%s309 + $0x70] sm:$0xff]
    %v325 = vld [vmem:[%s309 + $0x78] sm:$0xff]
    %v326 = vld [vmem:[%s309 + $0x80] sm:$0xff]
    %v327 = vld [vmem:[%s309 + $0x88] sm:$0xff]
    %v328 = vld [vmem:[%s309 + $0x90] sm:$0xff]
    %v329 = vld [vmem:[%s309 + $0x98] sm:$0xff]
    %v330 = vld [vmem:[%s309 + $0xa0] sm:$0xff]
    %v331 = vld [vmem:[%s309 + $0xa8] sm:$0xff]
    %v332 = vld [vmem:[%s309 + $0xb0] sm:$0xff]
    %v333 = vld [vmem:[%s309 + $0xb8] sm:$0xff]
    %v334 = vld [vmem:[%s309 + $0xc0] sm:$0xff]
    %v335 = vld [vmem:[%s309 + $0xc8] sm:$0xff]
    %v336 = vld [vmem:[%s309 + $0xd0] sm:$0xff]
    %v337 = vld [vmem:[%s309 + $0xd8] sm:$0xff]
    %v366 = vunpack.c.l.b16 %v310
    %v367 = vunpack.c.h.b16 %v310
    %v368 = vunpack.c.l.b16 %v311
    %v369 = vunpack.c.h.b16 %v311
    %v370 = vunpack.c.l.b16 %v312
    %v371 = vunpack.c.h.b16 %v312
    %v372 = vunpack.c.l.b16 %v313
    %v373 = vunpack.c.h.b16 %v313
    %v374 = vunpack.c.l.b16 %v314
    %v375 = vunpack.c.h.b16 %v314
    %v376 = vunpack.c.l.b16 %v315
    %v377 = vunpack.c.h.b16 %v315
    %v378 = vunpack.c.l.b16 %v316
    %v379 = vunpack.c.h.b16 %v316
    %v380 = vunpack.c.l.b16 %v317
    %v381 = vunpack.c.h.b16 %v317
    %v382 = vunpack.c.l.b16 %v318
    %v383 = vunpack.c.h.b16 %v318
    %v384 = vunpack.c.l.b16 %v319
    %v385 = vunpack.c.h.b16 %v319
    %v386 = vunpack.c.l.b16 %v320
    %v387 = vunpack.c.h.b16 %v320
    %v388 = vunpack.c.l.b16 %v321
    %v389 = vunpack.c.h.b16 %v321
    %v390 = vunpack.c.l.b16 %v322
    %v391 = vunpack.c.h.b16 %v322
    %v392 = vunpack.c.l.b16 %v323
    %v393 = vunpack.c.h.b16 %v323
    %v394 = vunpack.c.l.b16 %v324
    %v395 = vunpack.c.h.b16 %v324
    %v396 = vunpack.c.l.b16 %v325
    %v397 = vunpack.c.h.b16 %v325
    %v398 = vunpack.c.l.b16 %v326
    %v399 = vunpack.c.h.b16 %v326
    %v400 = vunpack.c.l.b16 %v327
    %v401 = vunpack.c.h.b16 %v327
    %v402 = vunpack.c.l.b16 %v328
    %v403 = vunpack.c.h.b16 %v328
    %v404 = vunpack.c.l.b16 %v329
    %v405 = vunpack.c.h.b16 %v329
    %v406 = vunpack.c.l.b16 %v330
    %v407 = vunpack.c.h.b16 %v330
    %v408 = vunpack.c.l.b16 %v331
    %v409 = vunpack.c.h.b16 %v331
    %v410 = vunpack.c.l.b16 %v332
    %v411 = vunpack.c.h.b16 %v332
    %v412 = vunpack.c.l.b16 %v333
    %v413 = vunpack.c.h.b16 %v333
    %v414 = vunpack.c.l.b16 %v334
    %v415 = vunpack.c.h.b16 %v334
    %v416 = vunpack.c.l.b16 %v335
    %v417 = vunpack.c.h.b16 %v335
    %v418 = vunpack.c.l.b16 %v336
    %v419 = vunpack.c.h.b16 %v336
    %v420 = vunpack.c.l.b16 %v337
    %v421 = vunpack.c.h.b16 %v337
    %v422 = vpack.c.b16 %v368, %v366
    %v423 = vpack.c.b16 %v369, %v367
    %v424 = vpack.c.b16 %v372, %v370
    %v425 = vpack.c.b16 %v373, %v371
    %v426 = vpack.c.b16 %v376, %v374
    %v427 = vpack.c.b16 %v377, %v375
    %v428 = vpack.c.b16 %v380, %v378
    %v429 = vpack.c.b16 %v381, %v379
    %v430 = vpack.c.b16 %v384, %v382
    %v431 = vpack.c.b16 %v385, %v383
    %v432 = vpack.c.b16 %v388, %v386
    %v433 = vpack.c.b16 %v389, %v387
    %v434 = vpack.c.b16 %v392, %v390
    %v435 = vpack.c.b16 %v393, %v391
    %v436 = vpack.c.b16 %v396, %v394
    %v437 = vpack.c.b16 %v397, %v395
    %v438 = vpack.c.b16 %v400, %v398
    %v439 = vpack.c.b16 %v401, %v399
    %v440 = vpack.c.b16 %v404, %v402
    %v441 = vpack.c.b16 %v405, %v403
    %v442 = vpack.c.b16 %v408, %v406
    %v443 = vpack.c.b16 %v409, %v407
    %v444 = vpack.c.b16 %v412, %v410
    %v445 = vpack.c.b16 %v413, %v411
    %v446 = vpack.c.b16 %v416, %v414
    %v447 = vpack.c.b16 %v417, %v415
    %v448 = vpack.c.b16 %v420, %v418
    %v449 = vpack.c.b16 %v421, %v419
    %478 = vmatprep.subr.bf16.mxu0 %v437
    %479 = vmatpush1.bf16.msra.mxu0 %v436
    %480 = vmatprep.subr.bf16.mxu0 %v435
    %481 = vmatpush1.bf16.msra.mxu0 %v434
    %482 = vmatprep.subr.bf16.mxu0 %v433
    %483 = vmatpush1.bf16.msra.mxu0 %v432
    %484 = vmatprep.subr.bf16.mxu0 %v431
    %485 = vmatpush1.bf16.msra.mxu0 %v430
    %486 = vmatprep.subr.bf16.mxu0 %v429
    %487 = vmatpush1.bf16.msra.mxu0 %v428
    %488 = vmatprep.subr.bf16.mxu0 %v427
    %489 = vmatpush1.bf16.msra.mxu0 %v426
    %490 = vmatprep.subr.bf16.mxu0 %v425
    %491 = vmatpush1.bf16.msra.mxu0 %v424
    %492 = vmatprep.subr.bf16.mxu0 %v423
    %493 = vmatpush1.bf16.msra.mxu0 %v422
    %494 = vmatprep.subr.bf16.mxu0 0
    %495 = vmatpush2.bf16.msra.mxu0 0
    %496 = vmatprep.subr.bf16.mxu0 0
    %497 = vmatpush2.bf16.msra.mxu0 0
    %498 = vmatprep.subr.bf16.mxu0 %v449
    %499 = vmatpush2.bf16.msra.mxu0 %v448
    %500 = vmatprep.subr.bf16.mxu0 %v447
    %501 = vmatpush2.bf16.msra.mxu0 %v446
    %502 = vmatprep.subr.bf16.mxu0 %v445
    %503 = vmatpush2.bf16.msra.mxu0 %v444
    %504 = vmatprep.subr.bf16.mxu0 %v443
    %505 = vmatpush2.bf16.msra.mxu0 %v442
    %506 = vmatprep.subr.bf16.mxu0 %v441
    %507 = vmatpush2.bf16.msra.mxu0 %v440
    %508 = vmatprep.subr.bf16.mxu0 %v439
    %509 = vmatpush2.bf16.msra.mxu0 %v438
    %510 = vmatprep.mubr.bf16.mxu0 %v264
    %511 = vmatmul.mubr.bf16.gmra.mxu0 %v80
    %v512 = vpop.f32.mrf.mxu0
    %v513 = vadd.f32 %v115, %v512
    %v514 = vpop.f32.mrf.mxu0
    %v515 = vadd.f32 %v119, %v514
    %v516 = vpop.f32.mrf.mxu0
    %v517 = vadd.f32 %v115, %v516
    %v518 = vpop.f32.mrf.mxu0
    %v519 = vadd.f32 %v119, %v518
    %520 = vdwg.mxu0
    %s521 = scalar_lea.vmem %s1, 448
    %v522 = vld [vmem:[%s521] sm:$0xff]
    %v523 = vld [vmem:[%s521 + $0x8] sm:$0xff]
    %v524 = vld [vmem:[%s521 + $0x10] sm:$0xff]
    %v525 = vld [vmem:[%s521 + $0x18] sm:$0xff]
    %v526 = vld [vmem:[%s521 + $0x20] sm:$0xff]
    %v527 = vld [vmem:[%s521 + $0x28] sm:$0xff]
    %v528 = vld [vmem:[%s521 + $0x30] sm:$0xff]
    %v529 = vld [vmem:[%s521 + $0x38] sm:$0xff]
    %v530 = vld [vmem:[%s521 + $0x40] sm:$0xff]
    %v531 = vld [vmem:[%s521 + $0x48] sm:$0xff]
    %v532 = vld [vmem:[%s521 + $0x50] sm:$0xff]
    %v533 = vld [vmem:[%s521 + $0x58] sm:$0xff]
    %v534 = vld [vmem:[%s521 + $0x60] sm:$0xff]
    %v535 = vld [vmem:[%s521 + $0x68] sm:$0xff]
    %v536 = vld [vmem:[%s521 + $0x70] sm:$0xff]
    %v537 = vld [vmem:[%s521 + $0x78] sm:$0xff]
    %v538 = vld [vmem:[%s521 + $0x80] sm:$0xff]
    %v539 = vld [vmem:[%s521 + $0x88] sm:$0xff]
    %v540 = vld [vmem:[%s521 + $0x90] sm:$0xff]
    %v541 = vld [vmem:[%s521 + $0x98] sm:$0xff]
    %v542 = vld [vmem:[%s521 + $0xa0] sm:$0xff]
    %v543 = vld [vmem:[%s521 + $0xa8] sm:$0xff]
    %v544 = vld [vmem:[%s521 + $0xb0] sm:$0xff]
    %v545 = vld [vmem:[%s521 + $0xb8] sm:$0xff]
    %v546 = vld [vmem:[%s521 + $0xc0] sm:$0xff]
    %v547 = vld [vmem:[%s521 + $0xc8] sm:$0xff]
    %v548 = vld [vmem:[%s521 + $0xd0] sm:$0xff]
    %v549 = vld [vmem:[%s521 + $0xd8] sm:$0xff]
    %v578 = vunpack.c.l.b16 %v522
    %v579 = vunpack.c.h.b16 %v522
    %v580 = vunpack.c.l.b16 %v523
    %v581 = vunpack.c.h.b16 %v523
    %v582 = vunpack.c.l.b16 %v524
    %v583 = vunpack.c.h.b16 %v524
    %v584 = vunpack.c.l.b16 %v525
    %v585 = vunpack.c.h.b16 %v525
    %v586 = vunpack.c.l.b16 %v526
    %v587 = vunpack.c.h.b16 %v526
    %v588 = vunpack.c.l.b16 %v527
    %v589 = vunpack.c.h.b16 %v527
    %v590 = vunpack.c.l.b16 %v528
    %v591 = vunpack.c.h.b16 %v528
    %v592 = vunpack.c.l.b16 %v529
    %v593 = vunpack.c.h.b16 %v529
    %v594 = vunpack.c.l.b16 %v530
    %v595 = vunpack.c.h.b16 %v530
    %v596 = vunpack.c.l.b16 %v531
    %v597 = vunpack.c.h.b16 %v531
    %v598 = vunpack.c.l.b16 %v532
    %v599 = vunpack.c.h.b16 %v532
    %v600 = vunpack.c.l.b16 %v533
    %v601 = vunpack.c.h.b16 %v533
    %v602 = vunpack.c.l.b16 %v534
    %v603 = vunpack.c.h.b16 %v534
    %v604 = vunpack.c.l.b16 %v535
    %v605 = vunpack.c.h.b16 %v535
    %v606 = vunpack.c.l.b16 %v536
    %v607 = vunpack.c.h.b16 %v536
    %v608 = vunpack.c.l.b16 %v537
    %v609 = vunpack.c.h.b16 %v537
    %v610 = vunpack.c.l.b16 %v538
    %v611 = vunpack.c.h.b16 %v538
    %v612 = vunpack.c.l.b16 %v539
    %v613 = vunpack.c.h.b16 %v539
    %v614 = vunpack.c.l.b16 %v540
    %v615 = vunpack.c.h.b16 %v540
    %v616 = vunpack.c.l.b16 %v541
    %v617 = vunpack.c.h.b16 %v541
    %v618 = vunpack.c.l.b16 %v542
    %v619 = vunpack.c.h.b16 %v542
    %v620 = vunpack.c.l.b16 %v543
    %v621 = vunpack.c.h.b16 %v543
    %v622 = vunpack.c.l.b16 %v544
    %v623 = vunpack.c.h.b16 %v544
    %v624 = vunpack.c.l.b16 %v545
    %v625 = vunpack.c.h.b16 %v545
    %v626 = vunpack.c.l.b16 %v546
    %v627 = vunpack.c.h.b16 %v546
    %v628 = vunpack.c.l.b16 %v547
    %v629 = vunpack.c.h.b16 %v547
    %v630 = vunpack.c.l.b16 %v548
    %v631 = vunpack.c.h.b16 %v548
    %v632 = vunpack.c.l.b16 %v549
    %v633 = vunpack.c.h.b16 %v549
    %v634 = vpack.c.b16 %v580, %v578
    %v635 = vpack.c.b16 %v581, %v579
    %v636 = vpack.c.b16 %v584, %v582
    %v637 = vpack.c.b16 %v585, %v583
    %v638 = vpack.c.b16 %v588, %v586
    %v639 = vpack.c.b16 %v589, %v587
    %v640 = vpack.c.b16 %v592, %v590
    %v641 = vpack.c.b16 %v593, %v591
    %v642 = vpack.c.b16 %v596, %v594
    %v643 = vpack.c.b16 %v597, %v595
    %v644 = vpack.c.b16 %v600, %v598
    %v645 = vpack.c.b16 %v601, %v599
    %v646 = vpack.c.b16 %v604, %v602
    %v647 = vpack.c.b16 %v605, %v603
    %v648 = vpack.c.b16 %v608, %v606
    %v649 = vpack.c.b16 %v609, %v607
    %v650 = vpack.c.b16 %v612, %v610
    %v651 = vpack.c.b16 %v613, %v611
    %v652 = vpack.c.b16 %v616, %v614
    %v653 = vpack.c.b16 %v617, %v615
    %v654 = vpack.c.b16 %v620, %v618
    %v655 = vpack.c.b16 %v621, %v619
    %v656 = vpack.c.b16 %v624, %v622
    %v657 = vpack.c.b16 %v625, %v623
    %v658 = vpack.c.b16 %v628, %v626
    %v659 = vpack.c.b16 %v629, %v627
    %v660 = vpack.c.b16 %v632, %v630
    %v661 = vpack.c.b16 %v633, %v631
    %690 = vmatprep.subr.bf16.mxu0 %v649
    %691 = vmatpush1.bf16.msra.mxu0 %v648
    %692 = vmatprep.subr.bf16.mxu0 %v647
    %693 = vmatpush1.bf16.msra.mxu0 %v646
    %694 = vmatprep.subr.bf16.mxu0 %v645
    %695 = vmatpush1.bf16.msra.mxu0 %v644
    %696 = vmatprep.subr.bf16.mxu0 %v643
    %697 = vmatpush1.bf16.msra.mxu0 %v642
    %698 = vmatprep.subr.bf16.mxu0 %v641
    %699 = vmatpush1.bf16.msra.mxu0 %v640
    %700 = vmatprep.subr.bf16.mxu0 %v639
    %701 = vmatpush1.bf16.msra.mxu0 %v638
    %702 = vmatprep.subr.bf16.mxu0 %v637
    %703 = vmatpush1.bf16.msra.mxu0 %v636
    %704 = vmatprep.subr.bf16.mxu0 %v635
    %705 = vmatpush1.bf16.msra.mxu0 %v634
    %706 = vmatprep.subr.bf16.mxu0 0
    %707 = vmatpush2.bf16.msra.mxu0 0
    %708 = vmatprep.subr.bf16.mxu0 0
    %709 = vmatpush2.bf16.msra.mxu0 0
    %710 = vmatprep.subr.bf16.mxu0 %v661
    %711 = vmatpush2.bf16.msra.mxu0 %v660
    %712 = vmatprep.subr.bf16.mxu0 %v659
    %713 = vmatpush2.bf16.msra.mxu0 %v658
    %714 = vmatprep.subr.bf16.mxu0 %v657
    %715 = vmatpush2.bf16.msra.mxu0 %v656
    %716 = vmatprep.subr.bf16.mxu0 %v655
    %717 = vmatpush2.bf16.msra.mxu0 %v654
    %718 = vmatprep.subr.bf16.mxu0 %v653
    %719 = vmatpush2.bf16.msra.mxu0 %v652
    %720 = vmatprep.subr.bf16.mxu0 %v651
    %721 = vmatpush2.bf16.msra.mxu0 %v650
    %722 = vmatprep.mubr.bf16.mxu0 %v264
    %723 = vmatmul.mubr.bf16.gmra.mxu0 %v80
    %v724 = vpop.f32.mrf.mxu0
    %v725 = vadd.f32 %v115, %v724
    %v726 = vpop.f32.mrf.mxu0
    %v727 = vadd.f32 %v119, %v726
    %v728 = vpop.f32.mrf.mxu0
    %v729 = vadd.f32 %v115, %v728
    %v730 = vpop.f32.mrf.mxu0
    %v731 = vadd.f32 %v119, %v730
    %732 = vdwg.mxu0
    %s733 = scalar_lea.vmem %s1, 672
    %v734 = vld [vmem:[%s733] sm:$0xff]
    %v735 = vld [vmem:[%s733 + $0x8] sm:$0xff]
    %v736 = vld [vmem:[%s733 + $0x10] sm:$0xff]
    %v737 = vld [vmem:[%s733 + $0x18] sm:$0xff]
    %v738 = vld [vmem:[%s733 + $0x20] sm:$0xff]
    %v739 = vld [vmem:[%s733 + $0x28] sm:$0xff]
    %v740 = vld [vmem:[%s733 + $0x30] sm:$0xff]
    %v741 = vld [vmem:[%s733 + $0x38] sm:$0xff]
    %v742 = vld [vmem:[%s733 + $0x40] sm:$0xff]
    %v743 = vld [vmem:[%s733 + $0x48] sm:$0xff]
    %v744 = vld [vmem:[%s733 + $0x50] sm:$0xff]
    %v745 = vld [vmem:[%s733 + $0x58] sm:$0xff]
    %v746 = vld [vmem:[%s733 + $0x60] sm:$0xff]
    %v747 = vld [vmem:[%s733 + $0x68] sm:$0xff]
    %v748 = vld [vmem:[%s733 + $0x70] sm:$0xff]
    %v749 = vld [vmem:[%s733 + $0x78] sm:$0xff]
    %v750 = vld [vmem:[%s733 + $0x80] sm:$0xff]
    %v751 = vld [vmem:[%s733 + $0x88] sm:$0xff]
    %v752 = vld [vmem:[%s733 + $0x90] sm:$0xff]
    %v753 = vld [vmem:[%s733 + $0x98] sm:$0xff]
    %v754 = vld [vmem:[%s733 + $0xa0] sm:$0xff]
    %v755 = vld [vmem:[%s733 + $0xa8] sm:$0xff]
    %v756 = vld [vmem:[%s733 + $0xb0] sm:$0xff]
    %v757 = vld [vmem:[%s733 + $0xb8] sm:$0xff]
    %v758 = vld [vmem:[%s733 + $0xc0] sm:$0xff]
    %v759 = vld [vmem:[%s733 + $0xc8] sm:$0xff]
    %v760 = vld [vmem:[%s733 + $0xd0] sm:$0xff]
    %v761 = vld [vmem:[%s733 + $0xd8] sm:$0xff]
    %v790 = vunpack.c.l.b16 %v734
    %v791 = vunpack.c.h.b16 %v734
    %v792 = vunpack.c.l.b16 %v735
    %v793 = vunpack.c.h.b16 %v735
    %v794 = vunpack.c.l.b16 %v736
    %v795 = vunpack.c.h.b16 %v736
    %v796 = vunpack.c.l.b16 %v737
    %v797 = vunpack.c.h.b16 %v737
    %v798 = vunpack.c.l.b16 %v738
    %v799 = vunpack.c.h.b16 %v738
    %v800 = vunpack.c.l.b16 %v739
    %v801 = vunpack.c.h.b16 %v739
    %v802 = vunpack.c.l.b16 %v740
    %v803 = vunpack.c.h.b16 %v740
    %v804 = vunpack.c.l.b16 %v741
    %v805 = vunpack.c.h.b16 %v741
    %v806 = vunpack.c.l.b16 %v742
    %v807 = vunpack.c.h.b16 %v742
    %v808 = vunpack.c.l.b16 %v743
    %v809 = vunpack.c.h.b16 %v743
    %v810 = vunpack.c.l.b16 %v744
    %v811 = vunpack.c.h.b16 %v744
    %v812 = vunpack.c.l.b16 %v745
    %v813 = vunpack.c.h.b16 %v745
    %v814 = vunpack.c.l.b16 %v746
    %v815 = vunpack.c.h.b16 %v746
    %v816 = vunpack.c.l.b16 %v747
    %v817 = vunpack.c.h.b16 %v747
    %v818 = vunpack.c.l.b16 %v748
    %v819 = vunpack.c.h.b16 %v748
    %v820 = vunpack.c.l.b16 %v749
    %v821 = vunpack.c.h.b16 %v749
    %v822 = vunpack.c.l.b16 %v750
    %v823 = vunpack.c.h.b16 %v750
    %v824 = vunpack.c.l.b16 %v751
    %v825 = vunpack.c.h.b16 %v751
    %v826 = vunpack.c.l.b16 %v752
    %v827 = vunpack.c.h.b16 %v752
    %v828 = vunpack.c.l.b16 %v753
    %v829 = vunpack.c.h.b16 %v753
    %v830 = vunpack.c.l.b16 %v754
    %v831 = vunpack.c.h.b16 %v754
    %v832 = vunpack.c.l.b16 %v755
    %v833 = vunpack.c.h.b16 %v755
    %v834 = vunpack.c.l.b16 %v756
    %v835 = vunpack.c.h.b16 %v756
    %v836 = vunpack.c.l.b16 %v757
    %v837 = vunpack.c.h.b16 %v757
    %v838 = vunpack.c.l.b16 %v758
    %v839 = vunpack.c.h.b16 %v758
    %v840 = vunpack.c.l.b16 %v759
    %v841 = vunpack.c.h.b16 %v759
    %v842 = vunpack.c.l.b16 %v760
    %v843 = vunpack.c.h.b16 %v760
    %v844 = vunpack.c.l.b16 %v761
    %v845 = vunpack.c.h.b16 %v761
    %v846 = vpack.c.b16 %v792, %v790
    %v847 = vpack.c.b16 %v793, %v791
    %v848 = vpack.c.b16 %v796, %v794
    %v849 = vpack.c.b16 %v797, %v795
    %v850 = vpack.c.b16 %v800, %v798
    %v851 = vpack.c.b16 %v801, %v799
    %v852 = vpack.c.b16 %v804, %v802
    %v853 = vpack.c.b16 %v805, %v803
    %v854 = vpack.c.b16 %v808, %v806
    %v855 = vpack.c.b16 %v809, %v807
    %v856 = vpack.c.b16 %v812, %v810
    %v857 = vpack.c.b16 %v813, %v811
    %v858 = vpack.c.b16 %v816, %v814
    %v859 = vpack.c.b16 %v817, %v815
    %v860 = vpack.c.b16 %v820, %v818
    %v861 = vpack.c.b16 %v821, %v819
    %v862 = vpack.c.b16 %v824, %v822
    %v863 = vpack.c.b16 %v825, %v823
    %v864 = vpack.c.b16 %v828, %v826
    %v865 = vpack.c.b16 %v829, %v827
    %v866 = vpack.c.b16 %v832, %v830
    %v867 = vpack.c.b16 %v833, %v831
    %v868 = vpack.c.b16 %v836, %v834
    %v869 = vpack.c.b16 %v837, %v835
    %v870 = vpack.c.b16 %v840, %v838
    %v871 = vpack.c.b16 %v841, %v839
    %v872 = vpack.c.b16 %v844, %v842
    %v873 = vpack.c.b16 %v845, %v843
    %902 = vmatprep.subr.bf16.mxu0 %v861
    %903 = vmatpush1.bf16.msra.mxu0 %v860
    %904 = vmatprep.subr.bf16.mxu0 %v859
    %905 = vmatpush1.bf16.msra.mxu0 %v858
    %906 = vmatprep.subr.bf16.mxu0 %v857
    %907 = vmatpush1.bf16.msra.mxu0 %v856
    %908 = vmatprep.subr.bf16.mxu0 %v855
    %909 = vmatpush1.bf16.msra.mxu0 %v854
    %910 = vmatprep.subr.bf16.mxu0 %v853
    %911 = vmatpush1.bf16.msra.mxu0 %v852
    %912 = vmatprep.subr.bf16.mxu0 %v851
    %913 = vmatpush1.bf16.msra.mxu0 %v850
    %914 = vmatprep.subr.bf16.mxu0 %v849
    %915 = vmatpush1.bf16.msra.mxu0 %v848
    %916 = vmatprep.subr.bf16.mxu0 %v847
    %917 = vmatpush1.bf16.msra.mxu0 %v846
    %918 = vmatprep.subr.bf16.mxu0 0
    %919 = vmatpush2.bf16.msra.mxu0 0
    %920 = vmatprep.subr.bf16.mxu0 0
    %921 = vmatpush2.bf16.msra.mxu0 0
    %922 = vmatprep.subr.bf16.mxu0 %v873
    %923 = vmatpush2.bf16.msra.mxu0 %v872
    %924 = vmatprep.subr.bf16.mxu0 %v871
    %925 = vmatpush2.bf16.msra.mxu0 %v870
    %926 = vmatprep.subr.bf16.mxu0 %v869
    %927 = vmatpush2.bf16.msra.mxu0 %v868
    %928 = vmatprep.subr.bf16.mxu0 %v867
    %929 = vmatpush2.bf16.msra.mxu0 %v866
    %930 = vmatprep.subr.bf16.mxu0 %v865
    %931 = vmatpush2.bf16.msra.mxu0 %v864
    %932 = vmatprep.subr.bf16.mxu0 %v863
    %933 = vmatpush2.bf16.msra.mxu0 %v862
    %934 = vmatprep.mubr.bf16.mxu0 %v264
    %935 = vmatmul.mubr.bf16.gmra.mxu0 %v80
    %v936 = vpop.f32.mrf.mxu0
    %v937 = vadd.f32 %v115, %v936
    %v938 = vpop.f32.mrf.mxu0
    %v939 = vadd.f32 %v119, %v938
    %v940 = vpop.f32.mrf.mxu0
    %v941 = vadd.f32 %v115, %v940
    %v942 = vpop.f32.mrf.mxu0
    %v943 = vadd.f32 %v119, %v942
    %944 = vdwg.mxu0
    %v945 = vadd.f32 %v301, %v513
    %v946 = vadd.f32 %v303, %v515
    %v947 = vadd.f32 %v305, %v517
    %v948 = vadd.f32 %v307, %v519
    %v949 = vadd.f32 %v945, %v725
    %v950 = vadd.f32 %v946, %v727
    %v951 = vadd.f32 %v947, %v729
    %v952 = vadd.f32 %v948, %v731
    %v953 = vadd.f32 %v949, %v937
    %v954 = vadd.f32 %v950, %v939
    %v955 = vadd.f32 %v951, %v941
    %v956 = vadd.f32 %v952, %v943
    %v957 = vmul.f32 %v301, %v301
    %v958 = vmul.f32 %v303, %v303
    %v959 = vmul.f32 %v305, %v305
    %v960 = vmul.f32 %v307, %v307
    %v961 = vmul.f32 %v513, %v513
    %v962 = vmul.f32 %v515, %v515
    %v963 = vmul.f32 %v517, %v517
    %v964 = vmul.f32 %v519, %v519
    %v965 = vadd.f32 %v957, %v961
    %v966 = vadd.f32 %v958, %v962
    %v967 = vadd.f32 %v959, %v963
    %v968 = vadd.f32 %v960, %v964
    %v969 = vmul.f32 %v725, %v725
    %v970 = vmul.f32 %v727, %v727
    %v971 = vmul.f32 %v729, %v729
    %v972 = vmul.f32 %v731, %v731
    %v973 = vadd.f32 %v965, %v969
    %v974 = vadd.f32 %v966, %v970
    %v975 = vadd.f32 %v967, %v971
    %v976 = vadd.f32 %v968, %v972
    %v977 = vmul.f32 %v937, %v937
    %v978 = vmul.f32 %v939, %v939
    %v979 = vmul.f32 %v941, %v941
    %v980 = vmul.f32 %v943, %v943
    %v981 = vadd.f32 %v973, %v977
    %v982 = vadd.f32 %v974, %v978
    %v983 = vadd.f32 %v975, %v979
    %v984 = vadd.f32 %v976, %v980
    %vm985 = vcmask 1043456
    %v986 = vsel %vm985, %v955, 0.0
    %v987 = vadd.f32 %v953, %v986
    %v988 = vrot.slane %v987, 4
    %v989 = vadd.f32 %v987, %v988
    %v990 = vrot.slane %v989, 2
    %v991 = vadd.f32 %v989, %v990
    %v992 = vrot.slane %v991, 1
    %v993 = vadd.f32 %v991, %v992
    %vm994 = vcmask 130048
    %v995 = vsel %vm994, %v954, 0.0
    %vm996 = vcmask 125952
    %v997 = vsel %vm996, %v956, 0.0
    %v998 = vadd.f32 %v995, %v997
    %v999 = vrot.slane %v998, 4
    %v1000 = vadd.f32 %v998, %v999
    %v1001 = vrot.slane %v1000, 2
    %v1002 = vadd.f32 %v1000, %v1001
    %v1003 = vrot.slane %v1002, 1
    %v1004 = vadd.f32 %v1002, %v1003
    %v1005 = vld [vmem:[%s9] sm:$0xff]
    %v1006 = vld [vmem:[%s9 + $0x8] sm:$0xff]
    %v1007 = vld [vmem:[%s9 + $0x10] sm:$0xff]
    %v1008 = vld [vmem:[%s9 + $0x18] sm:$0xff]
    %v1009 = vld [vmem:[%s9 + $0x20] sm:$0xff]
    %v1010 = vld [vmem:[%s9 + $0x28] sm:$0xff]
    %v1011 = vld [vmem:[%s9 + $0x30] sm:$0xff]
    %v1012 = vld [vmem:[%s9 + $0x38] sm:$0xff]
    %v1013 = vld [vmem:[%s9 + $0x40] sm:$0xff]
    %v1014 = vld [vmem:[%s9 + $0x48] sm:$0xff]
    %v1015 = vld [vmem:[%s9 + $0x50] sm:$0xff]
    %v1016 = vld [vmem:[%s9 + $0x58] sm:$0xff]
    %v1017 = vld [vmem:[%s9 + $0x60] sm:$0xff]
    %v1018 = vld [vmem:[%s9 + $0x68] sm:$0xff]
    %v1019 = vld [vmem:[%s9 + $0x70] sm:$0xff]
    %v1020 = vld [vmem:[%s9 + $0x78] sm:$0xff]
    %v1021 = vld [vmem:[%s9 + $0x80] sm:$0xff]
    %v1022 = vld [vmem:[%s9 + $0x88] sm:$0xff]
    %v1024 = vsel %vm994, %v1004, 0
    %1026 = vmatprep.subr.mxu0 0.0
    %1027 = vmatpush1.msra.mxu0 %v1020
    %1028 = vmatprep.subr.mxu0 0.0
    %1029 = vmatpush1.msra.mxu0 %v1019
    %1030 = vmatprep.subr.mxu0 0.0
    %1031 = vmatpush1.msra.mxu0 %v1018
    %1032 = vmatprep.subr.mxu0 0.0
    %1033 = vmatpush1.msra.mxu0 %v1017
    %1034 = vmatprep.subr.mxu0 0.0
    %1035 = vmatpush1.msra.mxu0 %v1016
    %1036 = vmatprep.subr.mxu0 0.0
    %1037 = vmatpush1.msra.mxu0 %v1015
    %1038 = vmatprep.subr.mxu0 0.0
    %1039 = vmatpush1.msra.mxu0 %v1014
    %1040 = vmatprep.subr.mxu0 0.0
    %1041 = vmatpush1.msra.mxu0 %v1013
    %1042 = vmatprep.subr.mxu0 0.0
    %1043 = vmatpush1.msra.mxu0 %v1012
    %1044 = vmatprep.subr.mxu0 0.0
    %1045 = vmatpush1.msra.mxu0 %v1011
    %1046 = vmatprep.subr.mxu0 0.0
    %1047 = vmatpush1.msra.mxu0 %v1010
    %1048 = vmatprep.subr.mxu0 0.0
    %1049 = vmatpush1.msra.mxu0 %v1009
    %1050 = vmatprep.subr.mxu0 0.0
    %1051 = vmatpush1.msra.mxu0 %v1008
    %1052 = vmatprep.subr.mxu0 0.0
    %1053 = vmatpush1.msra.mxu0 %v1007
    %1054 = vmatprep.subr.mxu0 0.0
    %1055 = vmatpush1.msra.mxu0 %v1006
    %1056 = vmatprep.subr.mxu0 0.0
    %1057 = vmatpush1.msra.mxu0 %v1005
    %1058 = vmatprep.subr.mxu0 0.0
    %1059 = vmatpush2.msra.mxu0 0.0
    %1060 = vmatprep.subr.mxu0 0.0
    %1061 = vmatpush2.msra.mxu0 0.0
    %1062 = vmatprep.subr.mxu0 0.0
    %1063 = vmatpush2.msra.mxu0 0.0
    %1064 = vmatprep.subr.mxu0 0.0
    %1065 = vmatpush2.msra.mxu0 0.0
    %1066 = vmatprep.subr.mxu0 0.0
    %1067 = vmatpush2.msra.mxu0 0.0
    %1068 = vmatprep.subr.mxu0 0.0
    %1069 = vmatpush2.msra.mxu0 0.0
    %1070 = vmatprep.subr.mxu0 0.0
    %1071 = vmatpush2.msra.mxu0 0.0
    %1072 = vmatprep.subr.mxu0 0.0
    %1073 = vmatpush2.msra.mxu0 0.0
    %1074 = vmatprep.subr.mxu0 0.0
    %1075 = vmatpush2.msra.mxu0 0.0
    %1076 = vmatprep.subr.mxu0 0.0
    %1077 = vmatpush2.msra.mxu0 0.0
    %1078 = vmatprep.subr.mxu0 0.0
    %1079 = vmatpush2.msra.mxu0 0.0
    %1080 = vmatprep.subr.mxu0 0.0
    %1081 = vmatpush2.msra.mxu0 0.0
    %1082 = vmatprep.subr.mxu0 0.0
    %1083 = vmatpush2.msra.mxu0 0.0
    %1084 = vmatprep.subr.mxu0 0.0
    %1085 = vmatpush2.msra.mxu0 0.0
    %1086 = vmatprep.subr.mxu0 0.0
    %1087 = vmatpush2.msra.mxu0 %v1022
    %1088 = vmatprep.subr.mxu0 0.0
    %1089 = vmatpush2.msra.mxu0 %v1021
    %1090 = vmatprep.mubr.f32.mxu0 %v1024
    %1091 = vmatmul.mubr.f32.gmra.mxu0 %v993
    %v1092 = vpop.f32.mrf.mxu0
    %v1093 = vadd.f32 0.0, %v1092
    %v1094 = vpop.f32.mrf.mxu0
    %1095 = vdwg.mxu0
    %v1096 = vsel %vm985, %v983, 0.0
    %v1097 = vadd.f32 %v981, %v1096
    %v1098 = vrot.slane %v1097, 4
    %v1099 = vadd.f32 %v1097, %v1098
    %v1100 = vrot.slane %v1099, 2
    %v1101 = vadd.f32 %v1099, %v1100
    %v1102 = vrot.slane %v1101, 1
    %v1103 = vadd.f32 %v1101, %v1102
    %v1104 = vsel %vm994, %v982, 0.0
    %v1105 = vsel %vm996, %v984, 0.0
    %v1106 = vadd.f32 %v1104, %v1105
    %v1107 = vrot.slane %v1106, 4
    %v1108 = vadd.f32 %v1106, %v1107
    %v1109 = vrot.slane %v1108, 2
    %v1110 = vadd.f32 %v1108, %v1109
    %v1111 = vrot.slane %v1110, 1
    %v1112 = vadd.f32 %v1110, %v1111
    %v1114 = vsel %vm994, %v1112, 0
    %1116 = vmatprep.subr.mxu0 0.0
    %1117 = vmatpush1.msra.mxu0 %v1020
    %1118 = vmatprep.subr.mxu0 0.0
    %1119 = vmatpush1.msra.mxu0 %v1019
    %1120 = vmatprep.subr.mxu0 0.0
    %1121 = vmatpush1.msra.mxu0 %v1018
    %1122 = vmatprep.subr.mxu0 0.0
    %1123 = vmatpush1.msra.mxu0 %v1017
    %1124 = vmatprep.subr.mxu0 0.0
    %1125 = vmatpush1.msra.mxu0 %v1016
    %1126 = vmatprep.subr.mxu0 0.0
    %1127 = vmatpush1.msra.mxu0 %v1015
    %1128 = vmatprep.subr.mxu0 0.0
    %1129 = vmatpush1.msra.mxu0 %v1014
    %1130 = vmatprep.subr.mxu0 0.0
    %1131 = vmatpush1.msra.mxu0 %v1013
    %1132 = vmatprep.subr.mxu0 0.0
    %1133 = vmatpush1.msra.mxu0 %v1012
    %1134 = vmatprep.subr.mxu0 0.0
    %1135 = vmatpush1.msra.mxu0 %v1011
    %1136 = vmatprep.subr.mxu0 0.0
    %1137 = vmatpush1.msra.mxu0 %v1010
    %1138 = vmatprep.subr.mxu0 0.0
    %1139 = vmatpush1.msra.mxu0 %v1009
    %1140 = vmatprep.subr.mxu0 0.0
    %1141 = vmatpush1.msra.mxu0 %v1008
    %1142 = vmatprep.subr.mxu0 0.0
    %1143 = vmatpush1.msra.mxu0 %v1007
    %1144 = vmatprep.subr.mxu0 0.0
    %1145 = vmatpush1.msra.mxu0 %v1006
    %1146 = vmatprep.subr.mxu0 0.0
    %1147 = vmatpush1.msra.mxu0 %v1005
    %1148 = vmatprep.subr.mxu0 0.0
    %1149 = vmatpush2.msra.mxu0 0.0
    %1150 = vmatprep.subr.mxu0 0.0
    %1151 = vmatpush2.msra.mxu0 0.0
    %1152 = vmatprep.subr.mxu0 0.0
    %1153 = vmatpush2.msra.mxu0 0.0
    %1154 = vmatprep.subr.mxu0 0.0
    %1155 = vmatpush2.msra.mxu0 0.0
    %1156 = vmatprep.subr.mxu0 0.0
    %1157 = vmatpush2.msra.mxu0 0.0
    %1158 = vmatprep.subr.mxu0 0.0
    %1159 = vmatpush2.msra.mxu0 0.0
    %1160 = vmatprep.subr.mxu0 0.0
    %1161 = vmatpush2.msra.mxu0 0.0
    %1162 = vmatprep.subr.mxu0 0.0
    %1163 = vmatpush2.msra.mxu0 0.0
    %1164 = vmatprep.subr.mxu0 0.0
    %1165 = vmatpush2.msra.mxu0 0.0
    %1166 = vmatprep.subr.mxu0 0.0
    %1167 = vmatpush2.msra.mxu0 0.0
    %1168 = vmatprep.subr.mxu0 0.0
    %1169 = vmatpush2.msra.mxu0 0.0
    %1170 = vmatprep.subr.mxu0 0.0
    %1171 = vmatpush2.msra.mxu0 0.0
    %1172 = vmatprep.subr.mxu0 0.0
    %1173 = vmatpush2.msra.mxu0 0.0
    %1174 = vmatprep.subr.mxu0 0.0
    %1175 = vmatpush2.msra.mxu0 0.0
    %1176 = vmatprep.subr.mxu0 0.0
    %1177 = vmatpush2.msra.mxu0 %v1022
    %1178 = vmatprep.subr.mxu0 0.0
    %1179 = vmatpush2.msra.mxu0 %v1021
    %1180 = vmatprep.mubr.f32.mxu0 %v1114
    %1181 = vmatmul.mubr.f32.gmra.mxu0 %v1103
    %v1182 = vpop.f32.mrf.mxu0
    %v1183 = vadd.f32 0.0, %v1182
    %v1184 = vpop.f32.mrf.mxu0
    %1185 = vdwg.mxu0
    %v1186 = vrcp.pop 1152.0
    %v1187 = vmul.f32 %v1093, %v1186
    %v1188 = vmul.f32 %v1183, %v1186
    %v1189 = vmul.f32 %v1187, %v1187
    %v1190 = vsub.f32 %v1188, %v1189
    %v1191 = vld [vmem:[%s3] sm:$0x1]
    %v1192 = vadd.f32 %v1190, 1e-05
    %v1193 = vrsqrt.pop %v1192
    %v1194 = vmul.f32 %v1191, %v1193
    %v1195 = vld [vmem:[%s4] sm:$0x1]
    %v1196 = vmul.f32 %v1187, %v1194
    %v1197 = vsub.f32 %v1195, %v1196
    %v1198 = vld [vmem:[%s10] sm:$0x3f]
    %v1199 = vld [vmem:[%s10 + $0x8] sm:$0x3f]
    %vm1200 = vcmask 48128
    %v1202 = vsel %vm1200, %v1194, 0
    %vm1204 = vcmask 1045504
    %v1206 = vsel %vm1204, %v1198, 0
    %v1209 = vsel %vm1204, %v1199, 0
    %1211 = vmatprep.subr.mxu0 0.0
    %1212 = vmatpush1.msra.mxu0 0.0
    %1213 = vmatprep.subr.mxu0 0.0
    %1214 = vmatpush1.msra.mxu0 0.0
    %1215 = vmatprep.subr.mxu0 0.0
    %1216 = vmatpush1.msra.mxu0 0.0
    %1217 = vmatprep.subr.mxu0 0.0
    %1218 = vmatpush1.msra.mxu0 0.0
    %1219 = vmatprep.subr.mxu0 0.0
    %1220 = vmatpush1.msra.mxu0 0.0
    %1221 = vmatprep.subr.mxu0 0.0
    %1222 = vmatpush1.msra.mxu0 0.0
    %1223 = vmatprep.subr.mxu0 0.0
    %1224 = vmatpush1.msra.mxu0 0.0
    %1225 = vmatprep.subr.mxu0 0.0
    %1226 = vmatpush1.msra.mxu0 0.0
    %1227 = vmatprep.subr.mxu0 0.0
    %1228 = vmatpush1.msra.mxu0 0.0
    %1229 = vmatprep.subr.mxu0 0.0
    %1230 = vmatpush1.msra.mxu0 0.0
    %1231 = vmatprep.subr.mxu0 0.0
    %1232 = vmatpush1.msra.mxu0 0.0
    %1233 = vmatprep.subr.mxu0 0.0
    %1234 = vmatpush1.msra.mxu0 0.0
    %1235 = vmatprep.subr.mxu0 0.0
    %1236 = vmatpush1.msra.mxu0 0.0
    %1237 = vmatprep.subr.mxu0 0.0
    %1238 = vmatpush1.msra.mxu0 0.0
    %1239 = vmatprep.subr.mxu0 0.0
    %1240 = vmatpush1.msra.mxu0 0.0
    %1241 = vmatprep.subr.mxu0 %v1209
    %1242 = vmatpush1.msra.mxu0 %v1206
    %1243 = vmatprep.subr.mxu0 0.0
    %1244 = vmatpush2.msra.mxu0 0.0
    %1245 = vmatprep.subr.mxu0 0.0
    %1246 = vmatpush2.msra.mxu0 0.0
    %1247 = vmatprep.subr.mxu0 0.0
    %1248 = vmatpush2.msra.mxu0 0.0
    %1249 = vmatprep.subr.mxu0 0.0
    %1250 = vmatpush2.msra.mxu0 0.0
    %1251 = vmatprep.subr.mxu0 0.0
    %1252 = vmatpush2.msra.mxu0 0.0
    %1253 = vmatprep.subr.mxu0 0.0
    %1254 = vmatpush2.msra.mxu0 0.0
    %1255 = vmatprep.subr.mxu0 0.0
    %1256 = vmatpush2.msra.mxu0 0.0
    %1257 = vmatprep.subr.mxu0 0.0
    %1258 = vmatpush2.msra.mxu0 0.0
    %1259 = vmatprep.subr.mxu0 0.0
    %1260 = vmatpush2.msra.mxu0 0.0
    %1261 = vmatprep.subr.mxu0 0.0
    %1262 = vmatpush2.msra.mxu0 0.0
    %1263 = vmatprep.subr.mxu0 0.0
    %1264 = vmatpush2.msra.mxu0 0.0
    %1265 = vmatprep.subr.mxu0 0.0
    %1266 = vmatpush2.msra.mxu0 0.0
    %1267 = vmatprep.subr.mxu0 0.0
    %1268 = vmatpush2.msra.mxu0 0.0
    %1269 = vmatprep.subr.mxu0 0.0
    %1270 = vmatpush2.msra.mxu0 0.0
    %1271 = vmatprep.subr.mxu0 0.0
    %1272 = vmatpush2.msra.mxu0 0.0
    %1273 = vmatprep.subr.mxu0 0.0
    %1274 = vmatpush2.msra.mxu0 0.0
    %1275 = vmatprep.mubr.f32.mxu0 0.0
    %1276 = vmatmul.mubr.f32.gmra.mxu0 %v1202
    %v1277 = vpop.f32.mrf.mxu0
    %v1278 = vadd.f32 0.0, %v1277
    %v1279 = vpop.f32.mrf.mxu0
    %v1280 = vadd.f32 0.0, %v1279
    %1281 = vdwg.mxu0
    %v1283 = vsel %vm1200, %v1197, 0
    %1285 = vmatprep.subr.mxu0 0.0
    %1286 = vmatpush1.msra.mxu0 0.0
    %1287 = vmatprep.subr.mxu0 0.0
    %1288 = vmatpush1.msra.mxu0 0.0
    %1289 = vmatprep.subr.mxu0 0.0
    %1290 = vmatpush1.msra.mxu0 0.0
    %1291 = vmatprep.subr.mxu0 0.0
    %1292 = vmatpush1.msra.mxu0 0.0
    %1293 = vmatprep.subr.mxu0 0.0
    %1294 = vmatpush1.msra.mxu0 0.0
    %1295 = vmatprep.subr.mxu0 0.0
    %1296 = vmatpush1.msra.mxu0 0.0
    %1297 = vmatprep.subr.mxu0 0.0
    %1298 = vmatpush1.msra.mxu0 0.0
    %1299 = vmatprep.subr.mxu0 0.0
    %1300 = vmatpush1.msra.mxu0 0.0
    %1301 = vmatprep.subr.mxu0 0.0
    %1302 = vmatpush1.msra.mxu0 0.0
    %1303 = vmatprep.subr.mxu0 0.0
    %1304 = vmatpush1.msra.mxu0 0.0
    %1305 = vmatprep.subr.mxu0 0.0
    %1306 = vmatpush1.msra.mxu0 0.0
    %1307 = vmatprep.subr.mxu0 0.0
    %1308 = vmatpush1.msra.mxu0 0.0
    %1309 = vmatprep.subr.mxu0 0.0
    %1310 = vmatpush1.msra.mxu0 0.0
    %1311 = vmatprep.subr.mxu0 0.0
    %1312 = vmatpush1.msra.mxu0 0.0
    %1313 = vmatprep.subr.mxu0 0.0
    %1314 = vmatpush1.msra.mxu0 0.0
    %1315 = vmatprep.subr.mxu0 %v1209
    %1316 = vmatpush1.msra.mxu0 %v1206
    %1317 = vmatprep.subr.mxu0 0.0
    %1318 = vmatpush2.msra.mxu0 0.0
    %1319 = vmatprep.subr.mxu0 0.0
    %1320 = vmatpush2.msra.mxu0 0.0
    %1321 = vmatprep.subr.mxu0 0.0
    %1322 = vmatpush2.msra.mxu0 0.0
    %1323 = vmatprep.subr.mxu0 0.0
    %1324 = vmatpush2.msra.mxu0 0.0
    %1325 = vmatprep.subr.mxu0 0.0
    %1326 = vmatpush2.msra.mxu0 0.0
    %1327 = vmatprep.subr.mxu0 0.0
    %1328 = vmatpush2.msra.mxu0 0.0
    %1329 = vmatprep.subr.mxu0 0.0
    %1330 = vmatpush2.msra.mxu0 0.0
    %1331 = vmatprep.subr.mxu0 0.0
    %1332 = vmatpush2.msra.mxu0 0.0
    %1333 = vmatprep.subr.mxu0 0.0
    %1334 = vmatpush2.msra.mxu0 0.0
    %1335 = vmatprep.subr.mxu0 0.0
    %1336 = vmatpush2.msra.mxu0 0.0
    %1337 = vmatprep.subr.mxu0 0.0
    %1338 = vmatpush2.msra.mxu0 0.0
    %1339 = vmatprep.subr.mxu0 0.0
    %1340 = vmatpush2.msra.mxu0 0.0
    %1341 = vmatprep.subr.mxu0 0.0
    %1342 = vmatpush2.msra.mxu0 0.0
    %1343 = vmatprep.subr.mxu0 0.0
    %1344 = vmatpush2.msra.mxu0 0.0
    %1345 = vmatprep.subr.mxu0 0.0
    %1346 = vmatpush2.msra.mxu0 0.0
    %1347 = vmatprep.subr.mxu0 0.0
    %1348 = vmatpush2.msra.mxu0 0.0
    %1349 = vmatprep.mubr.f32.mxu0 0.0
    %1350 = vmatmul.mubr.f32.gmra.mxu0 %v1283
    %v1351 = vpop.f32.mrf.mxu0
    %v1352 = vadd.f32 0.0, %v1351
    %v1353 = vpop.f32.mrf.mxu0
    %v1354 = vadd.f32 0.0, %v1353
    %1355 = vdwg.mxu0
    %v1356 = vlaneseq
    %v1357 = vshrl.u32 %v1356, 7
    %v1358 = vsub.s32 0, %v1357
    %v1359 = vrot.slane %v1278, %v1358
    %v1360 = vlaneseq
    %v1361 = vshrl.u32 %v1360, 7
    %v1362 = vsub.s32 0, %v1361
    %v1363 = vrot.slane %v1280, %v1362
    %v1364 = vmul.f32 %v301, %v1359
    %v1365 = vmul.f32 %v303, %v1363
    %v1366 = vmul.f32 %v305, %v1359
    %v1367 = vmul.f32 %v307, %v1363
    %v1368 = vlaneseq
    %v1369 = vshrl.u32 %v1368, 7
    %v1370 = vsub.s32 0, %v1369
    %v1371 = vrot.slane %v1352, %v1370
    %v1372 = vlaneseq
    %v1373 = vshrl.u32 %v1372, 7
    %v1374 = vsub.s32 0, %v1373
    %v1375 = vrot.slane %v1354, %v1374
    %v1376 = vadd.f32 %v1364, %v1371
    %v1377 = vadd.f32 %v1365, %v1375
    %v1378 = vadd.f32 %v1366, %v1371
    %v1379 = vadd.f32 %v1367, %v1375
    %v1380 = vmax.f32 %v1376, 0.0
    %v1381 = vmax.f32 %v1377, 0.0
    %v1382 = vmax.f32 %v1378, 0.0
    %v1383 = vmax.f32 %v1379, 0.0
    %v1384 = vmul.f32 %v513, %v1359
    %v1385 = vmul.f32 %v515, %v1363
    %v1386 = vmul.f32 %v517, %v1359
    %v1387 = vmul.f32 %v519, %v1363
    %v1388 = vadd.f32 %v1384, %v1371
    %v1389 = vadd.f32 %v1385, %v1375
    %v1390 = vadd.f32 %v1386, %v1371
    %v1391 = vadd.f32 %v1387, %v1375
    %v1392 = vmax.f32 %v1388, 0.0
    %v1393 = vmax.f32 %v1389, 0.0
    %v1394 = vmax.f32 %v1390, 0.0
    %v1395 = vmax.f32 %v1391, 0.0
    %v1396 = vmax.f32 %v1380, %v1392
    %v1397 = vmax.f32 %v1381, %v1393
    %v1398 = vmax.f32 %v1382, %v1394
    %v1399 = vmax.f32 %v1383, %v1395
    %1404 = vrot.lane.b32.xlu0 %v1396, 56
    %v1405 = vpop.permute.xlu0 %1404
    %1406 = vrot.lane.b32.xlu0 %v1397, 56
    %v1407 = vpop.permute.xlu0 %1406
    %1408 = vrot.lane.b32.xlu0 %v1398, 56
    %v1409 = vpop.permute.xlu0 %1408
    %1410 = vrot.lane.b32.xlu0 %v1399, 56
    %v1411 = vpop.permute.xlu0 %1410
    %vm1412 = vcmask 457728
    %v1413 = vsel %vm1412, %v1405, %v1407
    %v1414 = vsel %vm1412, %v1409, %v1411
    %v1417 = vmax.f32 %v1396, %v1413
    %v1418 = vmax.f32 %v1398, %v1414
    %v1419 = vmul.f32 %v725, %v1359
    %v1420 = vmul.f32 %v727, %v1363
    %v1421 = vmul.f32 %v729, %v1359
    %v1422 = vmul.f32 %v731, %v1363
    %v1423 = vadd.f32 %v1419, %v1371
    %v1424 = vadd.f32 %v1420, %v1375
    %v1425 = vadd.f32 %v1421, %v1371
    %v1426 = vadd.f32 %v1422, %v1375
    %v1427 = vmax.f32 %v1423, 0.0
    %v1428 = vmax.f32 %v1424, 0.0
    %v1429 = vmax.f32 %v1425, 0.0
    %v1430 = vmax.f32 %v1426, 0.0
    %v1431 = vmul.f32 %v937, %v1359
    %v1432 = vmul.f32 %v939, %v1363
    %v1433 = vmul.f32 %v941, %v1359
    %v1434 = vmul.f32 %v943, %v1363
    %v1435 = vadd.f32 %v1431, %v1371
    %v1436 = vadd.f32 %v1432, %v1375
    %v1437 = vadd.f32 %v1433, %v1371
    %v1438 = vadd.f32 %v1434, %v1375
    %v1439 = vmax.f32 %v1435, 0.0
    %v1440 = vmax.f32 %v1436, 0.0
    %v1441 = vmax.f32 %v1437, 0.0
    %v1442 = vmax.f32 %v1438, 0.0
    %v1443 = vmax.f32 %v1427, %v1439
    %v1444 = vmax.f32 %v1428, %v1440
    %v1445 = vmax.f32 %v1429, %v1441
    %v1446 = vmax.f32 %v1430, %v1442
    %1451 = vrot.lane.b32.xlu0 %v1443, 56
    %v1452 = vpop.permute.xlu0 %1451
    %1453 = vrot.lane.b32.xlu0 %v1444, 56
    %v1454 = vpop.permute.xlu0 %1453
    %1455 = vrot.lane.b32.xlu0 %v1445, 56
    %v1456 = vpop.permute.xlu0 %1455
    %1457 = vrot.lane.b32.xlu0 %v1446, 56
    %v1458 = vpop.permute.xlu0 %1457
    %v1459 = vsel %vm1412, %v1452, %v1454
    %v1460 = vsel %vm1412, %v1456, %v1458
    %v1463 = vmax.f32 %v1443, %v1459
    %v1464 = vmax.f32 %v1445, %v1460
    %vm1465 = vcmask 588800
    %1466 = vst.msk [vmem:[#allocation2] sm:$0xff] %vm1465, %v1417
    %1468 = vrot.lane.b32.xlu0 %v1463, 72
    %v1469 = vpop.permute.xlu0 %1468
    %vm1471 = vcmask 1048128
    %1472 = vst.msk [vmem:[#allocation2] sm:$0xff] %vm1471, %v1469
    %1473 = vst.msk [vmem:[#allocation2 + $0x8] sm:$0xff] %vm994, %v1469
    %v1476 = vrot.slane %v1417, 2
    %v1477 = vrot.slane %v1418, 2
    %v1478 = vsel %vm1204, %v1476, %v1477
    %1479 = vrot.lane.b32.xlu0 %v1478, 16
    %v1480 = vpop.permute.xlu0 %1479
    %vm1482 = vcmask 720000
    %1483 = vst.msk [vmem:[#allocation2 + $0x8] sm:$0xff] %vm1482, %v1480
    %v1485 = vrot.slane %v1463, 2
    %v1486 = vrot.slane %v1464, 2
    %v1487 = vsel %vm1204, %v1485, %v1486
    %1488 = vrot.lane.b32.xlu0 %v1487, 88
    %v1489 = vpop.permute.xlu0 %1488
    %vm1491 = vcmask 1048256
    %1492 = vst.msk [vmem:[#allocation2 + $0x8] sm:$0xff] %vm1491, %v1489
    %vm1493 = vcmask 261120
    %1494 = vst.msk [vmem:[#allocation2 + $0x10] sm:$0xff] %vm1493, %v1489
    %v1495 = vrot.slane %v1417, 4
    %v1496 = vrot.slane %v1418, 4
    %v1497 = vsel %vm985, %v1495, %v1496
    %1498 = vrot.lane.b32.xlu0 %v1497, 32
    %v1499 = vpop.permute.xlu0 %1498
    %vm1501 = vcmask 851200
    %1502 = vst.msk [vmem:[#allocation2 + $0x10] sm:$0xff] %vm1501, %v1499
    %v1503 = vrot.slane %v1463, 4
    %v1504 = vrot.slane %v1464, 4
    %v1505 = vsel %vm985, %v1503, %v1504
    %1506 = vrot.lane.b32.xlu0 %v1505, 104
    %v1507 = vpop.permute.xlu0 %1506
    %vm1509 = vcmask 1048384
    %1510 = vst.msk [vmem:[#allocation2 + $0x10] sm:$0xff] %vm1509, %v1507
    %vm1511 = vcmask 392192
    %1512 = vst.msk [vmem:[#allocation2 + $0x18] sm:$0xff] %vm1511, %v1507
    %v1513 = vld [vmem:[#allocation2] sm:$0xff]
    %v1514 = vld [vmem:[#allocation2 + $0x8] sm:$0xff]
    %v1515 = vld [vmem:[#allocation2 + $0x10] sm:$0xff]
    %v1516 = vld [vmem:[#allocation2 + $0x18] sm:$0xff]
    %v1517 = vpack.c.bf16 %v1513, %v1513
    %v1518 = vpack.c.bf16 %v1514, %v1514
    %v1519 = vpack.c.bf16 %v1515, %v1515
    %v1520 = vpack.c.bf16 %v1516, %v1516
    %v1521 = vld [vmem:[%s5] sm:$0xff]
    %v1522 = vld [vmem:[%s5 + $0x8] sm:$0xff]
    %v1523 = vld [vmem:[%s5 + $0x10] sm:$0xff]
    %v1524 = vld [vmem:[%s5 + $0x18] sm:$0xff]
    %v1525 = vld [vmem:[%s5 + $0x20] sm:$0xff]
    %v1526 = vld [vmem:[%s5 + $0x28] sm:$0xff]
    %v1527 = vld [vmem:[%s5 + $0x30] sm:$0xff]
    %v1528 = vld [vmem:[%s5 + $0x38] sm:$0xff]
    %v1529 = vld [vmem:[%s5 + $0x40] sm:$0xff]
    %v1530 = vld [vmem:[%s5 + $0x48] sm:$0xff]
    %v1531 = vld [vmem:[%s5 + $0x50] sm:$0xff]
    %v1532 = vld [vmem:[%s5 + $0x58] sm:$0xff]
    %v1533 = vld [vmem:[%s5 + $0x60] sm:$0xff]
    %v1534 = vld [vmem:[%s5 + $0x68] sm:$0xff]
    %v1535 = vld [vmem:[%s5 + $0x70] sm:$0xff]
    %v1536 = vld [vmem:[%s5 + $0x78] sm:$0xff]
    %v1537 = vld [vmem:[%s5 + $0x80] sm:$0xff]
    %v1538 = vld [vmem:[%s5 + $0x88] sm:$0xff]
    %v1539 = vld [vmem:[%s5 + $0x90] sm:$0xff]
    %v1540 = vld [vmem:[%s5 + $0x98] sm:$0xff]
    %v1541 = vld [vmem:[%s5 + $0xa0] sm:$0xff]
    %v1542 = vld [vmem:[%s5 + $0xa8] sm:$0xff]
    %v1543 = vld [vmem:[%s5 + $0xb0] sm:$0xff]
    %v1544 = vld [vmem:[%s5 + $0xb8] sm:$0xff]
    %v1545 = vld [vmem:[%s5 + $0xc0] sm:$0xff]
    %v1546 = vld [vmem:[%s5 + $0xc8] sm:$0xff]
    %v1547 = vld [vmem:[%s5 + $0xd0] sm:$0xff]
    %v1548 = vld [vmem:[%s5 + $0xd8] sm:$0xff]
    %v1549 = vld [vmem:[%s5 + $0xe0] sm:$0xff]
    %v1550 = vld [vmem:[%s5 + $0xe8] sm:$0xff]
    %v1551 = vld [vmem:[%s5 + $0xf0] sm:$0xff]
    %v1552 = vld [vmem:[%s5 + $0xf8] sm:$0xff]
    %v1553 = vld [vmem:[%s5 + $0x100] sm:$0xff]
    %v1554 = vld [vmem:[%s5 + $0x108] sm:$0xff]
    %v1555 = vld [vmem:[%s5 + $0x110] sm:$0xff]
    %v1556 = vld [vmem:[%s5 + $0x118] sm:$0xff]
    %v1557 = vld [vmem:[%s5 + $0x120] sm:$0xff]
    %v1558 = vld [vmem:[%s5 + $0x128] sm:$0xff]
    %v1559 = vld [vmem:[%s5 + $0x130] sm:$0xff]
    %v1560 = vld [vmem:[%s5 + $0x138] sm:$0xff]
    %v1561 = vld [vmem:[%s5 + $0x140] sm:$0xff]
    %v1562 = vld [vmem:[%s5 + $0x148] sm:$0xff]
    %v1563 = vld [vmem:[%s5 + $0x150] sm:$0xff]
    %v1564 = vld [vmem:[%s5 + $0x158] sm:$0xff]
    %v1565 = vld [vmem:[%s5 + $0x160] sm:$0xff]
    %v1566 = vld [vmem:[%s5 + $0x168] sm:$0xff]
    %v1567 = vld [vmem:[%s5 + $0x170] sm:$0xff]
    %v1568 = vld [vmem:[%s5 + $0x178] sm:$0xff]
    %v1569 = vld [vmem:[%s5 + $0x180] sm:$0xff]
    %v1570 = vld [vmem:[%s5 + $0x188] sm:$0xff]
    %v1571 = vld [vmem:[%s5 + $0x190] sm:$0xff]
    %v1572 = vld [vmem:[%s5 + $0x198] sm:$0xff]
    %v1573 = vld [vmem:[%s5 + $0x1a0] sm:$0xff]
    %v1574 = vld [vmem:[%s5 + $0x1a8] sm:$0xff]
    %v1575 = vld [vmem:[%s6] sm:$0x3]
    %v1577 = vlaneseq
    %v1578 = vshrl.u32 %v1577, 7
    %v1579 = vsub.s32 0, %v1578
    %v1580 = vrot.slane %v1575, %v1579
    %v1581 = vlaneseq
    %v1582 = vshrl.u32 %v1581, 7
    %v1583 = vsub.s32 1, %v1582
    %v1584 = vrot.slane %v1575, %v1583
    %v1641 = vunpack.c.l.b16 %v1521
    %v1642 = vunpack.c.h.b16 %v1521
    %v1643 = vunpack.c.l.b16 %v1522
    %v1644 = vunpack.c.h.b16 %v1522
    %v1645 = vunpack.c.l.b16 %v1523
    %v1646 = vunpack.c.h.b16 %v1523
    %v1647 = vunpack.c.l.b16 %v1524
    %v1648 = vunpack.c.h.b16 %v1524
    %v1649 = vunpack.c.l.b16 %v1525
    %v1650 = vunpack.c.h.b16 %v1525
    %v1651 = vunpack.c.l.b16 %v1526
    %v1652 = vunpack.c.h.b16 %v1526
    %v1653 = vunpack.c.l.b16 %v1527
    %v1654 = vunpack.c.h.b16 %v1527
    %v1655 = vunpack.c.l.b16 %v1528
    %v1656 = vunpack.c.h.b16 %v1528
    %v1657 = vunpack.c.l.b16 %v1529
    %v1658 = vunpack.c.h.b16 %v1529
    %v1659 = vunpack.c.l.b16 %v1530
    %v1660 = vunpack.c.h.b16 %v1530
    %v1661 = vunpack.c.l.b16 %v1531
    %v1662 = vunpack.c.h.b16 %v1531
    %v1663 = vunpack.c.l.b16 %v1532
    %v1664 = vunpack.c.h.b16 %v1532
    %v1665 = vunpack.c.l.b16 %v1533
    %v1666 = vunpack.c.h.b16 %v1533
    %v1667 = vunpack.c.l.b16 %v1534
    %v1668 = vunpack.c.h.b16 %v1534
    %v1669 = vunpack.c.l.b16 %v1535
    %v1670 = vunpack.c.h.b16 %v1535
    %v1671 = vunpack.c.l.b16 %v1536
    %v1672 = vunpack.c.h.b16 %v1536
    %v1673 = vunpack.c.l.b16 %v1537
    %v1674 = vunpack.c.h.b16 %v1537
    %v1675 = vunpack.c.l.b16 %v1538
    %v1676 = vunpack.c.h.b16 %v1538
    %v1677 = vunpack.c.l.b16 %v1539
    %v1678 = vunpack.c.h.b16 %v1539
    %v1679 = vunpack.c.l.b16 %v1540
    %v1680 = vunpack.c.h.b16 %v1540
    %v1681 = vunpack.c.l.b16 %v1541
    %v1682 = vunpack.c.h.b16 %v1541
    %v1683 = vunpack.c.l.b16 %v1542
    %v1684 = vunpack.c.h.b16 %v1542
    %v1685 = vunpack.c.l.b16 %v1543
    %v1686 = vunpack.c.h.b16 %v1543
    %v1687 = vunpack.c.l.b16 %v1544
    %v1688 = vunpack.c.h.b16 %v1544
    %v1689 = vunpack.c.l.b16 %v1545
    %v1690 = vunpack.c.h.b16 %v1545
    %v1691 = vunpack.c.l.b16 %v1546
    %v1692 = vunpack.c.h.b16 %v1546
    %v1693 = vunpack.c.l.b16 %v1547
    %v1694 = vunpack.c.h.b16 %v1547
    %v1695 = vunpack.c.l.b16 %v1548
    %v1696 = vunpack.c.h.b16 %v1548
    %v1697 = vunpack.c.l.b16 %v1549
    %v1698 = vunpack.c.h.b16 %v1549
    %v1699 = vunpack.c.l.b16 %v1550
    %v1700 = vunpack.c.h.b16 %v1550
    %v1701 = vunpack.c.l.b16 %v1551
    %v1702 = vunpack.c.h.b16 %v1551
    %v1703 = vunpack.c.l.b16 %v1552
    %v1704 = vunpack.c.h.b16 %v1552
    %v1705 = vunpack.c.l.b16 %v1553
    %v1706 = vunpack.c.h.b16 %v1553
    %v1707 = vunpack.c.l.b16 %v1554
    %v1708 = vunpack.c.h.b16 %v1554
    %v1709 = vunpack.c.l.b16 %v1555
    %v1710 = vunpack.c.h.b16 %v1555
    %v1711 = vunpack.c.l.b16 %v1556
    %v1712 = vunpack.c.h.b16 %v1556
    %v1713 = vunpack.c.l.b16 %v1557
    %v1714 = vunpack.c.h.b16 %v1557
    %v1715 = vunpack.c.l.b16 %v1558
    %v1716 = vunpack.c.h.b16 %v1558
    %v1717 = vunpack.c.l.b16 %v1559
    %v1718 = vunpack.c.h.b16 %v1559
    %v1719 = vunpack.c.l.b16 %v1560
    %v1720 = vunpack.c.h.b16 %v1560
    %v1721 = vunpack.c.l.b16 %v1561
    %v1722 = vunpack.c.h.b16 %v1561
    %v1723 = vunpack.c.l.b16 %v1562
    %v1724 = vunpack.c.h.b16 %v1562
    %v1725 = vunpack.c.l.b16 %v1563
    %v1726 = vunpack.c.h.b16 %v1563
    %v1727 = vunpack.c.l.b16 %v1564
    %v1728 = vunpack.c.h.b16 %v1564
    %v1729 = vunpack.c.l.b16 %v1565
    %v1730 = vunpack.c.h.b16 %v1565
    %v1731 = vunpack.c.l.b16 %v1566
    %v1732 = vunpack.c.h.b16 %v1566
    %v1733 = vunpack.c.l.b16 %v1567
    %v1734 = vunpack.c.h.b16 %v1567
    %v1735 = vunpack.c.l.b16 %v1568
    %v1736 = vunpack.c.h.b16 %v1568
    %v1737 = vunpack.c.l.b16 %v1569
    %v1738 = vunpack.c.h.b16 %v1569
    %v1739 = vunpack.c.l.b16 %v1570
    %v1740 = vunpack.c.h.b16 %v1570
    %v1741 = vunpack.c.l.b16 %v1571
    %v1742 = vunpack.c.h.b16 %v1571
    %v1743 = vunpack.c.l.b16 %v1572
    %v1744 = vunpack.c.h.b16 %v1572
    %v1745 = vunpack.c.l.b16 %v1573
    %v1746 = vunpack.c.h.b16 %v1573
    %v1747 = vunpack.c.l.b16 %v1574
    %v1748 = vunpack.c.h.b16 %v1574
    %v1749 = vpack.c.b16 %v1643, %v1641
    %v1750 = vpack.c.b16 %v1644, %v1642
    %v1751 = vpack.c.b16 %v1647, %v1645
    %v1752 = vpack.c.b16 %v1648, %v1646
    %v1753 = vpack.c.b16 %v1651, %v1649
    %v1754 = vpack.c.b16 %v1652, %v1650
    %v1755 = vpack.c.b16 %v1655, %v1653
    %v1756 = vpack.c.b16 %v1656, %v1654
    %v1757 = vpack.c.b16 %v1659, %v1657
    %v1758 = vpack.c.b16 %v1660, %v1658
    %v1759 = vpack.c.b16 %v1663, %v1661
    %v1760 = vpack.c.b16 %v1664, %v1662
    %v1761 = vpack.c.b16 %v1667, %v1665
    %v1762 = vpack.c.b16 %v1668, %v1666
    %v1763 = vpack.c.b16 %v1671, %v1669
    %v1764 = vpack.c.b16 %v1672, %v1670
    %v1765 = vpack.c.b16 %v1675, %v1673
    %v1766 = vpack.c.b16 %v1676, %v1674
    %v1767 = vpack.c.b16 %v1679, %v1677
    %v1768 = vpack.c.b16 %v1680, %v1678
    %v1769 = vpack.c.b16 %v1683, %v1681
    %v1770 = vpack.c.b16 %v1684, %v1682
    %v1771 = vpack.c.b16 %v1687, %v1685
    %v1772 = vpack.c.b16 %v1688, %v1686
    %v1773 = vpack.c.b16 %v1691, %v1689
    %v1774 = vpack.c.b16 %v1692, %v1690
    %v1775 = vpack.c.b16 %v1695, %v1693
    %v1776 = vpack.c.b16 %v1696, %v1694
    %v1777 = vpack.c.b16 %v1699, %v1697
    %v1778 = vpack.c.b16 %v1700, %v1698
    %v1779 = vpack.c.b16 %v1703, %v1701
    %v1780 = vpack.c.b16 %v1704, %v1702
    %v1781 = vpack.c.b16 %v1707, %v1705
    %v1782 = vpack.c.b16 %v1708, %v1706
    %v1783 = vpack.c.b16 %v1711, %v1709
    %v1784 = vpack.c.b16 %v1712, %v1710
    %v1785 = vpack.c.b16 %v1715, %v1713
    %v1786 = vpack.c.b16 %v1716, %v1714
    %v1787 = vpack.c.b16 %v1719, %v1717
    %v1788 = vpack.c.b16 %v1720, %v1718
    %v1789 = vpack.c.b16 %v1723, %v1721
    %v1790 = vpack.c.b16 %v1724, %v1722
    %v1791 = vpack.c.b16 %v1727, %v1725
    %v1792 = vpack.c.b16 %v1728, %v1726
    %v1793 = vpack.c.b16 %v1731, %v1729
    %v1794 = vpack.c.b16 %v1732, %v1730
    %v1795 = vpack.c.b16 %v1735, %v1733
    %v1796 = vpack.c.b16 %v1736, %v1734
    %v1797 = vpack.c.b16 %v1739, %v1737
    %v1798 = vpack.c.b16 %v1740, %v1738
    %v1799 = vpack.c.b16 %v1743, %v1741
    %v1800 = vpack.c.b16 %v1744, %v1742
    %v1801 = vpack.c.b16 %v1747, %v1745
    %v1802 = vpack.c.b16 %v1748, %v1746
    %v1858 = vsel %vm1511, %v1520, 0
    %1860 = vmatprep.subr.bf16.mxu0 %v1764
    %1861 = vmatpush1.bf16.msra.mxu0 %v1763
    %1862 = vmatprep.subr.bf16.mxu0 %v1762
    %1863 = vmatpush1.bf16.msra.mxu0 %v1761
    %1864 = vmatprep.subr.bf16.mxu0 %v1760
    %1865 = vmatpush1.bf16.msra.mxu0 %v1759
    %1866 = vmatprep.subr.bf16.mxu0 %v1758
    %1867 = vmatpush1.bf16.msra.mxu0 %v1757
    %1868 = vmatprep.subr.bf16.mxu0 %v1756
    %1869 = vmatpush1.bf16.msra.mxu0 %v1755
    %1870 = vmatprep.subr.bf16.mxu0 %v1754
    %1871 = vmatpush1.bf16.msra.mxu0 %v1753
    %1872 = vmatprep.subr.bf16.mxu0 %v1752
    %1873 = vmatpush1.bf16.msra.mxu0 %v1751
    %1874 = vmatprep.subr.bf16.mxu0 %v1750
    %1875 = vmatpush1.bf16.msra.mxu0 %v1749
    %1876 = vmatprep.subr.bf16.mxu0 %v1780
    %1877 = vmatpush2.bf16.msra.mxu0 %v1779
    %1878 = vmatprep.subr.bf16.mxu0 %v1778
    %1879 = vmatpush2.bf16.msra.mxu0 %v1777
    %1880 = vmatprep.subr.bf16.mxu0 %v1776
    %1881 = vmatpush2.bf16.msra.mxu0 %v1775
    %1882 = vmatprep.subr.bf16.mxu0 %v1774
    %1883 = vmatpush2.bf16.msra.mxu0 %v1773
    %1884 = vmatprep.subr.bf16.mxu0 %v1772
    %1885 = vmatpush2.bf16.msra.mxu0 %v1771
    %1886 = vmatprep.subr.bf16.mxu0 %v1770
    %1887 = vmatpush2.bf16.msra.mxu0 %v1769
    %1888 = vmatprep.subr.bf16.mxu0 %v1768
    %1889 = vmatpush2.bf16.msra.mxu0 %v1767
    %1890 = vmatprep.subr.bf16.mxu0 %v1766
    %1891 = vmatpush2.bf16.msra.mxu0 %v1765
    %1892 = vmatprep.mubr.bf16.mxu0 %v1518
    %1893 = vmatmul.mubr.bf16.gmra.mxu0 %v1517
    %v1894 = vpop.f32.mrf.mxu0
    %v1895 = vadd.f32 %v1580, %v1894
    %v1896 = vpop.f32.mrf.mxu0
    %v1897 = vadd.f32 %v1584, %v1896
    %v1898 = vpop.f32.mrf.mxu0
    %v1899 = vpop.f32.mrf.mxu0
    %1900 = vdwg.mxu0
    %1901 = vmatprep.subr.bf16.mxu0 %v1796
    %1902 = vmatpush1.bf16.msra.mxu0 %v1795
    %1903 = vmatprep.subr.bf16.mxu0 %v1794
    %1904 = vmatpush1.bf16.msra.mxu0 %v1793
    %1905 = vmatprep.subr.bf16.mxu0 %v1792
    %1906 = vmatpush1.bf16.msra.mxu0 %v1791
    %1907 = vmatprep.subr.bf16.mxu0 %v1790
    %1908 = vmatpush1.bf16.msra.mxu0 %v1789
    %1909 = vmatprep.subr.bf16.mxu0 %v1788
    %1910 = vmatpush1.bf16.msra.mxu0 %v1787
    %1911 = vmatprep.subr.bf16.mxu0 %v1786
    %1912 = vmatpush1.bf16.msra.mxu0 %v1785
    %1913 = vmatprep.subr.bf16.mxu0 %v1784
    %1914 = vmatpush1.bf16.msra.mxu0 %v1783
    %1915 = vmatprep.subr.bf16.mxu0 %v1782
    %1916 = vmatpush1.bf16.msra.mxu0 %v1781
    %1917 = vmatprep.subr.bf16.mxu0 0
    %1918 = vmatpush2.bf16.msra.mxu0 0
    %1919 = vmatprep.subr.bf16.mxu0 0
    %1920 = vmatpush2.bf16.msra.mxu0 0
    %1921 = vmatprep.subr.bf16.mxu0 0
    %1922 = vmatpush2.bf16.msra.mxu0 0
    %1923 = vmatprep.subr.bf16.mxu0 0
    %1924 = vmatpush2.bf16.msra.mxu0 0
    %1925 = vmatprep.subr.bf16.mxu0 0
    %1926 = vmatpush2.bf16.msra.mxu0 0
    %1927 = vmatprep.subr.bf16.mxu0 %v1802
    %1928 = vmatpush2.bf16.msra.mxu0 %v1801
    %1929 = vmatprep.subr.bf16.mxu0 %v1800
    %1930 = vmatpush2.bf16.msra.mxu0 %v1799
    %1931 = vmatprep.subr.bf16.mxu0 %v1798
    %1932 = vmatpush2.bf16.msra.mxu0 %v1797
    %1933 = vmatprep.mubr.bf16.mxu0 %v1858
    %1934 = vmatmul.mubr.bf16.gmra.mxu0 %v1519
    %v1935 = vpop.f32.mrf.mxu0
    %v1936 = vadd.f32 %v1895, %v1935
    %v1937 = vpop.f32.mrf.mxu0
    %v1938 = vadd.f32 %v1897, %v1937
    %v1939 = vpop.f32.mrf.mxu0
    %v1940 = vpop.f32.mrf.mxu0
    %1941 = vdwg.mxu0
    %v1942 = vrot.slane %v1936, 4
    %v1943 = vadd.f32 %v1936, %v1942
    %v1944 = vrot.slane %v1943, 2
    %v1945 = vadd.f32 %v1943, %v1944
    %v1946 = vrot.slane %v1945, 1
    %v1947 = vadd.f32 %v1945, %v1946
    %v1948 = vrot.slane %v1938, 4
    %v1949 = vadd.f32 %v1938, %v1948
    %v1950 = vrot.slane %v1949, 2
    %v1951 = vadd.f32 %v1949, %v1950
    %v1952 = vrot.slane %v1951, 1
    %v1953 = vadd.f32 %v1951, %v1952
    %v1954 = vld [vmem:[%s11] sm:$0xff]
    %v1955 = vld [vmem:[%s11 + $0x8] sm:$0xff]
    %v1956 = vld [vmem:[%s11 + $0x10] sm:$0xff]
    %v1957 = vld [vmem:[%s11 + $0x18] sm:$0xff]
    %v1958 = vld [vmem:[%s11 + $0x20] sm:$0xff]
    %v1959 = vld [vmem:[%s11 + $0x28] sm:$0xff]
    %v1960 = vld [vmem:[%s11 + $0x30] sm:$0xff]
    %v1961 = vld [vmem:[%s11 + $0x38] sm:$0xff]
    %v1962 = vld [vmem:[%s11 + $0x40] sm:$0xff]
    %v1963 = vld [vmem:[%s11 + $0x48] sm:$0xff]
    %v1964 = vld [vmem:[%s11 + $0x50] sm:$0xff]
    %v1965 = vld [vmem:[%s11 + $0x58] sm:$0xff]
    %v1966 = vld [vmem:[%s11 + $0x60] sm:$0xff]
    %v1967 = vld [vmem:[%s11 + $0x68] sm:$0xff]
    %v1968 = vld [vmem:[%s11 + $0x70] sm:$0xff]
    %v1969 = vld [vmem:[%s11 + $0x78] sm:$0xff]
    %v1970 = vld [vmem:[%s11 + $0x80] sm:$0xff]
    %v1971 = vld [vmem:[%s11 + $0x88] sm:$0xff]
    %v1972 = vld [vmem:[%s11 + $0x90] sm:$0xff]
    %v1973 = vld [vmem:[%s11 + $0x98] sm:$0xff]
    %v1974 = vld [vmem:[%s11 + $0xa0] sm:$0xff]
    %v1975 = vld [vmem:[%s11 + $0xa8] sm:$0xff]
    %v1976 = vld [vmem:[%s11 + $0xb0] sm:$0xff]
    %v1977 = vld [vmem:[%s11 + $0xb8] sm:$0xff]
    %v1978 = vld [vmem:[%s11 + $0xc0] sm:$0xff]
    %v1979 = vld [vmem:[%s11 + $0xc8] sm:$0xff]
    %v1980 = vld [vmem:[%s11 + $0xd0] sm:$0xff]
    %v1981 = vld [vmem:[%s11 + $0xd8] sm:$0xff]
    %v1982 = vld [vmem:[%s11 + $0xe0] sm:$0xff]
    %v1983 = vld [vmem:[%s11 + $0xe8] sm:$0xff]
    %v1984 = vld [vmem:[%s11 + $0xf0] sm:$0xff]
    %v1985 = vld [vmem:[%s11 + $0xf8] sm:$0xff]
    %1986 = vmatprep.subr.mxu0 0.0
    %1987 = vmatpush1.msra.mxu0 %v1969
    %1988 = vmatprep.subr.mxu0 0.0
    %1989 = vmatpush1.msra.mxu0 %v1968
    %1990 = vmatprep.subr.mxu0 0.0
    %1991 = vmatpush1.msra.mxu0 %v1967
    %1992 = vmatprep.subr.mxu0 0.0
    %1993 = vmatpush1.msra.mxu0 %v1966
    %1994 = vmatprep.subr.mxu0 0.0
    %1995 = vmatpush1.msra.mxu0 %v1965
    %1996 = vmatprep.subr.mxu0 0.0
    %1997 = vmatpush1.msra.mxu0 %v1964
    %1998 = vmatprep.subr.mxu0 0.0
    %1999 = vmatpush1.msra.mxu0 %v1963
    %2000 = vmatprep.subr.mxu0 0.0
    %2001 = vmatpush1.msra.mxu0 %v1962
    %2002 = vmatprep.subr.mxu0 0.0
    %2003 = vmatpush1.msra.mxu0 %v1961
    %2004 = vmatprep.subr.mxu0 0.0
    %2005 = vmatpush1.msra.mxu0 %v1960
    %2006 = vmatprep.subr.mxu0 0.0
    %2007 = vmatpush1.msra.mxu0 %v1959
    %2008 = vmatprep.subr.mxu0 0.0
    %2009 = vmatpush1.msra.mxu0 %v1958
    %2010 = vmatprep.subr.mxu0 0.0
    %2011 = vmatpush1.msra.mxu0 %v1957
    %2012 = vmatprep.subr.mxu0 0.0
    %2013 = vmatpush1.msra.mxu0 %v1956
    %2014 = vmatprep.subr.mxu0 0.0
    %2015 = vmatpush1.msra.mxu0 %v1955
    %2016 = vmatprep.subr.mxu0 0.0
    %2017 = vmatpush1.msra.mxu0 %v1954
    %2018 = vmatprep.subr.mxu0 0.0
    %2019 = vmatpush2.msra.mxu0 %v1985
    %2020 = vmatprep.subr.mxu0 0.0
    %2021 = vmatpush2.msra.mxu0 %v1984
    %2022 = vmatprep.subr.mxu0 0.0
    %2023 = vmatpush2.msra.mxu0 %v1983
    %2024 = vmatprep.subr.mxu0 0.0
    %2025 = vmatpush2.msra.mxu0 %v1982
    %2026 = vmatprep.subr.mxu0 0.0
    %2027 = vmatpush2.msra.mxu0 %v1981
    %2028 = vmatprep.subr.mxu0 0.0
    %2029 = vmatpush2.msra.mxu0 %v1980
    %2030 = vmatprep.subr.mxu0 0.0
    %2031 = vmatpush2.msra.mxu0 %v1979
    %2032 = vmatprep.subr.mxu0 0.0
    %2033 = vmatpush2.msra.mxu0 %v1978
    %2034 = vmatprep.subr.mxu0 0.0
    %2035 = vmatpush2.msra.mxu0 %v1977
    %2036 = vmatprep.subr.mxu0 0.0
    %2037 = vmatpush2.msra.mxu0 %v1976
    %2038 = vmatprep.subr.mxu0 0.0
    %2039 = vmatpush2.msra.mxu0 %v1975
    %2040 = vmatprep.subr.mxu0 0.0
    %2041 = vmatpush2.msra.mxu0 %v1974
    %2042 = vmatprep.subr.mxu0 0.0
    %2043 = vmatpush2.msra.mxu0 %v1973
    %2044 = vmatprep.subr.mxu0 0.0
    %2045 = vmatpush2.msra.mxu0 %v1972
    %2046 = vmatprep.subr.mxu0 0.0
    %2047 = vmatpush2.msra.mxu0 %v1971
    %2048 = vmatprep.subr.mxu0 0.0
    %2049 = vmatpush2.msra.mxu0 %v1970
    %2050 = vmatprep.mubr.f32.mxu0 %v1953
    %2051 = vmatmul.mubr.f32.gmra.mxu0 %v1947
    %v2052 = vpop.f32.mrf.mxu0
    %v2053 = vadd.f32 0.0, %v2052
    %v2054 = vpop.f32.mrf.mxu0
    %2055 = vdwg.mxu0
    %v2056 = vmul.f32 %v1936, %v1936
    %v2057 = vmul.f32 %v1938, %v1938
    %v2058 = vrot.slane %v2056, 4
    %v2059 = vadd.f32 %v2056, %v2058
    %v2060 = vrot.slane %v2059, 2
    %v2061 = vadd.f32 %v2059, %v2060
    %v2062 = vrot.slane %v2061, 1
    %v2063 = vadd.f32 %v2061, %v2062
    %v2064 = vrot.slane %v2057, 4
    %v2065 = vadd.f32 %v2057, %v2064
    %v2066 = vrot.slane %v2065, 2
    %v2067 = vadd.f32 %v2065, %v2066
    %v2068 = vrot.slane %v2067, 1
    %v2069 = vadd.f32 %v2067, %v2068
    %2070 = vmatprep.subr.mxu0 0.0
    %2071 = vmatpush1.msra.mxu0 %v1969
    %2072 = vmatprep.subr.mxu0 0.0
    %2073 = vmatpush1.msra.mxu0 %v1968
    %2074 = vmatprep.subr.mxu0 0.0
    %2075 = vmatpush1.msra.mxu0 %v1967
    %2076 = vmatprep.subr.mxu0 0.0
    %2077 = vmatpush1.msra.mxu0 %v1966
    %2078 = vmatprep.subr.mxu0 0.0
    %2079 = vmatpush1.msra.mxu0 %v1965
    %2080 = vmatprep.subr.mxu0 0.0
    %2081 = vmatpush1.msra.mxu0 %v1964
    %2082 = vmatprep.subr.mxu0 0.0
    %2083 = vmatpush1.msra.mxu0 %v1963
    %2084 = vmatprep.subr.mxu0 0.0
    %2085 = vmatpush1.msra.mxu0 %v1962
    %2086 = vmatprep.subr.mxu0 0.0
    %2087 = vmatpush1.msra.mxu0 %v1961
    %2088 = vmatprep.subr.mxu0 0.0
    %2089 = vmatpush1.msra.mxu0 %v1960
    %2090 = vmatprep.subr.mxu0 0.0
    %2091 = vmatpush1.msra.mxu0 %v1959
    %2092 = vmatprep.subr.mxu0 0.0
    %2093 = vmatpush1.msra.mxu0 %v1958
    %2094 = vmatprep.subr.mxu0 0.0
    %2095 = vmatpush1.msra.mxu0 %v1957
    %2096 = vmatprep.subr.mxu0 0.0
    %2097 = vmatpush1.msra.mxu0 %v1956
    %2098 = vmatprep.subr.mxu0 0.0
    %2099 = vmatpush1.msra.mxu0 %v1955
    %2100 = vmatprep.subr.mxu0 0.0
    %2101 = vmatpush1.msra.mxu0 %v1954
    %2102 = vmatprep.subr.mxu0 0.0
    %2103 = vmatpush2.msra.mxu0 %v1985
    %2104 = vmatprep.subr.mxu0 0.0
    %2105 = vmatpush2.msra.mxu0 %v1984
    %2106 = vmatprep.subr.mxu0 0.0
    %2107 = vmatpush2.msra.mxu0 %v1983
    %2108 = vmatprep.subr.mxu0 0.0
    %2109 = vmatpush2.msra.mxu0 %v1982
    %2110 = vmatprep.subr.mxu0 0.0
    %2111 = vmatpush2.msra.mxu0 %v1981
    %2112 = vmatprep.subr.mxu0 0.0
    %2113 = vmatpush2.msra.mxu0 %v1980
    %2114 = vmatprep.subr.mxu0 0.0
    %2115 = vmatpush2.msra.mxu0 %v1979
    %2116 = vmatprep.subr.mxu0 0.0
    %2117 = vmatpush2.msra.mxu0 %v1978
    %2118 = vmatprep.subr.mxu0 0.0
    %2119 = vmatpush2.msra.mxu0 %v1977
    %2120 = vmatprep.subr.mxu0 0.0
    %2121 = vmatpush2.msra.mxu0 %v1976
    %2122 = vmatprep.subr.mxu0 0.0
    %2123 = vmatpush2.msra.mxu0 %v1975
    %2124 = vmatprep.subr.mxu0 0.0
    %2125 = vmatpush2.msra.mxu0 %v1974
    %2126 = vmatprep.subr.mxu0 0.0
    %2127 = vmatpush2.msra.mxu0 %v1973
    %2128 = vmatprep.subr.mxu0 0.0
    %2129 = vmatpush2.msra.mxu0 %v1972
    %2130 = vmatprep.subr.mxu0 0.0
    %2131 = vmatpush2.msra.mxu0 %v1971
    %2132 = vmatprep.subr.mxu0 0.0
    %2133 = vmatpush2.msra.mxu0 %v1970
    %2134 = vmatprep.mubr.f32.mxu0 %v2069
    %2135 = vmatmul.mubr.f32.gmra.mxu0 %v2063
    %v2136 = vpop.f32.mrf.mxu0
    %v2137 = vadd.f32 0.0, %v2136
    %v2138 = vpop.f32.mrf.mxu0
    %2139 = vdwg.mxu0
    %v2140 = vrcp.pop 128.0
    %v2141 = vmul.f32 %v2053, %v2140
    %v2142 = vmul.f32 %v2137, %v2140
    %v2143 = vmul.f32 %v2141, %v2141
    %v2144 = vsub.f32 %v2142, %v2143
    %v2145 = vld [vmem:[%s7] sm:$0x1]
    %v2146 = vadd.f32 %v2144, 1e-05
    %v2147 = vrsqrt.pop %v2146
    %v2148 = vmul.f32 %v2145, %v2147
    %v2149 = vld [vmem:[%s8] sm:$0x1]
    %v2150 = vmul.f32 %v2141, %v2148
    %v2151 = vsub.f32 %v2149, %v2150
    %v2152 = vld [vmem:[%s12] sm:$0xff]
    %v2153 = vld [vmem:[%s12 + $0x8] sm:$0xff]
    %v2154 = vld [vmem:[%s12 + $0x10] sm:$0xff]
    %v2155 = vld [vmem:[%s12 + $0x18] sm:$0xff]
    %v2157 = vsel %vm994, %v2148, 0
    %2159 = vmatprep.subr.mxu0 0.0
    %2160 = vmatpush1.msra.mxu0 0.0
    %2161 = vmatprep.subr.mxu0 0.0
    %2162 = vmatpush1.msra.mxu0 0.0
    %2163 = vmatprep.subr.mxu0 0.0
    %2164 = vmatpush1.msra.mxu0 0.0
    %2165 = vmatprep.subr.mxu0 0.0
    %2166 = vmatpush1.msra.mxu0 0.0
    %2167 = vmatprep.subr.mxu0 0.0
    %2168 = vmatpush1.msra.mxu0 0.0
    %2169 = vmatprep.subr.mxu0 0.0
    %2170 = vmatpush1.msra.mxu0 0.0
    %2171 = vmatprep.subr.mxu0 0.0
    %2172 = vmatpush1.msra.mxu0 0.0
    %2173 = vmatprep.subr.mxu0 0.0
    %2174 = vmatpush1.msra.mxu0 0.0
    %2175 = vmatprep.subr.mxu0 0.0
    %2176 = vmatpush1.msra.mxu0 0.0
    %2177 = vmatprep.subr.mxu0 0.0
    %2178 = vmatpush1.msra.mxu0 0.0
    %2179 = vmatprep.subr.mxu0 0.0
    %2180 = vmatpush1.msra.mxu0 0.0
    %2181 = vmatprep.subr.mxu0 0.0
    %2182 = vmatpush1.msra.mxu0 0.0
    %2183 = vmatprep.subr.mxu0 0.0
    %2184 = vmatpush1.msra.mxu0 0.0
    %2185 = vmatprep.subr.mxu0 0.0
    %2186 = vmatpush1.msra.mxu0 0.0
    %2187 = vmatprep.subr.mxu0 %v2155
    %2188 = vmatpush1.msra.mxu0 %v2154
    %2189 = vmatprep.subr.mxu0 %v2153
    %2190 = vmatpush1.msra.mxu0 %v2152
    %2191 = vmatprep.subr.mxu0 0.0
    %2192 = vmatpush2.msra.mxu0 0.0
    %2193 = vmatprep.subr.mxu0 0.0
    %2194 = vmatpush2.msra.mxu0 0.0
    %2195 = vmatprep.subr.mxu0 0.0
    %2196 = vmatpush2.msra.mxu0 0.0
    %2197 = vmatprep.subr.mxu0 0.0
    %2198 = vmatpush2.msra.mxu0 0.0
    %2199 = vmatprep.subr.mxu0 0.0
    %2200 = vmatpush2.msra.mxu0 0.0
    %2201 = vmatprep.subr.mxu0 0.0
    %2202 = vmatpush2.msra.mxu0 0.0
    %2203 = vmatprep.subr.mxu0 0.0
    %2204 = vmatpush2.msra.mxu0 0.0
    %2205 = vmatprep.subr.mxu0 0.0
    %2206 = vmatpush2.msra.mxu0 0.0
    %2207 = vmatprep.subr.mxu0 0.0
    %2208 = vmatpush2.msra.mxu0 0.0
    %2209 = vmatprep.subr.mxu0 0.0
    %2210 = vmatpush2.msra.mxu0 0.0
    %2211 = vmatprep.subr.mxu0 0.0
    %2212 = vmatpush2.msra.mxu0 0.0
    %2213 = vmatprep.subr.mxu0 0.0
    %2214 = vmatpush2.msra.mxu0 0.0
    %2215 = vmatprep.subr.mxu0 0.0
    %2216 = vmatpush2.msra.mxu0 0.0
    %2217 = vmatprep.subr.mxu0 0.0
    %2218 = vmatpush2.msra.mxu0 0.0
    %2219 = vmatprep.subr.mxu0 0.0
    %2220 = vmatpush2.msra.mxu0 0.0
    %2221 = vmatprep.subr.mxu0 0.0
    %2222 = vmatpush2.msra.mxu0 0.0
    %2223 = vmatprep.mubr.f32.mxu0 0.0
    %2224 = vmatmul.mubr.f32.gmra.mxu0 %v2157
    %v2225 = vpop.f32.mrf.mxu0
    %v2226 = vadd.f32 0.0, %v2225
    %v2227 = vpop.f32.mrf.mxu0
    %v2228 = vadd.f32 0.0, %v2227
    %2229 = vdwg.mxu0
    %v2231 = vsel %vm994, %v2151, 0
    %2233 = vmatprep.subr.mxu0 0.0
    %2234 = vmatpush1.msra.mxu0 0.0
    %2235 = vmatprep.subr.mxu0 0.0
    %2236 = vmatpush1.msra.mxu0 0.0
    %2237 = vmatprep.subr.mxu0 0.0
    %2238 = vmatpush1.msra.mxu0 0.0
    %2239 = vmatprep.subr.mxu0 0.0
    %2240 = vmatpush1.msra.mxu0 0.0
    %2241 = vmatprep.subr.mxu0 0.0
    %2242 = vmatpush1.msra.mxu0 0.0
    %2243 = vmatprep.subr.mxu0 0.0
    %2244 = vmatpush1.msra.mxu0 0.0
    %2245 = vmatprep.subr.mxu0 0.0
    %2246 = vmatpush1.msra.mxu0 0.0
    %2247 = vmatprep.subr.mxu0 0.0
    %2248 = vmatpush1.msra.mxu0 0.0
    %2249 = vmatprep.subr.mxu0 0.0
    %2250 = vmatpush1.msra.mxu0 0.0
    %2251 = vmatprep.subr.mxu0 0.0
    %2252 = vmatpush1.msra.mxu0 0.0
    %2253 = vmatprep.subr.mxu0 0.0
    %2254 = vmatpush1.msra.mxu0 0.0
    %2255 = vmatprep.subr.mxu0 0.0
    %2256 = vmatpush1.msra.mxu0 0.0
    %2257 = vmatprep.subr.mxu0 0.0
    %2258 = vmatpush1.msra.mxu0 0.0
    %2259 = vmatprep.subr.mxu0 0.0
    %2260 = vmatpush1.msra.mxu0 0.0
    %2261 = vmatprep.subr.mxu0 %v2155
    %2262 = vmatpush1.msra.mxu0 %v2154
    %2263 = vmatprep.subr.mxu0 %v2153
    %2264 = vmatpush1.msra.mxu0 %v2152
    %2265 = vmatprep.subr.mxu0 0.0
    %2266 = vmatpush2.msra.mxu0 0.0
    %2267 = vmatprep.subr.mxu0 0.0
    %2268 = vmatpush2.msra.mxu0 0.0
    %2269 = vmatprep.subr.mxu0 0.0
    %2270 = vmatpush2.msra.mxu0 0.0
    %2271 = vmatprep.subr.mxu0 0.0
    %2272 = vmatpush2.msra.mxu0 0.0
    %2273 = vmatprep.subr.mxu0 0.0
    %2274 = vmatpush2.msra.mxu0 0.0
    %2275 = vmatprep.subr.mxu0 0.0
    %2276 = vmatpush2.msra.mxu0 0.0
    %2277 = vmatprep.subr.mxu0 0.0
    %2278 = vmatpush2.msra.mxu0 0.0
    %2279 = vmatprep.subr.mxu0 0.0
    %2280 = vmatpush2.msra.mxu0 0.0
    %2281 = vmatprep.subr.mxu0 0.0
    %2282 = vmatpush2.msra.mxu0 0.0
    %2283 = vmatprep.subr.mxu0 0.0
    %2284 = vmatpush2.msra.mxu0 0.0
    %2285 = vmatprep.subr.mxu0 0.0
    %2286 = vmatpush2.msra.mxu0 0.0
    %2287 = vmatprep.subr.mxu0 0.0
    %2288 = vmatpush2.msra.mxu0 0.0
    %2289 = vmatprep.subr.mxu0 0.0
    %2290 = vmatpush2.msra.mxu0 0.0
    %2291 = vmatprep.subr.mxu0 0.0
    %2292 = vmatpush2.msra.mxu0 0.0
    %2293 = vmatprep.subr.mxu0 0.0
    %2294 = vmatpush2.msra.mxu0 0.0
    %2295 = vmatprep.subr.mxu0 0.0
    %2296 = vmatpush2.msra.mxu0 0.0
    %2297 = vmatprep.mubr.f32.mxu0 0.0
    %2298 = vmatmul.mubr.f32.gmra.mxu0 %v2231
    %v2299 = vpop.f32.mrf.mxu0
    %v2300 = vadd.f32 0.0, %v2299
    %v2301 = vpop.f32.mrf.mxu0
    %v2302 = vadd.f32 0.0, %v2301
    %2303 = vdwg.mxu0
    %v2304 = vlaneseq
    %v2305 = vshrl.u32 %v2304, 7
    %v2306 = vsub.s32 0, %v2305
    %v2307 = vrot.slane %v2226, %v2306
    %v2308 = vlaneseq
    %v2309 = vshrl.u32 %v2308, 7
    %v2310 = vsub.s32 0, %v2309
    %v2311 = vrot.slane %v2228, %v2310
    %v2312 = vmul.f32 %v1936, %v2307
    %v2313 = vmul.f32 %v1938, %v2311
    %v2314 = vlaneseq
    %v2315 = vshrl.u32 %v2314, 7
    %v2316 = vsub.s32 0, %v2315
    %v2317 = vrot.slane %v2300, %v2316
    %v2318 = vlaneseq
    %v2319 = vshrl.u32 %v2318, 7
    %v2320 = vsub.s32 0, %v2319
    %v2321 = vrot.slane %v2302, %v2320
    %v2322 = vadd.f32 %v2312, %v2317
    %v2323 = vadd.f32 %v2313, %v2321
    %v2324 = vmax.f32 %v2322, 0.0
    %v2325 = vmax.f32 %v2323, 0.0
    %v2326 = vmax.f32 %v2324, %v2325
    %2328 = vrot.lane.b32.xlu0 %v2326, 64
    %v2329 = vpop.permute.xlu0 %2328
    %v2331 = vmax.f32 %v2326, %v2329
    %v2332 = vpack.c.bf16 %v2331, %v2331
    %v2333 = vld [vmem:[%s13] sm:$0xf]
    %v2334 = vld [vmem:[%s13 + $0x4] sm:$0xf]
    %v2335 = vld [vmem:[%s13 + $0x8] sm:$0xf]
    %v2336 = vld [vmem:[%s13 + $0xc] sm:$0xf]
    %v2337 = vld [vmem:[%s13 + $0x10] sm:$0xf]
    %v2338 = vld [vmem:[%s13 + $0x14] sm:$0xf]
    %v2339 = vld [vmem:[%s13 + $0x18] sm:$0xf]
    %v2340 = vld [vmem:[%s13 + $0x1c] sm:$0xf]
    %s2341 = scalar_lea.vmem %s13, 32
    %v2342 = vld [vmem:[%s2341] sm:$0xf]
    %v2343 = vld [vmem:[%s2341 + $0x4] sm:$0xf]
    %v2344 = vld [vmem:[%s2341 + $0x8] sm:$0xf]
    %v2345 = vld [vmem:[%s2341 + $0xc] sm:$0xf]
    %v2346 = vld [vmem:[%s2341 + $0x10] sm:$0xf]
    %v2347 = vld [vmem:[%s2341 + $0x14] sm:$0xf]
    %v2348 = vld [vmem:[%s2341 + $0x18] sm:$0xf]
    %v2349 = vld [vmem:[%s2341 + $0x1c] sm:$0xf]
    %v2351 = vrot.slane %v2332, 1
    %v2360 = vunpack.c.l.b16 %v2342
    %v2361 = vunpack.c.l.b16 %v2343
    %v2362 = vunpack.c.l.b16 %v2344
    %v2363 = vunpack.c.l.b16 %v2345
    %v2364 = vunpack.c.l.b16 %v2346
    %v2365 = vunpack.c.l.b16 %v2347
    %v2366 = vunpack.c.l.b16 %v2348
    %v2367 = vunpack.c.l.b16 %v2349
    %v2368 = vpack.c.b16 %v2361, %v2360
    %v2369 = vpack.c.b16 %v2363, %v2362
    %v2370 = vpack.c.b16 %v2365, %v2364
    %v2371 = vpack.c.b16 %v2367, %v2366
    %vm2376 = vcmask 523264
    %v2378 = vsel %vm2376, %v2351, 0
    %2380 = vmatprep.subr.bf16.mxu0 0
    %2381 = vmatpush1.bf16.msra.mxu0 0
    %2382 = vmatprep.subr.bf16.mxu0 0
    %2383 = vmatpush1.bf16.msra.mxu0 0
    %2384 = vmatprep.subr.bf16.mxu0 0
    %2385 = vmatpush1.bf16.msra.mxu0 0
    %2386 = vmatprep.subr.bf16.mxu0 0
    %2387 = vmatpush1.bf16.msra.mxu0 0
    %2388 = vmatprep.subr.bf16.mxu0 0
    %2389 = vmatpush1.bf16.msra.mxu0 %v2371
    %2390 = vmatprep.subr.bf16.mxu0 0
    %2391 = vmatpush1.bf16.msra.mxu0 %v2370
    %2392 = vmatprep.subr.bf16.mxu0 0
    %2393 = vmatpush1.bf16.msra.mxu0 %v2369
    %2394 = vmatprep.subr.bf16.mxu0 0
    %2395 = vmatpush1.bf16.msra.mxu0 %v2368
    %2396 = vmatprep.subr.bf16.mxu0 0
    %2397 = vmatpush2.bf16.msra.mxu0 0
    %2398 = vmatprep.subr.bf16.mxu0 0
    %2399 = vmatpush2.bf16.msra.mxu0 0
    %2400 = vmatprep.subr.bf16.mxu0 0
    %2401 = vmatpush2.bf16.msra.mxu0 0
    %2402 = vmatprep.subr.bf16.mxu0 0
    %2403 = vmatpush2.bf16.msra.mxu0 0
    %2404 = vmatprep.subr.bf16.mxu0 0
    %2405 = vmatpush2.bf16.msra.mxu0 0
    %2406 = vmatprep.subr.bf16.mxu0 0
    %2407 = vmatpush2.bf16.msra.mxu0 0
    %2408 = vmatprep.subr.bf16.mxu0 0
    %2409 = vmatpush2.bf16.msra.mxu0 0
    %2410 = vmatprep.subr.bf16.mxu0 0
    %2411 = vmatpush2.bf16.msra.mxu0 0
    %2412 = vmatprep.mubr.bf16.mxu0 0
    %2413 = vmatmul.mubr.bf16.gmra.mxu0 %v2378
    %v2414 = vpop.f32.mrf.mxu0
    %v2415 = vadd.f32 0.0, %v2414
    %v2416 = vpop.f32.mrf.mxu0
    %v2417 = vpop.f32.mrf.mxu0
    %v2418 = vpop.f32.mrf.mxu0
    %2419 = vdwg.mxu0
    %v2428 = vunpack.c.l.b16 %v2333
    %v2429 = vunpack.c.l.b16 %v2334
    %v2430 = vunpack.c.l.b16 %v2335
    %v2431 = vunpack.c.l.b16 %v2336
    %v2432 = vunpack.c.l.b16 %v2337
    %v2433 = vunpack.c.l.b16 %v2338
    %v2434 = vunpack.c.l.b16 %v2339
    %v2435 = vunpack.c.l.b16 %v2340
    %v2436 = vpack.c.b16 %v2429, %v2428
    %v2437 = vpack.c.b16 %v2431, %v2430
    %v2438 = vpack.c.b16 %v2433, %v2432
    %v2439 = vpack.c.b16 %v2435, %v2434
    %v2445 = vsel %vm2376, %v2332, 0
    %2447 = vmatprep.subr.bf16.mxu0 0
    %2448 = vmatpush1.bf16.msra.mxu0 0
    %2449 = vmatprep.subr.bf16.mxu0 0
    %2450 = vmatpush1.bf16.msra.mxu0 0
    %2451 = vmatprep.subr.bf16.mxu0 0
    %2452 = vmatpush1.bf16.msra.mxu0 0
    %2453 = vmatprep.subr.bf16.mxu0 0
    %2454 = vmatpush1.bf16.msra.mxu0 0
    %2455 = vmatprep.subr.bf16.mxu0 0
    %2456 = vmatpush1.bf16.msra.mxu0 %v2439
    %2457 = vmatprep.subr.bf16.mxu0 0
    %2458 = vmatpush1.bf16.msra.mxu0 %v2438
    %2459 = vmatprep.subr.bf16.mxu0 0
    %2460 = vmatpush1.bf16.msra.mxu0 %v2437
    %2461 = vmatprep.subr.bf16.mxu0 0
    %2462 = vmatpush1.bf16.msra.mxu0 %v2436
    %2463 = vmatprep.subr.bf16.mxu0 0
    %2464 = vmatpush2.bf16.msra.mxu0 0
    %2465 = vmatprep.subr.bf16.mxu0 0
    %2466 = vmatpush2.bf16.msra.mxu0 0
    %2467 = vmatprep.subr.bf16.mxu0 0
    %2468 = vmatpush2.bf16.msra.mxu0 0
    %2469 = vmatprep.subr.bf16.mxu0 0
    %2470 = vmatpush2.bf16.msra.mxu0 0
    %2471 = vmatprep.subr.bf16.mxu0 0
    %2472 = vmatpush2.bf16.msra.mxu0 0
    %2473 = vmatprep.subr.bf16.mxu0 0
    %2474 = vmatpush2.bf16.msra.mxu0 0
    %2475 = vmatprep.subr.bf16.mxu0 0
    %2476 = vmatpush2.bf16.msra.mxu0 0
    %2477 = vmatprep.subr.bf16.mxu0 0
    %2478 = vmatpush2.bf16.msra.mxu0 0
    %2479 = vmatprep.mubr.bf16.mxu0 0
    %2480 = vmatmul.mubr.bf16.gmra.mxu0 %v2445
    %v2481 = vpop.f32.mrf.mxu0
    %v2482 = vadd.f32 %v2415, %v2481
    %v2483 = vpop.f32.mrf.mxu0
    %v2484 = vpop.f32.mrf.mxu0
    %v2485 = vpop.f32.mrf.mxu0
    %2486 = vdwg.mxu0
    %s2487 = scalar_lea.vmem %s13, 64
    %v2488 = vld [vmem:[%s2487] sm:$0xf]
    %v2489 = vld [vmem:[%s2487 + $0x4] sm:$0xf]
    %v2490 = vld [vmem:[%s2487 + $0x8] sm:$0xf]
    %v2491 = vld [vmem:[%s2487 + $0xc] sm:$0xf]
    %v2492 = vld [vmem:[%s2487 + $0x10] sm:$0xf]
    %v2493 = vld [vmem:[%s2487 + $0x14] sm:$0xf]
    %v2494 = vld [vmem:[%s2487 + $0x18] sm:$0xf]
    %v2495 = vld [vmem:[%s2487 + $0x1c] sm:$0xf]
    %v2496 = vrot.slane %v2332, 2
    %v2505 = vunpack.c.l.b16 %v2488
    %v2506 = vunpack.c.l.b16 %v2489
    %v2507 = vunpack.c.l.b16 %v2490
    %v2508 = vunpack.c.l.b16 %v2491
    %v2509 = vunpack.c.l.b16 %v2492
    %v2510 = vunpack.c.l.b16 %v2493
    %v2511 = vunpack.c.l.b16 %v2494
    %v2512 = vunpack.c.l.b16 %v2495
    %v2513 = vpack.c.b16 %v2506, %v2505
    %v2514 = vpack.c.b16 %v2508, %v2507
    %v2515 = vpack.c.b16 %v2510, %v2509
    %v2516 = vpack.c.b16 %v2512, %v2511
    %v2522 = vsel %vm2376, %v2496, 0
    %2524 = vmatprep.subr.bf16.mxu0 0
    %2525 = vmatpush1.bf16.msra.mxu0 0
    %2526 = vmatprep.subr.bf16.mxu0 0
    %2527 = vmatpush1.bf16.msra.mxu0 0
    %2528 = vmatprep.subr.bf16.mxu0 0
    %2529 = vmatpush1.bf16.msra.mxu0 0
    %2530 = vmatprep.subr.bf16.mxu0 0
    %2531 = vmatpush1.bf16.msra.mxu0 0
    %2532 = vmatprep.subr.bf16.mxu0 0
    %2533 = vmatpush1.bf16.msra.mxu0 %v2516
    %2534 = vmatprep.subr.bf16.mxu0 0
    %2535 = vmatpush1.bf16.msra.mxu0 %v2515
    %2536 = vmatprep.subr.bf16.mxu0 0
    %2537 = vmatpush1.bf16.msra.mxu0 %v2514
    %2538 = vmatprep.subr.bf16.mxu0 0
    %2539 = vmatpush1.bf16.msra.mxu0 %v2513
    %2540 = vmatprep.subr.bf16.mxu0 0
    %2541 = vmatpush2.bf16.msra.mxu0 0
    %2542 = vmatprep.subr.bf16.mxu0 0
    %2543 = vmatpush2.bf16.msra.mxu0 0
    %2544 = vmatprep.subr.bf16.mxu0 0
    %2545 = vmatpush2.bf16.msra.mxu0 0
    %2546 = vmatprep.subr.bf16.mxu0 0
    %2547 = vmatpush2.bf16.msra.mxu0 0
    %2548 = vmatprep.subr.bf16.mxu0 0
    %2549 = vmatpush2.bf16.msra.mxu0 0
    %2550 = vmatprep.subr.bf16.mxu0 0
    %2551 = vmatpush2.bf16.msra.mxu0 0
    %2552 = vmatprep.subr.bf16.mxu0 0
    %2553 = vmatpush2.bf16.msra.mxu0 0
    %2554 = vmatprep.subr.bf16.mxu0 0
    %2555 = vmatpush2.bf16.msra.mxu0 0
    %2556 = vmatprep.mubr.bf16.mxu0 0
    %2557 = vmatmul.mubr.bf16.gmra.mxu0 %v2522
    %v2558 = vpop.f32.mrf.mxu0
    %v2559 = vadd.f32 0.0, %v2558
    %v2560 = vpop.f32.mrf.mxu0
    %v2561 = vpop.f32.mrf.mxu0
    %v2562 = vpop.f32.mrf.mxu0
    %2563 = vdwg.mxu0
    %v2564 = vadd.f32 %v2482, %v2559
    %s2565 = scalar_lea.vmem %s13, 96
    %v2566 = vld [vmem:[%s2565] sm:$0xf]
    %v2567 = vld [vmem:[%s2565 + $0x4] sm:$0xf]
    %v2568 = vld [vmem:[%s2565 + $0x8] sm:$0xf]
    %v2569 = vld [vmem:[%s2565 + $0xc] sm:$0xf]
    %v2570 = vld [vmem:[%s2565 + $0x10] sm:$0xf]
    %v2571 = vld [vmem:[%s2565 + $0x14] sm:$0xf]
    %v2572 = vld [vmem:[%s2565 + $0x18] sm:$0xf]
    %v2573 = vld [vmem:[%s2565 + $0x1c] sm:$0xf]
    %v2574 = vrot.slane %v2332, 3
    %v2583 = vunpack.c.l.b16 %v2566
    %v2584 = vunpack.c.l.b16 %v2567
    %v2585 = vunpack.c.l.b16 %v2568
    %v2586 = vunpack.c.l.b16 %v2569
    %v2587 = vunpack.c.l.b16 %v2570
    %v2588 = vunpack.c.l.b16 %v2571
    %v2589 = vunpack.c.l.b16 %v2572
    %v2590 = vunpack.c.l.b16 %v2573
    %v2591 = vpack.c.b16 %v2584, %v2583
    %v2592 = vpack.c.b16 %v2586, %v2585
    %v2593 = vpack.c.b16 %v2588, %v2587
    %v2594 = vpack.c.b16 %v2590, %v2589
    %v2600 = vsel %vm2376, %v2574, 0
    %2602 = vmatprep.subr.bf16.mxu0 0
    %2603 = vmatpush1.bf16.msra.mxu0 0
    %2604 = vmatprep.subr.bf16.mxu0 0
    %2605 = vmatpush1.bf16.msra.mxu0 0
    %2606 = vmatprep.subr.bf16.mxu0 0
    %2607 = vmatpush1.bf16.msra.mxu0 0
    %2608 = vmatprep.subr.bf16.mxu0 0
    %2609 = vmatpush1.bf16.msra.mxu0 0
    %2610 = vmatprep.subr.bf16.mxu0 0
    %2611 = vmatpush1.bf16.msra.mxu0 %v2594
    %2612 = vmatprep.subr.bf16.mxu0 0
    %2613 = vmatpush1.bf16.msra.mxu0 %v2593
    %2614 = vmatprep.subr.bf16.mxu0 0
    %2615 = vmatpush1.bf16.msra.mxu0 %v2592
    %2616 = vmatprep.subr.bf16.mxu0 0
    %2617 = vmatpush1.bf16.msra.mxu0 %v2591
    %2618 = vmatprep.subr.bf16.mxu0 0
    %2619 = vmatpush2.bf16.msra.mxu0 0
    %2620 = vmatprep.subr.bf16.mxu0 0
    %2621 = vmatpush2.bf16.msra.mxu0 0
    %2622 = vmatprep.subr.bf16.mxu0 0
    %2623 = vmatpush2.bf16.msra.mxu0 0
    %2624 = vmatprep.subr.bf16.mxu0 0
    %2625 = vmatpush2.bf16.msra.mxu0 0
    %2626 = vmatprep.subr.bf16.mxu0 0
    %2627 = vmatpush2.bf16.msra.mxu0 0
    %2628 = vmatprep.subr.bf16.mxu0 0
    %2629 = vmatpush2.bf16.msra.mxu0 0
    %2630 = vmatprep.subr.bf16.mxu0 0
    %2631 = vmatpush2.bf16.msra.mxu0 0
    %2632 = vmatprep.subr.bf16.mxu0 0
    %2633 = vmatpush2.bf16.msra.mxu0 0
    %2634 = vmatprep.mubr.bf16.mxu0 0
    %2635 = vmatmul.mubr.bf16.gmra.mxu0 %v2600
    %v2636 = vpop.f32.mrf.mxu0
    %v2637 = vadd.f32 0.0, %v2636
    %v2638 = vpop.f32.mrf.mxu0
    %v2639 = vpop.f32.mrf.mxu0
    %v2640 = vpop.f32.mrf.mxu0
    %2641 = vdwg.mxu0
    %v2642 = vadd.f32 %v2564, %v2637
    %v2643 = vld [vmem:[%s14] sm:$0x1]
    %v2645 = vlaneseq
    %v2646 = vshrl.u32 %v2645, 7
    %v2647 = vsub.s32 0, %v2646
    %v2648 = vrot.slane %v2643, %v2647
    %v2650 = vadd.f32 %v2642, %v2648
    %v2651 = vld [vmem:[%s15] sm:$0x1]
    %v2652 = vld [vmem:[%s16] sm:$0x1]
    %vm2653 = vcmask 975872
    %v2654 = vsel %vm2653, %v2650, 0.0
    %v2655 = vrot.slane %v2654, 4
    %v2656 = vadd.f32 %v2654, %v2655
    %v2657 = vrot.slane %v2656, 2
    %v2658 = vadd.f32 %v2656, %v2657
    %v2659 = vrot.slane %v2658, 1
    %v2660 = vadd.f32 %v2658, %v2659
    %v2661 = vrcp.pop 2.0
    %v2662 = vmul.f32 %v2660, %v2661
    %v2663 = vmul.f32 %v2650, %v2650
    %v2664 = vsel %vm2653, %v2663, 0.0
    %v2665 = vrot.slane %v2664, 4
    %v2666 = vadd.f32 %v2664, %v2665
    %v2667 = vrot.slane %v2666, 2
    %v2668 = vadd.f32 %v2666, %v2667
    %v2669 = vrot.slane %v2668, 1
    %v2670 = vadd.f32 %v2668, %v2669
    %v2671 = vmul.f32 %v2670, %v2661
    %v2672 = vmul.f32 %v2662, %v2662
    %v2673 = vsub.f32 %v2671, %v2672
    %v2674 = vsub.f32 %v2650, %v2662
    %v2676 = vlaneseq
    %v2677 = vshrl.u32 %v2676, 7
    %v2678 = vsub.s32 0, %v2677
    %v2679 = vrot.slane %v2651, %v2678
    %v2681 = vmul.f32 %v2679, %v2674
    %v2682 = vadd.f32 %v2673, 1e-05
    %v2683 = vrsqrt.pop %v2682
    %v2684 = vmul.f32 %v2681, %v2683
    %v2686 = vlaneseq
    %v2687 = vshrl.u32 %v2686, 7
    %v2688 = vsub.s32 0, %v2687
    %v2689 = vrot.slane %v2652, %v2688
    %v2691 = vadd.f32 %v2684, %v2689
    %v2692 = vmax.f32 %v2691, 0.0
    %v2693 = vpack.c.bf16 %v2692, %v2692
    %v2694 = vld [vmem:[%s17] sm:$0xf]
    %v2695 = vld [vmem:[%s17 + $0x4] sm:$0xf]
    %v2696 = vld [vmem:[%s17 + $0x8] sm:$0xf]
    %v2697 = vld [vmem:[%s17 + $0xc] sm:$0xf]
    %v2698 = vld [vmem:[%s17 + $0x10] sm:$0xf]
    %v2699 = vld [vmem:[%s17 + $0x14] sm:$0xf]
    %v2700 = vld [vmem:[%s17 + $0x18] sm:$0xf]
    %v2701 = vld [vmem:[%s17 + $0x1c] sm:$0xf]
    %v2702 = vld [vmem:[%s17 + $0x20] sm:$0xf]
    %v2703 = vld [vmem:[%s17 + $0x24] sm:$0xf]
    %v2704 = vld [vmem:[%s17 + $0x28] sm:$0xf]
    %v2705 = vld [vmem:[%s17 + $0x2c] sm:$0xf]
    %v2706 = vld [vmem:[%s17 + $0x30] sm:$0xf]
    %v2707 = vld [vmem:[%s17 + $0x34] sm:$0xf]
    %v2708 = vld [vmem:[%s17 + $0x38] sm:$0xf]
    %v2709 = vld [vmem:[%s18] sm:$0x1]
    %v2711 = vlaneseq
    %v2712 = vshrl.u32 %v2711, 7
    %v2713 = vsub.s32 0, %v2712
    %v2714 = vrot.slane %v2709, %v2713
    %v2731 = vunpack.c.l.b16 %v2694
    %v2732 = vunpack.c.l.b16 %v2695
    %v2733 = vunpack.c.l.b16 %v2696
    %v2734 = vunpack.c.l.b16 %v2697
    %v2735 = vunpack.c.l.b16 %v2698
    %v2736 = vunpack.c.l.b16 %v2699
    %v2737 = vunpack.c.l.b16 %v2700
    %v2738 = vunpack.c.l.b16 %v2701
    %v2739 = vunpack.c.l.b16 %v2702
    %v2740 = vunpack.c.l.b16 %v2703
    %v2741 = vunpack.c.l.b16 %v2704
    %v2742 = vunpack.c.l.b16 %v2705
    %v2743 = vunpack.c.l.b16 %v2706
    %v2744 = vunpack.c.l.b16 %v2707
    %v2745 = vunpack.c.l.b16 %v2708
    %v2746 = vpack.c.b16 %v2732, %v2731
    %v2747 = vpack.c.b16 %v2734, %v2733
    %v2748 = vpack.c.b16 %v2736, %v2735
    %v2749 = vpack.c.b16 %v2738, %v2737
    %v2750 = vpack.c.b16 %v2740, %v2739
    %v2751 = vpack.c.b16 %v2742, %v2741
    %v2752 = vpack.c.b16 %v2744, %v2743
    %v2753 = vpack.c.b16 %v2745, %v2745
    %vm2761 = vcmask 982016
    %v2763 = vsel %vm2761, %v2693, 0
    %v2766 = vsel %vm985, %v2753, 0
    %2768 = vmatprep.subr.bf16.mxu0 0
    %2769 = vmatpush1.bf16.msra.mxu0 %v2766
    %2770 = vmatprep.subr.bf16.mxu0 0
    %2771 = vmatpush1.bf16.msra.mxu0 %v2752
    %2772 = vmatprep.subr.bf16.mxu0 0
    %2773 = vmatpush1.bf16.msra.mxu0 %v2751
    %2774 = vmatprep.subr.bf16.mxu0 0
    %2775 = vmatpush1.bf16.msra.mxu0 %v2750
    %2776 = vmatprep.subr.bf16.mxu0 0
    %2777 = vmatpush1.bf16.msra.mxu0 %v2749
    %2778 = vmatprep.subr.bf16.mxu0 0
    %2779 = vmatpush1.bf16.msra.mxu0 %v2748
    %2780 = vmatprep.subr.bf16.mxu0 0
    %2781 = vmatpush1.bf16.msra.mxu0 %v2747
    %2782 = vmatprep.subr.bf16.mxu0 0
    %2783 = vmatpush1.bf16.msra.mxu0 %v2746
    %2784 = vmatprep.subr.bf16.mxu0 0
    %2785 = vmatpush2.bf16.msra.mxu0 0
    %2786 = vmatprep.subr.bf16.mxu0 0
    %2787 = vmatpush2.bf16.msra.mxu0 0
    %2788 = vmatprep.subr.bf16.mxu0 0
    %2789 = vmatpush2.bf16.msra.mxu0 0
    %2790 = vmatprep.subr.bf16.mxu0 0
    %2791 = vmatpush2.bf16.msra.mxu0 0
    %2792 = vmatprep.subr.bf16.mxu0 0
    %2793 = vmatpush2.bf16.msra.mxu0 0
    %2794 = vmatprep.subr.bf16.mxu0 0
    %2795 = vmatpush2.bf16.msra.mxu0 0
    %2796 = vmatprep.subr.bf16.mxu0 0
    %2797 = vmatpush2.bf16.msra.mxu0 0
    %2798 = vmatprep.subr.bf16.mxu0 0
    %2799 = vmatpush2.bf16.msra.mxu0 0
    %2800 = vmatprep.mubr.bf16.mxu0 0
    %2801 = vmatmul.mubr.bf16.gmra.mxu0 %v2763
    %v2802 = vpop.f32.mrf.mxu0
    %v2803 = vadd.f32 %v2714, %v2802
    %v2804 = vpop.f32.mrf.mxu0
    %v2805 = vpop.f32.mrf.mxu0
    %v2806 = vpop.f32.mrf.mxu0
    %2807 = vdwg.mxu0
    %v2808 = vld [vmem:[%s19] sm:$0x1]
    %v2809 = vld [vmem:[%s20] sm:$0x1]
    %vm2810 = vcmask 680960
    %v2811 = vsel %vm2810, %v2803, 0.0
    %v2812 = vrot.slane %v2811, 4
    %v2813 = vadd.f32 %v2811, %v2812
    %v2814 = vrot.slane %v2813, 2
    %v2815 = vadd.f32 %v2813, %v2814
    %v2816 = vrot.slane %v2815, 1
    %v2817 = vadd.f32 %v2815, %v2816
    %v2818 = vmul.f32 %v2817, %v2661
    %v2819 = vmul.f32 %v2803, %v2803
    %v2820 = vsel %vm2810, %v2819, 0.0
    %v2821 = vrot.slane %v2820, 4
    %v2822 = vadd.f32 %v2820, %v2821
    %v2823 = vrot.slane %v2822, 2
    %v2824 = vadd.f32 %v2822, %v2823
    %v2825 = vrot.slane %v2824, 1
    %v2826 = vadd.f32 %v2824, %v2825
    %v2827 = vmul.f32 %v2826, %v2661
    %v2828 = vmul.f32 %v2818, %v2818
    %v2829 = vsub.f32 %v2827, %v2828
    %v2830 = vsub.f32 %v2803, %v2818
    %v2832 = vlaneseq
    %v2833 = vshrl.u32 %v2832, 7
    %v2834 = vsub.s32 0, %v2833
    %v2835 = vrot.slane %v2808, %v2834
    %v2837 = vmul.f32 %v2835, %v2830
    %v2838 = vadd.f32 %v2829, 1e-05
    %v2839 = vrsqrt.pop %v2838
    %v2840 = vmul.f32 %v2837, %v2839
    %v2842 = vlaneseq
    %v2843 = vshrl.u32 %v2842, 7
    %v2844 = vsub.s32 0, %v2843
    %v2845 = vrot.slane %v2809, %v2844
    %v2847 = vadd.f32 %v2840, %v2845
    %v2848 = vmax.f32 %v2847, 0.0
    %v2849 = vpack.c.bf16 %v2848, %v2848
    %v2850 = vld [vmem:[%s21] sm:$0xf]
    %v2851 = vld [vmem:[%s21 + $0x4] sm:$0xf]
    %v2852 = vld [vmem:[%s21 + $0x8] sm:$0xf]
    %v2853 = vld [vmem:[%s21 + $0xc] sm:$0xf]
    %v2854 = vld [vmem:[%s21 + $0x10] sm:$0xf]
    %v2855 = vld [vmem:[%s21 + $0x14] sm:$0xf]
    %v2856 = vld [vmem:[%s21 + $0x18] sm:$0xf]
    %v2857 = vld [vmem:[%s21 + $0x1c] sm:$0xf]
    %v2858 = vld [vmem:[%s21 + $0x20] sm:$0xf]
    %v2859 = vld [vmem:[%s21 + $0x24] sm:$0xf]
    %v2860 = vld [vmem:[%s21 + $0x28] sm:$0x3]
    %v2861 = vld [vmem:[%s22] sm:$0x1]
    %v2863 = vlaneseq
    %v2864 = vshrl.u32 %v2863, 7
    %v2865 = vsub.s32 0, %v2864
    %v2866 = vrot.slane %v2861, %v2865
    %v2879 = vunpack.c.l.b16 %v2850
    %v2880 = vunpack.c.l.b16 %v2851
    %v2881 = vunpack.c.l.b16 %v2852
    %v2882 = vunpack.c.l.b16 %v2853
    %v2883 = vunpack.c.l.b16 %v2854
    %v2884 = vunpack.c.l.b16 %v2855
    %v2885 = vunpack.c.l.b16 %v2856
    %v2886 = vunpack.c.l.b16 %v2857
    %v2887 = vunpack.c.l.b16 %v2858
    %v2888 = vunpack.c.l.b16 %v2859
    %v2889 = vunpack.c.l.b16 %v2860
    %v2890 = vpack.c.b16 %v2880, %v2879
    %v2891 = vpack.c.b16 %v2882, %v2881
    %v2892 = vpack.c.b16 %v2884, %v2883
    %v2893 = vpack.c.b16 %v2886, %v2885
    %v2894 = vpack.c.b16 %v2888, %v2887
    %v2895 = vpack.c.b16 %v2889, %v2889
    %vm2901 = vcmask 687104
    %v2903 = vsel %vm2901, %v2849, 0
    %vm2905 = vcmask 1041408
    %v2907 = vsel %vm2905, %v2895, 0
    %2909 = vmatprep.subr.bf16.mxu0 0
    %2910 = vmatpush1.bf16.msra.mxu0 0
    %2911 = vmatprep.subr.bf16.mxu0 0
    %2912 = vmatpush1.bf16.msra.mxu0 0
    %2913 = vmatprep.subr.bf16.mxu0 0
    %2914 = vmatpush1.bf16.msra.mxu0 %v2907
    %2915 = vmatprep.subr.bf16.mxu0 0
    %2916 = vmatpush1.bf16.msra.mxu0 %v2894
    %2917 = vmatprep.subr.bf16.mxu0 0
    %2918 = vmatpush1.bf16.msra.mxu0 %v2893
    %2919 = vmatprep.subr.bf16.mxu0 0
    %2920 = vmatpush1.bf16.msra.mxu0 %v2892
    %2921 = vmatprep.subr.bf16.mxu0 0
    %2922 = vmatpush1.bf16.msra.mxu0 %v2891
    %2923 = vmatprep.subr.bf16.mxu0 0
    %2924 = vmatpush1.bf16.msra.mxu0 %v2890
    %2925 = vmatprep.subr.bf16.mxu0 0
    %2926 = vmatpush2.bf16.msra.mxu0 0
    %2927 = vmatprep.subr.bf16.mxu0 0
    %2928 = vmatpush2.bf16.msra.mxu0 0
    %2929 = vmatprep.subr.bf16.mxu0 0
    %2930 = vmatpush2.bf16.msra.mxu0 0
    %2931 = vmatprep.subr.bf16.mxu0 0
    %2932 = vmatpush2.bf16.msra.mxu0 0
    %2933 = vmatprep.subr.bf16.mxu0 0
    %2934 = vmatpush2.bf16.msra.mxu0 0
    %2935 = vmatprep.subr.bf16.mxu0 0
    %2936 = vmatpush2.bf16.msra.mxu0 0
    %2937 = vmatprep.subr.bf16.mxu0 0
    %2938 = vmatpush2.bf16.msra.mxu0 0
    %2939 = vmatprep.subr.bf16.mxu0 0
    %2940 = vmatpush2.bf16.msra.mxu0 0
    %2941 = vmatprep.mubr.bf16.mxu0 0
    %2942 = vmatmul.mubr.bf16.gmra.mxu0 %v2903
    %v2943 = vpop.f32.mrf.mxu0
    %v2944 = vadd.f32 %v2866, %v2943
    %v2945 = vpop.f32.mrf.mxu0
    %v2946 = vpop.f32.mrf.mxu0
    %v2947 = vpop.f32.mrf.mxu0
    %2948 = vdwg.mxu0
    %2949 = vst [vmem:[#allocation3] sm:$0x3] %v2944
    // Predicated region
    $region94: #{lenet_forward.1} parent=1 // pred_check
      _
    $region95: #{lenet_forward.1} parent=1 // pred_check_branch
      %2951 = sbr.rel (0) target = $region97
    $region96: #{lenet_forward.1} parent=1 // pred_region
      %s2953 = ssub.s32 32, 32
      %2954 = vsyncadd [#allocation4], %s2953
      %s2956 = sshll.u32 [#allocation3], 4
      %s2957 = int_to_ptr.vmem [resolvable:$true] %s2956
      %2959 = dma.vmem_to_hbm [thread:$0]  %s2957, 32, %s23, [#allocation4]
    $region97: #{lenet_forward.1} parent=1 // pred_fallthru
      _
    // Predicated region
    $region98: #{lenet_forward.1} parent=1 // pred_check
      _
    $region99: #{lenet_forward.1} parent=1 // pred_check_branch
      %2961 = sbr.rel (0) target = $region101
    $region100: #{lenet_forward.1} parent=1 // pred_region
      %2962 = dma.done [#allocation4], 32
    $region101: #{lenet_forward.1} parent=1 // pred_fallthru
      _
    %2963 = vsyncpa [#allocation4], 1

</llo_original>
